<compile_context>
chip_gen: v7x
topology: tpu7x:2x2x1
jax: 0.10.0
libtpu: 0.0.40
codegen_flags: <defaults>
</compile_context>

<pallas_src>
import math

import jax
import jax.numpy as jnp
from jax.experimental import pallas as pl
from jax.experimental.pallas import tpu as pltpu

# ---------------- small config consistent with TransformerNLI specs ----------------
VOCAB = 32
PAD_ID = 0
D_MODEL = 32            # d_model == embed_dim (required by the module's forward)
N_HEAD = 4
HEAD_DIM = D_MODEL // N_HEAD
DIM_FF = 64
N_LAYERS = 2
MAX_LEN = 8             # max_length (== sequence length fed to forward)
SCALE = math.sqrt(D_MODEL)
LN_EPS = 1e-5

# ------ packed per-layer parameter slab, lane-dense (rows x 128), y = x @ W^T ------
SLAB_COLS = 128
R_QKV = 0                        # rows [0,32):    [Wq^T | Wk^T | Wv^T] in cols [0,96)
R_WO = D_MODEL                   # rows [32,64):   Wo^T                in cols [0,32)
R_W1 = 2 * D_MODEL               # rows [64,96):   W1^T                in cols [0,64)
R_W2 = 3 * D_MODEL               # rows [96,160):  W2^T                in cols [0,32)
R_VEC = 3 * D_MODEL + DIM_FF     # rows [160,168): bias / LayerNorm vectors
(V_BQKV, V_BO, V_B1, V_B2, V_G1, V_BE1, V_G2, V_BE2) = range(8)
N_VEC_ROWS = 8
SLAB_ROWS = R_VEC + N_VEC_ROWS   # 168 rows per layer (multiple of 8 sublanes)


# --------------------------------- Pallas kernel ------------------------------------
def _layer_norm(v, g, b):
    mu = jnp.mean(v, axis=-1, keepdims=True)
    var = jnp.mean((v - mu) ** 2, axis=-1, keepdims=True)
    return (v - mu) * jax.lax.rsqrt(var + LN_EPS) * g + b


def fused_nli_kernel(idx_col_ref, idx_key_ref, embed_ref, pe_ref, slabs_ref,
                     wl_ref, bl_ref, out_ref):
    """Embedding + all encoder layers + final head in a single invocation."""
    B, _, S = idx_key_ref.shape
    D, FF, H, Hd, V = D_MODEL, DIM_FF, N_HEAD, HEAD_DIM, VOCAB

    # ---- embedding gather as a one-hot MXU dot, * sqrt(d_model), + pos. encoding ----
    one_hot = (jax.lax.broadcasted_iota(jnp.int32, (B * S, V), 1)
               == idx_col_ref[...]).astype(jnp.float32)               # (B*S, V)
    x2 = jnp.dot(one_hot, embed_ref[...],
                 preferred_element_type=jnp.float32) * SCALE          # (B*S, D)
    x2 = (x2.reshape(B, S, D) + pe_ref[...][None]).reshape(B * S, D)

    # ---- attention logit bias: causal (-inf above diag) + FLOAT key-padding mask ----
    qi = jax.lax.broadcasted_iota(jnp.int32, (S, S), 0)
    ki = jax.lax.broadcasted_iota(jnp.int32, (S, S), 1)
    causal = jnp.where(qi >= ki, 0.0, -jnp.inf)                       # (S, S)
    padf = (idx_key_ref[...] != PAD_ID).astype(jnp.float32)           # (B, 1, S)
    bias = causal[None, :, :] + padf                                  # (B, S, S)

    # head lane masks + q scaling, hoisted out of the unrolled layer loop
    lane = jax.lax.broadcasted_iota(jnp.int32, (1, 1, D), 2)
    head_msk = [jnp.where((lane >= h * Hd) & (lane < (h + 1) * Hd), 1.0, 0.0)
                for h in range(H)]
    inv_sqrt_hd = 1.0 / math.sqrt(Hd)

    for layer in range(N_LAYERS):                # static unroll: x stays in vregs
        base = layer * SLAB_ROWS
        w_qkv = slabs_ref[base + R_QKV:base + R_QKV + D, :]            # (D, 128)
        w_o = slabs_ref[base + R_WO:base + R_WO + D, :D]               # (D, D)
        w_1 = slabs_ref[base + R_W1:base + R_W1 + D, :FF]              # (D, FF)
        w_2 = slabs_ref[base + R_W2:base + R_W2 + FF, :D]              # (FF, D)
        vecs = slabs_ref[base + R_VEC:base + R_VEC + N_VEC_ROWS, :]    # (8, 128)

        # --- fused Q|K|V projection: one (B*S,D)x(D,128) MXU dot + (1,128) bias ---
        qkv = (jnp.dot(x2, w_qkv, preferred_element_type=jnp.float32)
               + vecs[V_BQKV:V_BQKV + 1, :])
        q3 = (qkv[:, 0:D] * inv_sqrt_hd).reshape(B, S, D)
        k3 = qkv[:, D:2 * D].reshape(B, S, D)
        v3 = qkv[:, 2 * D:3 * D].reshape(B, S, D)

        # --- per-head scores/softmax/PV; head outputs land in their lane slots ---
        attn3 = jnp.zeros((B, S, D), jnp.float32)
        for h in range(H):
            msk = head_msk[h]
            s = jnp.einsum('bqd,bkd->bqk', q3 * msk, k3,
                           preferred_element_type=jnp.float32) + bias
            m = jnp.max(s, axis=-1, keepdims=True)
            p = jnp.exp(s - m)
            p = p / jnp.sum(p, axis=-1, keepdims=True)
            attn3 = attn3 + jnp.einsum('bqk,bkd->bqd', p, v3 * msk,
                                       preferred_element_type=jnp.float32)

        # --- single output projection, residual + LayerNorm1 ---
        attn_out = (jnp.dot(attn3.reshape(B * S, D), w_o,
                            preferred_element_type=jnp.float32)
                    + vecs[V_BO:V_BO + 1, :D])
        y = _layer_norm(x2 + attn_out, vecs[V_G1:V_G1 + 1, :D],
                        vecs[V_BE1:V_BE1 + 1, :D])

        # --- feed-forward (relu), residual + LayerNorm2 ---
        h1 = jnp.maximum(jnp.dot(y, w_1, preferred_element_type=jnp.float32)
                         + vecs[V_B1:V_B1 + 1, :FF], 0.0)
        h2 = (jnp.dot(h1, w_2, preferred_element_type=jnp.float32)
              + vecs[V_B2:V_B2 + 1, :D])
        x2 = _layer_norm(y + h2, vecs[V_G2:V_G2 + 1, :D],
                         vecs[V_BE2:V_BE2 + 1, :D])

    # ---- final Linear(max_length*d_model -> 1): VPU mul + XLU reduce ----
    # out[b] = sum_{s,d} x[b,s,d] * Wl[s,d] + bl  (a (B,256)x(256,1) matmul would
    # waste the MXU at N=1 anyway)
    z3 = x2.reshape(B, S, D)
    prod = z3 * wl_ref[...][None, :, :]                               # (B, S, D)
    out_ref[...] = (jnp.sum(jnp.sum(prod, axis=-1), axis=-1, keepdims=True)
                    + bl_ref[...])


# ----------------------------- parameters (deterministic) --------------------------
def positional_encoding(max_len, d_model):
    pos = jnp.arange(max_len, dtype=jnp.float32)[:, None]
    div = jnp.exp(jnp.arange(0, d_model, 2, dtype=jnp.float32)
                  * (-math.log(10000.0) / d_model))
    pe = jnp.zeros((max_len, d_model), jnp.float32)
    pe = pe.at[:, 0::2].set(jnp.sin(pos * div))
    pe = pe.at[:, 1::2].set(jnp.cos(pos * div))
    return pe


def _xavier(key, shape):
    std = math.sqrt(2.0 / (shape[0] + shape[1]))
    return std * jax.random.normal(key, shape, jnp.float32)


def init_params(key):
    """PyTorch-layout parameters (Linear weights are (out, in))."""
    ks = jax.random.split(key, 2 + N_LAYERS)
    params = {'embed': _xavier(ks[0], (VOCAB, D_MODEL)),
              'pe': positional_encoding(MAX_LEN, D_MODEL),
              'Wl': _xavier(ks[1], (1, MAX_LEN * D_MODEL)),
              'bl': jnp.zeros((1,), jnp.float32),
              'layers': []}
    for l in range(N_LAYERS):
        lk = jax.random.split(ks[2 + l], 4)
        in_proj = _xavier(lk[0], (3 * D_MODEL, D_MODEL))   # packed [Wq; Wk; Wv]
        params['layers'].append(dict(
            Wq=in_proj[:D_MODEL], Wk=in_proj[D_MODEL:2 * D_MODEL],
            Wv=in_proj[2 * D_MODEL:],
            bq=jnp.zeros((D_MODEL,)), bk=jnp.zeros((D_MODEL,)),
            bv=jnp.zeros((D_MODEL,)),
            Wo=_xavier(lk[1], (D_MODEL, D_MODEL)), bo=jnp.zeros((D_MODEL,)),
            W1=_xavier(lk[2], (DIM_FF, D_MODEL)), b1=jnp.zeros((DIM_FF,)),
            W2=_xavier(lk[3], (D_MODEL, DIM_FF)), b2=jnp.zeros((D_MODEL,)),
            g1=jnp.ones((D_MODEL,)), be1=jnp.zeros((D_MODEL,)),
            g2=jnp.ones((D_MODEL,)), be2=jnp.zeros((D_MODEL,)),
        ))
    return params


def prepare_kernel_params(params):
    """One-time host-side repack into the lane-dense kernel slab layout."""
    D, FF = D_MODEL, DIM_FF
    slabs = []
    for lp in params['layers']:
        slab = jnp.zeros((SLAB_ROWS, SLAB_COLS), jnp.float32)
        slab = slab.at[R_QKV:R_QKV + D, 0 * D:1 * D].set(lp['Wq'].T)
        slab = slab.at[R_QKV:R_QKV + D, 1 * D:2 * D].set(lp['Wk'].T)
        slab = slab.at[R_QKV:R_QKV + D, 2 * D:3 * D].set(lp['Wv'].T)
        slab = slab.at[R_WO:R_WO + D, :D].set(lp['Wo'].T)
        slab = slab.at[R_W1:R_W1 + D, :FF].set(lp['W1'].T)
        slab = slab.at[R_W2:R_W2 + FF, :D].set(lp['W2'].T)
        slab = slab.at[R_VEC + V_BQKV, 0 * D:1 * D].set(lp['bq'])
        slab = slab.at[R_VEC + V_BQKV, 1 * D:2 * D].set(lp['bk'])
        slab = slab.at[R_VEC + V_BQKV, 2 * D:3 * D].set(lp['bv'])
        slab = slab.at[R_VEC + V_BO, :D].set(lp['bo'])
        slab = slab.at[R_VEC + V_B1, :FF].set(lp['b1'])
        slab = slab.at[R_VEC + V_B2, :D].set(lp['b2'])
        slab = slab.at[R_VEC + V_G1, :D].set(lp['g1'])
        slab = slab.at[R_VEC + V_BE1, :D].set(lp['be1'])
        slab = slab.at[R_VEC + V_G2, :D].set(lp['g2'])
        slab = slab.at[R_VEC + V_BE2, :D].set(lp['be2'])
        slabs.append(slab)
    return {
        'embed': params['embed'],                        # (VOCAB, D)
        'pe': params['pe'],                              # (MAX_LEN, D)
        'slabs': jnp.concatenate(slabs, axis=0),         # (N_LAYERS*168, 128)
        'wl': params['Wl'].reshape(MAX_LEN, D_MODEL),    # row-major flatten of (S,D)
        'bl': params['bl'].reshape(1, 1),
    }


# ----------------------------------- forward ---------------------------------------
def transformer_nli_forward(indices, prep):
    B, S = indices.shape
    assert S == MAX_LEN, "final Linear requires seq_len == max_length"
    vmem = pl.BlockSpec(memory_space=pltpu.MemorySpace.VMEM)
    return pl.pallas_call(
        fused_nli_kernel,
        out_shape=jax.ShapeDtypeStruct((B, 1), jnp.float32),
        in_specs=[vmem] * 7,
        out_specs=vmem,
    )(indices.reshape(B * S, 1),      # token ids, column form (one-hot gather)
      indices.reshape(B, 1, S),       # token ids, key-axis form (padding mask)
      prep['embed'], prep['pe'], prep['slabs'], prep['wl'], prep['bl'])


# ------------------------------ pure-JAX reference ----------------------------------
def _attention_bias(indices):
    """causal float mask (-inf above diag) + float key-padding mask, like PyTorch."""
    B, S = indices.shape
    causal = jnp.where(jnp.tril(jnp.ones((S, S), dtype=bool)), 0.0, -jnp.inf)
    padf = (indices != PAD_ID).astype(jnp.float32)   # 1.0 non-pad, 0.0 pad (added!)
    return causal[None, :, :] + padf[:, None, :]     # (B, S, S)


def reference_forward(indices, params):
    B, S = indices.shape
    H, Hd = N_HEAD, HEAD_DIM
    x = params['embed'][indices] * SCALE + params['pe'][:S]
    bias = _attention_bias(indices)

    def ln(v, g, b):
        mu = jnp.mean(v, -1, keepdims=True)
        var = jnp.mean((v - mu) ** 2, -1, keepdims=True)
        return (v - mu) / jnp.sqrt(var + LN_EPS) * g + b

    with jax.default_matmul_precision('highest'):
        for lp in params['layers']:
            q = x @ lp['Wq'].T + lp['bq']
            k = x @ lp['Wk'].T + lp['bk']
            v = x @ lp['Wv'].T + lp['bv']
            qh = q.reshape(B, S, H, Hd).transpose(0, 2, 1, 3)
            kh = k.reshape(B, S, H, Hd).transpose(0, 2, 1, 3)
            vh = v.reshape(B, S, H, Hd).transpose(0, 2, 1, 3)
            s = jnp.einsum('bhqe,bhke->bhqk', qh, kh) / math.sqrt(Hd) + bias[:, None]
            p = jax.nn.softmax(s, axis=-1)
            o = jnp.einsum('bhqk,bhke->bhqe', p, vh).transpose(0, 2, 1, 3)
            attn = o.reshape(B, S, D_MODEL) @ lp['Wo'].T + lp['bo']
            x = ln(x + attn, lp['g1'], lp['be1'])
            h1 = jax.nn.relu(x @ lp['W1'].T + lp['b1'])
            h2 = h1 @ lp['W2'].T + lp['b2']
            x = ln(x + h2, lp['g2'], lp['be2'])
        flat = x.reshape(B, S * D_MODEL)
        return flat @ params['Wl'].T + params['bl']


# -------------------------------------- main ----------------------------------------
if __name__ == "__main__":
    key = jax.random.PRNGKey(0)
    pkey, ikey = jax.random.split(key)
    params = init_params(pkey)
    prep = prepare_kernel_params(params)          # one-time kernel-layout repack

    indices = jax.random.randint(ikey, (2, MAX_LEN), 1, VOCAB, dtype=jnp.int32)
    # add some pad tokens to exercise the padding-mask path
    indices = indices.at[0, -2:].set(PAD_ID).at[1, -1:].set(PAD_ID)

    fwd = jax.jit(transformer_nli_forward)
    out = jax.block_until_ready(fwd(indices, prep))

    ref = reference_forward(indices, params)
    # exact softmax divide -> error is only MXU-f32 vs 'highest' matmul precision;
    # tolerance kept generous for robustness.
    if not jnp.allclose(out, ref, atol=1e-2, rtol=1e-2):
        raise AssertionError(f"Pallas/reference mismatch:\n{out}\nvs\n{ref}")

    print("KERNEL_OK")
</pallas_src>

<mosaic_0001>
module attributes {stable_mosaic.version = 11 : i64} {
  func.func @fused_nli_kernel(%arg0: memref<16x1xi32, #tpu.memory_space<vmem>>, %arg1: memref<2x1x8xi32, #tpu.memory_space<vmem>>, %arg2: memref<32x32xf32, #tpu.memory_space<vmem>>, %arg3: memref<8x32xf32, #tpu.memory_space<vmem>>, %arg4: memref<336x128xf32, #tpu.memory_space<vmem>>, %arg5: memref<8x32xf32, #tpu.memory_space<vmem>>, %arg6: memref<1x1xf32, #tpu.memory_space<vmem>>, %arg7: memref<2x1xf32, #tpu.memory_space<vmem>>) attributes {dimension_semantics = [], scalar_prefetch = 0 : i64, scratch_operands = 0 : i64, tpu.core_type = #tpu.core_type<tc>} {
    %0 = tpu.iota {dimensions = array<i32: 1>} : vector<16x32xi32>
    %c0 = arith.constant 0 : index
    %c0_0 = arith.constant 0 : index
    %1 = vector.load %arg0[%c0, %c0_0] : memref<16x1xi32, #tpu.memory_space<vmem>>, vector<16x1xi32>
    %2 = vector.broadcast %1 : vector<16x1xi32> to vector<16x32xi32>
    %3 = arith.cmpi eq, %0, %2 : vector<16x32xi32>
    %4 = arith.extui %3 : vector<16x32xi1> to vector<16x32xi32>
    %5 = arith.sitofp %4 : vector<16x32xi32> to vector<16x32xf32>
    %c0_1 = arith.constant 0 : index
    %c0_2 = arith.constant 0 : index
    %6 = vector.load %arg2[%c0_1, %c0_2] : memref<32x32xf32, #tpu.memory_space<vmem>>, vector<32x32xf32>
    %cst = arith.constant dense<0.000000e+00> : vector<16x32xf32>
    %7 = tpu.matmul %5, %6, %cst {dimension_numbers = #tpu.dot_dimension_numbers<[1], [0], [0], [1], [0, 0, 1, 1], [], []>} : vector<16x32xf32>, vector<32x32xf32>, vector<16x32xf32> -> vector<16x32xf32>
    %cst_3 = arith.constant 5.65685415 : f32
    %8 = vector.broadcast %cst_3 : f32 to vector<16x32xf32>
    %9 = arith.mulf %7, %8 : vector<16x32xf32>
    %10 = vector.shape_cast %9 : vector<16x32xf32> to vector<2x8x32xf32>
    %c0_4 = arith.constant 0 : index
    %c0_5 = arith.constant 0 : index
    %11 = vector.load %arg3[%c0_4, %c0_5] : memref<8x32xf32, #tpu.memory_space<vmem>>, vector<8x32xf32>
    %12 = vector.shape_cast %11 : vector<8x32xf32> to vector<1x8x32xf32>
    %13 = vector.broadcast %12 : vector<1x8x32xf32> to vector<2x8x32xf32>
    %14 = arith.addf %10, %13 : vector<2x8x32xf32>
    %15 = vector.shape_cast %14 : vector<2x8x32xf32> to vector<16x32xf32>
    %16 = tpu.iota {dimensions = array<i32: 0>} : vector<8x8xi32>
    %17 = tpu.iota {dimensions = array<i32: 1>} : vector<8x8xi32>
    %18 = arith.cmpi sge, %16, %17 : vector<8x8xi32>
    %cst_6 = arith.constant 0.000000e+00 : f32
    %cst_7 = arith.constant 0xFF800000 : f32
    %19 = vector.broadcast %cst_6 : f32 to vector<8x8xf32>
    %20 = vector.broadcast %cst_7 : f32 to vector<8x8xf32>
    %21 = arith.select %18, %19, %20 : vector<8x8xi1>, vector<8x8xf32>
    %c0_8 = arith.constant 0 : index
    %c0_9 = arith.constant 0 : index
    %c0_10 = arith.constant 0 : index
    %22 = vector.load %arg1[%c0_8, %c0_9, %c0_10] : memref<2x1x8xi32, #tpu.memory_space<vmem>>, vector<2x1x8xi32>
    %c0_i32 = arith.constant 0 : i32
    %23 = vector.broadcast %c0_i32 : i32 to vector<2x1x8xi32>
    %24 = arith.cmpi ne, %22, %23 : vector<2x1x8xi32>
    %25 = arith.extui %24 : vector<2x1x8xi1> to vector<2x1x8xi32>
    %26 = arith.sitofp %25 : vector<2x1x8xi32> to vector<2x1x8xf32>
    %27 = vector.shape_cast %21 : vector<8x8xf32> to vector<1x8x8xf32>
    %28 = vector.broadcast %27 : vector<1x8x8xf32> to vector<2x8x8xf32>
    %29 = vector.broadcast %26 : vector<2x1x8xf32> to vector<2x8x8xf32>
    %30 = arith.addf %28, %29 : vector<2x8x8xf32>
    %31 = tpu.iota {dimensions = array<i32: 2>} : vector<1x1x32xi32>
    %c0_i32_11 = arith.constant 0 : i32
    %32 = vector.broadcast %c0_i32_11 : i32 to vector<1x1x32xi32>
    %33 = arith.cmpi sge, %31, %32 : vector<1x1x32xi32>
    %c8_i32 = arith.constant 8 : i32
    %34 = vector.broadcast %c8_i32 : i32 to vector<1x1x32xi32>
    %35 = arith.cmpi slt, %31, %34 : vector<1x1x32xi32>
    %36 = arith.andi %33, %35 : vector<1x1x32xi1>
    %cst_12 = arith.constant 1.000000e+00 : f32
    %cst_13 = arith.constant 0.000000e+00 : f32
    %37 = vector.broadcast %cst_12 : f32 to vector<1x1x32xf32>
    %38 = vector.broadcast %cst_13 : f32 to vector<1x1x32xf32>
    %39 = arith.select %36, %37, %38 : vector<1x1x32xi1>, vector<1x1x32xf32>
    %c8_i32_14 = arith.constant 8 : i32
    %40 = vector.broadcast %c8_i32_14 : i32 to vector<1x1x32xi32>
    %41 = arith.cmpi sge, %31, %40 : vector<1x1x32xi32>
    %c16_i32 = arith.constant 16 : i32
    %42 = vector.broadcast %c16_i32 : i32 to vector<1x1x32xi32>
    %43 = arith.cmpi slt, %31, %42 : vector<1x1x32xi32>
    %44 = arith.andi %41, %43 : vector<1x1x32xi1>
    %cst_15 = arith.constant 1.000000e+00 : f32
    %cst_16 = arith.constant 0.000000e+00 : f32
    %45 = vector.broadcast %cst_15 : f32 to vector<1x1x32xf32>
    %46 = vector.broadcast %cst_16 : f32 to vector<1x1x32xf32>
    %47 = arith.select %44, %45, %46 : vector<1x1x32xi1>, vector<1x1x32xf32>
    %c16_i32_17 = arith.constant 16 : i32
    %48 = vector.broadcast %c16_i32_17 : i32 to vector<1x1x32xi32>
    %49 = arith.cmpi sge, %31, %48 : vector<1x1x32xi32>
    %c24_i32 = arith.constant 24 : i32
    %50 = vector.broadcast %c24_i32 : i32 to vector<1x1x32xi32>
    %51 = arith.cmpi slt, %31, %50 : vector<1x1x32xi32>
    %52 = arith.andi %49, %51 : vector<1x1x32xi1>
    %cst_18 = arith.constant 1.000000e+00 : f32
    %cst_19 = arith.constant 0.000000e+00 : f32
    %53 = vector.broadcast %cst_18 : f32 to vector<1x1x32xf32>
    %54 = vector.broadcast %cst_19 : f32 to vector<1x1x32xf32>
    %55 = arith.select %52, %53, %54 : vector<1x1x32xi1>, vector<1x1x32xf32>
    %c24_i32_20 = arith.constant 24 : i32
    %56 = vector.broadcast %c24_i32_20 : i32 to vector<1x1x32xi32>
    %57 = arith.cmpi sge, %31, %56 : vector<1x1x32xi32>
    %c32_i32 = arith.constant 32 : i32
    %58 = vector.broadcast %c32_i32 : i32 to vector<1x1x32xi32>
    %59 = arith.cmpi slt, %31, %58 : vector<1x1x32xi32>
    %60 = arith.andi %57, %59 : vector<1x1x32xi1>
    %cst_21 = arith.constant 1.000000e+00 : f32
    %cst_22 = arith.constant 0.000000e+00 : f32
    %61 = vector.broadcast %cst_21 : f32 to vector<1x1x32xf32>
    %62 = vector.broadcast %cst_22 : f32 to vector<1x1x32xf32>
    %63 = arith.select %60, %61, %62 : vector<1x1x32xi1>, vector<1x1x32xf32>
    %c0_23 = arith.constant 0 : index
    %c0_24 = arith.constant 0 : index
    %64 = vector.load %arg4[%c0_23, %c0_24] : memref<336x128xf32, #tpu.memory_space<vmem>>, vector<32x128xf32>
    %c32 = arith.constant 32 : index
    %c0_25 = arith.constant 0 : index
    %65 = vector.load %arg4[%c32, %c0_25] : memref<336x128xf32, #tpu.memory_space<vmem>>, vector<32x32xf32>
    %c64 = arith.constant 64 : index
    %c0_26 = arith.constant 0 : index
    %66 = vector.load %arg4[%c64, %c0_26] : memref<336x128xf32, #tpu.memory_space<vmem>>, vector<32x64xf32>
    %c96 = arith.constant 96 : index
    %c0_27 = arith.constant 0 : index
    %67 = vector.load %arg4[%c96, %c0_27] : memref<336x128xf32, #tpu.memory_space<vmem>>, vector<64x32xf32>
    %c160 = arith.constant 160 : index
    %c0_28 = arith.constant 0 : index
    %68 = vector.load %arg4[%c160, %c0_28] : memref<336x128xf32, #tpu.memory_space<vmem>>, vector<8x128xf32>
    %cst_29 = arith.constant dense<0.000000e+00> : vector<16x128xf32>
    %69 = tpu.matmul %15, %64, %cst_29 {dimension_numbers = #tpu.dot_dimension_numbers<[1], [0], [0], [1], [0, 0, 1, 1], [], []>} : vector<16x32xf32>, vector<32x128xf32>, vector<16x128xf32> -> vector<16x128xf32>
    %70 = vector.extract_strided_slice %68 {offsets = [0, 0], sizes = [1, 128], strides = [1, 1]} : vector<8x128xf32> to vector<1x128xf32>
    %71 = vector.broadcast %70 : vector<1x128xf32> to vector<16x128xf32>
    %72 = arith.addf %69, %71 : vector<16x128xf32>
    %73 = vector.extract_strided_slice %72 {offsets = [0, 0], sizes = [16, 32], strides = [1, 1]} : vector<16x128xf32> to vector<16x32xf32>
    %cst_30 = arith.constant 0.353553385 : f32
    %74 = vector.broadcast %cst_30 : f32 to vector<16x32xf32>
    %75 = arith.mulf %73, %74 : vector<16x32xf32>
    %76 = vector.shape_cast %75 : vector<16x32xf32> to vector<2x8x32xf32>
    %77 = vector.extract_strided_slice %72 {offsets = [0, 32], sizes = [16, 32], strides = [1, 1]} : vector<16x128xf32> to vector<16x32xf32>
    %78 = vector.shape_cast %77 : vector<16x32xf32> to vector<2x8x32xf32>
    %79 = vector.extract_strided_slice %72 {offsets = [0, 64], sizes = [16, 32], strides = [1, 1]} : vector<16x128xf32> to vector<16x32xf32>
    %80 = vector.shape_cast %79 : vector<16x32xf32> to vector<2x8x32xf32>
    %cst_31 = arith.constant 0.000000e+00 : f32
    %81 = vector.broadcast %cst_31 : f32 to vector<2x8x32xf32>
    %82 = vector.broadcast %39 : vector<1x1x32xf32> to vector<2x8x32xf32>
    %83 = arith.mulf %76, %82 : vector<2x8x32xf32>
    "tpu.trace_start"() <{level = 10 : i32, message = "bqd,bkd->bqk"}> : () -> ()
    %cst_32 = arith.constant dense<0.000000e+00> : vector<2x8x8xf32>
    %84 = tpu.matmul %83, %78, %cst_32 {dimension_numbers = #tpu.dot_dimension_numbers<[2], [2], [1], [1], [0, 0, 0, 1, 1, 1], [0], [0]>} : vector<2x8x32xf32>, vector<2x8x32xf32>, vector<2x8x8xf32> -> vector<2x8x8xf32>
    "tpu.trace_stop"() : () -> ()
    %85 = arith.addf %84, %30 : vector<2x8x8xf32>
    %cst_33 = arith.constant dense<0xFF800000> : vector<2x8xf32>
    %86 = vector.multi_reduction <maximumf>, %85, %cst_33 [2] : vector<2x8x8xf32> to vector<2x8xf32>
    %87 = vector.shape_cast %86 : vector<2x8xf32> to vector<2x8x1xf32>
    %88 = vector.broadcast %87 : vector<2x8x1xf32> to vector<2x8x8xf32>
    %89 = arith.subf %85, %88 : vector<2x8x8xf32>
    %90 = math.exp %89 : vector<2x8x8xf32>
    %cst_34 = arith.constant dense<0.000000e+00> : vector<2x8xf32>
    %91 = vector.multi_reduction <add>, %90, %cst_34 [2] : vector<2x8x8xf32> to vector<2x8xf32>
    %92 = vector.shape_cast %91 : vector<2x8xf32> to vector<2x8x1xf32>
    %93 = vector.broadcast %92 : vector<2x8x1xf32> to vector<2x8x8xf32>
    %94 = arith.divf %90, %93 : vector<2x8x8xf32>
    %95 = vector.broadcast %39 : vector<1x1x32xf32> to vector<2x8x32xf32>
    %96 = arith.mulf %80, %95 : vector<2x8x32xf32>
    "tpu.trace_start"() <{level = 10 : i32, message = "bqk,bkd->bqd"}> : () -> ()
    %cst_35 = arith.constant dense<0.000000e+00> : vector<2x8x32xf32>
    %97 = tpu.matmul %94, %96, %cst_35 {dimension_numbers = #tpu.dot_dimension_numbers<[2], [1], [1], [2], [0, 0, 0, 1, 1, 2], [0], [0]>} : vector<2x8x8xf32>, vector<2x8x32xf32>, vector<2x8x32xf32> -> vector<2x8x32xf32>
    "tpu.trace_stop"() : () -> ()
    %98 = arith.addf %81, %97 : vector<2x8x32xf32>
    %99 = vector.broadcast %47 : vector<1x1x32xf32> to vector<2x8x32xf32>
    %100 = arith.mulf %76, %99 : vector<2x8x32xf32>
    "tpu.trace_start"() <{level = 10 : i32, message = "bqd,bkd->bqk"}> : () -> ()
    %cst_36 = arith.constant dense<0.000000e+00> : vector<2x8x8xf32>
    %101 = tpu.matmul %100, %78, %cst_36 {dimension_numbers = #tpu.dot_dimension_numbers<[2], [2], [1], [1], [0, 0, 0, 1, 1, 1], [0], [0]>} : vector<2x8x32xf32>, vector<2x8x32xf32>, vector<2x8x8xf32> -> vector<2x8x8xf32>
    "tpu.trace_stop"() : () -> ()
    %102 = arith.addf %101, %30 : vector<2x8x8xf32>
    %cst_37 = arith.constant dense<0xFF800000> : vector<2x8xf32>
    %103 = vector.multi_reduction <maximumf>, %102, %cst_37 [2] : vector<2x8x8xf32> to vector<2x8xf32>
    %104 = vector.shape_cast %103 : vector<2x8xf32> to vector<2x8x1xf32>
    %105 = vector.broadcast %104 : vector<2x8x1xf32> to vector<2x8x8xf32>
    %106 = arith.subf %102, %105 : vector<2x8x8xf32>
    %107 = math.exp %106 : vector<2x8x8xf32>
    %cst_38 = arith.constant dense<0.000000e+00> : vector<2x8xf32>
    %108 = vector.multi_reduction <add>, %107, %cst_38 [2] : vector<2x8x8xf32> to vector<2x8xf32>
    %109 = vector.shape_cast %108 : vector<2x8xf32> to vector<2x8x1xf32>
    %110 = vector.broadcast %109 : vector<2x8x1xf32> to vector<2x8x8xf32>
    %111 = arith.divf %107, %110 : vector<2x8x8xf32>
    %112 = vector.broadcast %47 : vector<1x1x32xf32> to vector<2x8x32xf32>
    %113 = arith.mulf %80, %112 : vector<2x8x32xf32>
    "tpu.trace_start"() <{level = 10 : i32, message = "bqk,bkd->bqd"}> : () -> ()
    %cst_39 = arith.constant dense<0.000000e+00> : vector<2x8x32xf32>
    %114 = tpu.matmul %111, %113, %cst_39 {dimension_numbers = #tpu.dot_dimension_numbers<[2], [1], [1], [2], [0, 0, 0, 1, 1, 2], [0], [0]>} : vector<2x8x8xf32>, vector<2x8x32xf32>, vector<2x8x32xf32> -> vector<2x8x32xf32>
    "tpu.trace_stop"() : () -> ()
    %115 = arith.addf %98, %114 : vector<2x8x32xf32>
    %116 = vector.broadcast %55 : vector<1x1x32xf32> to vector<2x8x32xf32>
    %117 = arith.mulf %76, %116 : vector<2x8x32xf32>
    "tpu.trace_start"() <{level = 10 : i32, message = "bqd,bkd->bqk"}> : () -> ()
    %cst_40 = arith.constant dense<0.000000e+00> : vector<2x8x8xf32>
    %118 = tpu.matmul %117, %78, %cst_40 {dimension_numbers = #tpu.dot_dimension_numbers<[2], [2], [1], [1], [0, 0, 0, 1, 1, 1], [0], [0]>} : vector<2x8x32xf32>, vector<2x8x32xf32>, vector<2x8x8xf32> -> vector<2x8x8xf32>
    "tpu.trace_stop"() : () -> ()
    %119 = arith.addf %118, %30 : vector<2x8x8xf32>
    %cst_41 = arith.constant dense<0xFF800000> : vector<2x8xf32>
    %120 = vector.multi_reduction <maximumf>, %119, %cst_41 [2] : vector<2x8x8xf32> to vector<2x8xf32>
    %121 = vector.shape_cast %120 : vector<2x8xf32> to vector<2x8x1xf32>
    %122 = vector.broadcast %121 : vector<2x8x1xf32> to vector<2x8x8xf32>
    %123 = arith.subf %119, %122 : vector<2x8x8xf32>
    %124 = math.exp %123 : vector<2x8x8xf32>
    %cst_42 = arith.constant dense<0.000000e+00> : vector<2x8xf32>
    %125 = vector.multi_reduction <add>, %124, %cst_42 [2] : vector<2x8x8xf32> to vector<2x8xf32>
    %126 = vector.shape_cast %125 : vector<2x8xf32> to vector<2x8x1xf32>
    %127 = vector.broadcast %126 : vector<2x8x1xf32> to vector<2x8x8xf32>
    %128 = arith.divf %124, %127 : vector<2x8x8xf32>
    %129 = vector.broadcast %55 : vector<1x1x32xf32> to vector<2x8x32xf32>
    %130 = arith.mulf %80, %129 : vector<2x8x32xf32>
    "tpu.trace_start"() <{level = 10 : i32, message = "bqk,bkd->bqd"}> : () -> ()
    %cst_43 = arith.constant dense<0.000000e+00> : vector<2x8x32xf32>
    %131 = tpu.matmul %128, %130, %cst_43 {dimension_numbers = #tpu.dot_dimension_numbers<[2], [1], [1], [2], [0, 0, 0, 1, 1, 2], [0], [0]>} : vector<2x8x8xf32>, vector<2x8x32xf32>, vector<2x8x32xf32> -> vector<2x8x32xf32>
    "tpu.trace_stop"() : () -> ()
    %132 = arith.addf %115, %131 : vector<2x8x32xf32>
    %133 = vector.broadcast %63 : vector<1x1x32xf32> to vector<2x8x32xf32>
    %134 = arith.mulf %76, %133 : vector<2x8x32xf32>
    "tpu.trace_start"() <{level = 10 : i32, message = "bqd,bkd->bqk"}> : () -> ()
    %cst_44 = arith.constant dense<0.000000e+00> : vector<2x8x8xf32>
    %135 = tpu.matmul %134, %78, %cst_44 {dimension_numbers = #tpu.dot_dimension_numbers<[2], [2], [1], [1], [0, 0, 0, 1, 1, 1], [0], [0]>} : vector<2x8x32xf32>, vector<2x8x32xf32>, vector<2x8x8xf32> -> vector<2x8x8xf32>
    "tpu.trace_stop"() : () -> ()
    %136 = arith.addf %135, %30 : vector<2x8x8xf32>
    %cst_45 = arith.constant dense<0xFF800000> : vector<2x8xf32>
    %137 = vector.multi_reduction <maximumf>, %136, %cst_45 [2] : vector<2x8x8xf32> to vector<2x8xf32>
    %138 = vector.shape_cast %137 : vector<2x8xf32> to vector<2x8x1xf32>
    %139 = vector.broadcast %138 : vector<2x8x1xf32> to vector<2x8x8xf32>
    %140 = arith.subf %136, %139 : vector<2x8x8xf32>
    %141 = math.exp %140 : vector<2x8x8xf32>
    %cst_46 = arith.constant dense<0.000000e+00> : vector<2x8xf32>
    %142 = vector.multi_reduction <add>, %141, %cst_46 [2] : vector<2x8x8xf32> to vector<2x8xf32>
    %143 = vector.shape_cast %142 : vector<2x8xf32> to vector<2x8x1xf32>
    %144 = vector.broadcast %143 : vector<2x8x1xf32> to vector<2x8x8xf32>
    %145 = arith.divf %141, %144 : vector<2x8x8xf32>
    %146 = vector.broadcast %63 : vector<1x1x32xf32> to vector<2x8x32xf32>
    %147 = arith.mulf %80, %146 : vector<2x8x32xf32>
    "tpu.trace_start"() <{level = 10 : i32, message = "bqk,bkd->bqd"}> : () -> ()
    %cst_47 = arith.constant dense<0.000000e+00> : vector<2x8x32xf32>
    %148 = tpu.matmul %145, %147, %cst_47 {dimension_numbers = #tpu.dot_dimension_numbers<[2], [1], [1], [2], [0, 0, 0, 1, 1, 2], [0], [0]>} : vector<2x8x8xf32>, vector<2x8x32xf32>, vector<2x8x32xf32> -> vector<2x8x32xf32>
    "tpu.trace_stop"() : () -> ()
    %149 = arith.addf %132, %148 : vector<2x8x32xf32>
    %150 = vector.shape_cast %149 : vector<2x8x32xf32> to vector<16x32xf32>
    %cst_48 = arith.constant dense<0.000000e+00> : vector<16x32xf32>
    %151 = tpu.matmul %150, %65, %cst_48 {dimension_numbers = #tpu.dot_dimension_numbers<[1], [0], [0], [1], [0, 0, 1, 1], [], []>} : vector<16x32xf32>, vector<32x32xf32>, vector<16x32xf32> -> vector<16x32xf32>
    %152 = vector.extract_strided_slice %68 {offsets = [1, 0], sizes = [1, 32], strides = [1, 1]} : vector<8x128xf32> to vector<1x32xf32>
    %153 = vector.broadcast %152 : vector<1x32xf32> to vector<16x32xf32>
    %154 = arith.addf %151, %153 : vector<16x32xf32>
    %155 = arith.addf %15, %154 : vector<16x32xf32>
    %156 = vector.extract_strided_slice %68 {offsets = [4, 0], sizes = [1, 32], strides = [1, 1]} : vector<8x128xf32> to vector<1x32xf32>
    %157 = vector.extract_strided_slice %68 {offsets = [5, 0], sizes = [1, 32], strides = [1, 1]} : vector<8x128xf32> to vector<1x32xf32>
    %cst_49 = arith.constant dense<0.000000e+00> : vector<16xf32>
    %158 = vector.multi_reduction <add>, %155, %cst_49 [1] : vector<16x32xf32> to vector<16xf32>
    %159 = vector.shape_cast %158 : vector<16xf32> to vector<16x1xf32>
    %cst_50 = arith.constant 3.200000e+01 : f32
    %160 = vector.broadcast %cst_50 : f32 to vector<16x1xf32>
    %161 = arith.divf %159, %160 : vector<16x1xf32>
    %162 = vector.broadcast %161 : vector<16x1xf32> to vector<16x32xf32>
    %163 = arith.subf %155, %162 : vector<16x32xf32>
    %164 = arith.mulf %163, %163 : vector<16x32xf32>
    %cst_51 = arith.constant dense<0.000000e+00> : vector<16xf32>
    %165 = vector.multi_reduction <add>, %164, %cst_51 [1] : vector<16x32xf32> to vector<16xf32>
    %166 = vector.shape_cast %165 : vector<16xf32> to vector<16x1xf32>
    %cst_52 = arith.constant 3.200000e+01 : f32
    %167 = vector.broadcast %cst_52 : f32 to vector<16x1xf32>
    %168 = arith.divf %166, %167 : vector<16x1xf32>
    %169 = vector.broadcast %161 : vector<16x1xf32> to vector<16x32xf32>
    %170 = arith.subf %155, %169 : vector<16x32xf32>
    %cst_53 = arith.constant 9.99999974E-6 : f32
    %171 = vector.broadcast %cst_53 : f32 to vector<16x1xf32>
    %172 = arith.addf %168, %171 : vector<16x1xf32>
    %173 = math.rsqrt %172 : vector<16x1xf32>
    %174 = vector.broadcast %173 : vector<16x1xf32> to vector<16x32xf32>
    %175 = arith.mulf %170, %174 : vector<16x32xf32>
    %176 = vector.broadcast %156 : vector<1x32xf32> to vector<16x32xf32>
    %177 = arith.mulf %175, %176 : vector<16x32xf32>
    %178 = vector.broadcast %157 : vector<1x32xf32> to vector<16x32xf32>
    %179 = arith.addf %177, %178 : vector<16x32xf32>
    %cst_54 = arith.constant dense<0.000000e+00> : vector<16x64xf32>
    %180 = tpu.matmul %179, %66, %cst_54 {dimension_numbers = #tpu.dot_dimension_numbers<[1], [0], [0], [1], [0, 0, 1, 1], [], []>} : vector<16x32xf32>, vector<32x64xf32>, vector<16x64xf32> -> vector<16x64xf32>
    %181 = vector.extract_strided_slice %68 {offsets = [2, 0], sizes = [1, 64], strides = [1, 1]} : vector<8x128xf32> to vector<1x64xf32>
    %182 = vector.broadcast %181 : vector<1x64xf32> to vector<16x64xf32>
    %183 = arith.addf %180, %182 : vector<16x64xf32>
    %cst_55 = arith.constant 0.000000e+00 : f32
    %184 = vector.broadcast %cst_55 : f32 to vector<16x64xf32>
    %185 = arith.maximumf %183, %184 : vector<16x64xf32>
    %cst_56 = arith.constant dense<0.000000e+00> : vector<16x32xf32>
    %186 = tpu.matmul %185, %67, %cst_56 {dimension_numbers = #tpu.dot_dimension_numbers<[1], [0], [0], [1], [0, 0, 1, 1], [], []>} : vector<16x64xf32>, vector<64x32xf32>, vector<16x32xf32> -> vector<16x32xf32>
    %187 = vector.extract_strided_slice %68 {offsets = [3, 0], sizes = [1, 32], strides = [1, 1]} : vector<8x128xf32> to vector<1x32xf32>
    %188 = vector.broadcast %187 : vector<1x32xf32> to vector<16x32xf32>
    %189 = arith.addf %186, %188 : vector<16x32xf32>
    %190 = arith.addf %179, %189 : vector<16x32xf32>
    %191 = vector.extract_strided_slice %68 {offsets = [6, 0], sizes = [1, 32], strides = [1, 1]} : vector<8x128xf32> to vector<1x32xf32>
    %192 = vector.extract_strided_slice %68 {offsets = [7, 0], sizes = [1, 32], strides = [1, 1]} : vector<8x128xf32> to vector<1x32xf32>
    %cst_57 = arith.constant dense<0.000000e+00> : vector<16xf32>
    %193 = vector.multi_reduction <add>, %190, %cst_57 [1] : vector<16x32xf32> to vector<16xf32>
    %194 = vector.shape_cast %193 : vector<16xf32> to vector<16x1xf32>
    %cst_58 = arith.constant 3.200000e+01 : f32
    %195 = vector.broadcast %cst_58 : f32 to vector<16x1xf32>
    %196 = arith.divf %194, %195 : vector<16x1xf32>
    %197 = vector.broadcast %196 : vector<16x1xf32> to vector<16x32xf32>
    %198 = arith.subf %190, %197 : vector<16x32xf32>
    %199 = arith.mulf %198, %198 : vector<16x32xf32>
    %cst_59 = arith.constant dense<0.000000e+00> : vector<16xf32>
    %200 = vector.multi_reduction <add>, %199, %cst_59 [1] : vector<16x32xf32> to vector<16xf32>
    %201 = vector.shape_cast %200 : vector<16xf32> to vector<16x1xf32>
    %cst_60 = arith.constant 3.200000e+01 : f32
    %202 = vector.broadcast %cst_60 : f32 to vector<16x1xf32>
    %203 = arith.divf %201, %202 : vector<16x1xf32>
    %204 = vector.broadcast %196 : vector<16x1xf32> to vector<16x32xf32>
    %205 = arith.subf %190, %204 : vector<16x32xf32>
    %cst_61 = arith.constant 9.99999974E-6 : f32
    %206 = vector.broadcast %cst_61 : f32 to vector<16x1xf32>
    %207 = arith.addf %203, %206 : vector<16x1xf32>
    %208 = math.rsqrt %207 : vector<16x1xf32>
    %209 = vector.broadcast %208 : vector<16x1xf32> to vector<16x32xf32>
    %210 = arith.mulf %205, %209 : vector<16x32xf32>
    %211 = vector.broadcast %191 : vector<1x32xf32> to vector<16x32xf32>
    %212 = arith.mulf %210, %211 : vector<16x32xf32>
    %213 = vector.broadcast %192 : vector<1x32xf32> to vector<16x32xf32>
    %214 = arith.addf %212, %213 : vector<16x32xf32>
    %c168 = arith.constant 168 : index
    %c0_62 = arith.constant 0 : index
    %215 = vector.load %arg4[%c168, %c0_62] : memref<336x128xf32, #tpu.memory_space<vmem>>, vector<32x128xf32>
    %c200 = arith.constant 200 : index
    %c0_63 = arith.constant 0 : index
    %216 = vector.load %arg4[%c200, %c0_63] : memref<336x128xf32, #tpu.memory_space<vmem>>, vector<32x32xf32>
    %c232 = arith.constant 232 : index
    %c0_64 = arith.constant 0 : index
    %217 = vector.load %arg4[%c232, %c0_64] : memref<336x128xf32, #tpu.memory_space<vmem>>, vector<32x64xf32>
    %c264 = arith.constant 264 : index
    %c0_65 = arith.constant 0 : index
    %218 = vector.load %arg4[%c264, %c0_65] : memref<336x128xf32, #tpu.memory_space<vmem>>, vector<64x32xf32>
    %c328 = arith.constant 328 : index
    %c0_66 = arith.constant 0 : index
    %219 = vector.load %arg4[%c328, %c0_66] : memref<336x128xf32, #tpu.memory_space<vmem>>, vector<8x128xf32>
    %cst_67 = arith.constant dense<0.000000e+00> : vector<16x128xf32>
    %220 = tpu.matmul %214, %215, %cst_67 {dimension_numbers = #tpu.dot_dimension_numbers<[1], [0], [0], [1], [0, 0, 1, 1], [], []>} : vector<16x32xf32>, vector<32x128xf32>, vector<16x128xf32> -> vector<16x128xf32>
    %221 = vector.extract_strided_slice %219 {offsets = [0, 0], sizes = [1, 128], strides = [1, 1]} : vector<8x128xf32> to vector<1x128xf32>
    %222 = vector.broadcast %221 : vector<1x128xf32> to vector<16x128xf32>
    %223 = arith.addf %220, %222 : vector<16x128xf32>
    %224 = vector.extract_strided_slice %223 {offsets = [0, 0], sizes = [16, 32], strides = [1, 1]} : vector<16x128xf32> to vector<16x32xf32>
    %cst_68 = arith.constant 0.353553385 : f32
    %225 = vector.broadcast %cst_68 : f32 to vector<16x32xf32>
    %226 = arith.mulf %224, %225 : vector<16x32xf32>
    %227 = vector.shape_cast %226 : vector<16x32xf32> to vector<2x8x32xf32>
    %228 = vector.extract_strided_slice %223 {offsets = [0, 32], sizes = [16, 32], strides = [1, 1]} : vector<16x128xf32> to vector<16x32xf32>
    %229 = vector.shape_cast %228 : vector<16x32xf32> to vector<2x8x32xf32>
    %230 = vector.extract_strided_slice %223 {offsets = [0, 64], sizes = [16, 32], strides = [1, 1]} : vector<16x128xf32> to vector<16x32xf32>
    %231 = vector.shape_cast %230 : vector<16x32xf32> to vector<2x8x32xf32>
    %cst_69 = arith.constant 0.000000e+00 : f32
    %232 = vector.broadcast %cst_69 : f32 to vector<2x8x32xf32>
    %233 = vector.broadcast %39 : vector<1x1x32xf32> to vector<2x8x32xf32>
    %234 = arith.mulf %227, %233 : vector<2x8x32xf32>
    "tpu.trace_start"() <{level = 10 : i32, message = "bqd,bkd->bqk"}> : () -> ()
    %cst_70 = arith.constant dense<0.000000e+00> : vector<2x8x8xf32>
    %235 = tpu.matmul %234, %229, %cst_70 {dimension_numbers = #tpu.dot_dimension_numbers<[2], [2], [1], [1], [0, 0, 0, 1, 1, 1], [0], [0]>} : vector<2x8x32xf32>, vector<2x8x32xf32>, vector<2x8x8xf32> -> vector<2x8x8xf32>
    "tpu.trace_stop"() : () -> ()
    %236 = arith.addf %235, %30 : vector<2x8x8xf32>
    %cst_71 = arith.constant dense<0xFF800000> : vector<2x8xf32>
    %237 = vector.multi_reduction <maximumf>, %236, %cst_71 [2] : vector<2x8x8xf32> to vector<2x8xf32>
    %238 = vector.shape_cast %237 : vector<2x8xf32> to vector<2x8x1xf32>
    %239 = vector.broadcast %238 : vector<2x8x1xf32> to vector<2x8x8xf32>
    %240 = arith.subf %236, %239 : vector<2x8x8xf32>
    %241 = math.exp %240 : vector<2x8x8xf32>
    %cst_72 = arith.constant dense<0.000000e+00> : vector<2x8xf32>
    %242 = vector.multi_reduction <add>, %241, %cst_72 [2] : vector<2x8x8xf32> to vector<2x8xf32>
    %243 = vector.shape_cast %242 : vector<2x8xf32> to vector<2x8x1xf32>
    %244 = vector.broadcast %243 : vector<2x8x1xf32> to vector<2x8x8xf32>
    %245 = arith.divf %241, %244 : vector<2x8x8xf32>
    %246 = vector.broadcast %39 : vector<1x1x32xf32> to vector<2x8x32xf32>
    %247 = arith.mulf %231, %246 : vector<2x8x32xf32>
    "tpu.trace_start"() <{level = 10 : i32, message = "bqk,bkd->bqd"}> : () -> ()
    %cst_73 = arith.constant dense<0.000000e+00> : vector<2x8x32xf32>
    %248 = tpu.matmul %245, %247, %cst_73 {dimension_numbers = #tpu.dot_dimension_numbers<[2], [1], [1], [2], [0, 0, 0, 1, 1, 2], [0], [0]>} : vector<2x8x8xf32>, vector<2x8x32xf32>, vector<2x8x32xf32> -> vector<2x8x32xf32>
    "tpu.trace_stop"() : () -> ()
    %249 = arith.addf %232, %248 : vector<2x8x32xf32>
    %250 = vector.broadcast %47 : vector<1x1x32xf32> to vector<2x8x32xf32>
    %251 = arith.mulf %227, %250 : vector<2x8x32xf32>
    "tpu.trace_start"() <{level = 10 : i32, message = "bqd,bkd->bqk"}> : () -> ()
    %cst_74 = arith.constant dense<0.000000e+00> : vector<2x8x8xf32>
    %252 = tpu.matmul %251, %229, %cst_74 {dimension_numbers = #tpu.dot_dimension_numbers<[2], [2], [1], [1], [0, 0, 0, 1, 1, 1], [0], [0]>} : vector<2x8x32xf32>, vector<2x8x32xf32>, vector<2x8x8xf32> -> vector<2x8x8xf32>
    "tpu.trace_stop"() : () -> ()
    %253 = arith.addf %252, %30 : vector<2x8x8xf32>
    %cst_75 = arith.constant dense<0xFF800000> : vector<2x8xf32>
    %254 = vector.multi_reduction <maximumf>, %253, %cst_75 [2] : vector<2x8x8xf32> to vector<2x8xf32>
    %255 = vector.shape_cast %254 : vector<2x8xf32> to vector<2x8x1xf32>
    %256 = vector.broadcast %255 : vector<2x8x1xf32> to vector<2x8x8xf32>
    %257 = arith.subf %253, %256 : vector<2x8x8xf32>
    %258 = math.exp %257 : vector<2x8x8xf32>
    %cst_76 = arith.constant dense<0.000000e+00> : vector<2x8xf32>
    %259 = vector.multi_reduction <add>, %258, %cst_76 [2] : vector<2x8x8xf32> to vector<2x8xf32>
    %260 = vector.shape_cast %259 : vector<2x8xf32> to vector<2x8x1xf32>
    %261 = vector.broadcast %260 : vector<2x8x1xf32> to vector<2x8x8xf32>
    %262 = arith.divf %258, %261 : vector<2x8x8xf32>
    %263 = vector.broadcast %47 : vector<1x1x32xf32> to vector<2x8x32xf32>
    %264 = arith.mulf %231, %263 : vector<2x8x32xf32>
    "tpu.trace_start"() <{level = 10 : i32, message = "bqk,bkd->bqd"}> : () -> ()
    %cst_77 = arith.constant dense<0.000000e+00> : vector<2x8x32xf32>
    %265 = tpu.matmul %262, %264, %cst_77 {dimension_numbers = #tpu.dot_dimension_numbers<[2], [1], [1], [2], [0, 0, 0, 1, 1, 2], [0], [0]>} : vector<2x8x8xf32>, vector<2x8x32xf32>, vector<2x8x32xf32> -> vector<2x8x32xf32>
    "tpu.trace_stop"() : () -> ()
    %266 = arith.addf %249, %265 : vector<2x8x32xf32>
    %267 = vector.broadcast %55 : vector<1x1x32xf32> to vector<2x8x32xf32>
    %268 = arith.mulf %227, %267 : vector<2x8x32xf32>
    "tpu.trace_start"() <{level = 10 : i32, message = "bqd,bkd->bqk"}> : () -> ()
    %cst_78 = arith.constant dense<0.000000e+00> : vector<2x8x8xf32>
    %269 = tpu.matmul %268, %229, %cst_78 {dimension_numbers = #tpu.dot_dimension_numbers<[2], [2], [1], [1], [0, 0, 0, 1, 1, 1], [0], [0]>} : vector<2x8x32xf32>, vector<2x8x32xf32>, vector<2x8x8xf32> -> vector<2x8x8xf32>
    "tpu.trace_stop"() : () -> ()
    %270 = arith.addf %269, %30 : vector<2x8x8xf32>
    %cst_79 = arith.constant dense<0xFF800000> : vector<2x8xf32>
    %271 = vector.multi_reduction <maximumf>, %270, %cst_79 [2] : vector<2x8x8xf32> to vector<2x8xf32>
    %272 = vector.shape_cast %271 : vector<2x8xf32> to vector<2x8x1xf32>
    %273 = vector.broadcast %272 : vector<2x8x1xf32> to vector<2x8x8xf32>
    %274 = arith.subf %270, %273 : vector<2x8x8xf32>
    %275 = math.exp %274 : vector<2x8x8xf32>
    %cst_80 = arith.constant dense<0.000000e+00> : vector<2x8xf32>
    %276 = vector.multi_reduction <add>, %275, %cst_80 [2] : vector<2x8x8xf32> to vector<2x8xf32>
    %277 = vector.shape_cast %276 : vector<2x8xf32> to vector<2x8x1xf32>
    %278 = vector.broadcast %277 : vector<2x8x1xf32> to vector<2x8x8xf32>
    %279 = arith.divf %275, %278 : vector<2x8x8xf32>
    %280 = vector.broadcast %55 : vector<1x1x32xf32> to vector<2x8x32xf32>
    %281 = arith.mulf %231, %280 : vector<2x8x32xf32>
    "tpu.trace_start"() <{level = 10 : i32, message = "bqk,bkd->bqd"}> : () -> ()
    %cst_81 = arith.constant dense<0.000000e+00> : vector<2x8x32xf32>
    %282 = tpu.matmul %279, %281, %cst_81 {dimension_numbers = #tpu.dot_dimension_numbers<[2], [1], [1], [2], [0, 0, 0, 1, 1, 2], [0], [0]>} : vector<2x8x8xf32>, vector<2x8x32xf32>, vector<2x8x32xf32> -> vector<2x8x32xf32>
    "tpu.trace_stop"() : () -> ()
    %283 = arith.addf %266, %282 : vector<2x8x32xf32>
    %284 = vector.broadcast %63 : vector<1x1x32xf32> to vector<2x8x32xf32>
    %285 = arith.mulf %227, %284 : vector<2x8x32xf32>
    "tpu.trace_start"() <{level = 10 : i32, message = "bqd,bkd->bqk"}> : () -> ()
    %cst_82 = arith.constant dense<0.000000e+00> : vector<2x8x8xf32>
    %286 = tpu.matmul %285, %229, %cst_82 {dimension_numbers = #tpu.dot_dimension_numbers<[2], [2], [1], [1], [0, 0, 0, 1, 1, 1], [0], [0]>} : vector<2x8x32xf32>, vector<2x8x32xf32>, vector<2x8x8xf32> -> vector<2x8x8xf32>
    "tpu.trace_stop"() : () -> ()
    %287 = arith.addf %286, %30 : vector<2x8x8xf32>
    %cst_83 = arith.constant dense<0xFF800000> : vector<2x8xf32>
    %288 = vector.multi_reduction <maximumf>, %287, %cst_83 [2] : vector<2x8x8xf32> to vector<2x8xf32>
    %289 = vector.shape_cast %288 : vector<2x8xf32> to vector<2x8x1xf32>
    %290 = vector.broadcast %289 : vector<2x8x1xf32> to vector<2x8x8xf32>
    %291 = arith.subf %287, %290 : vector<2x8x8xf32>
    %292 = math.exp %291 : vector<2x8x8xf32>
    %cst_84 = arith.constant dense<0.000000e+00> : vector<2x8xf32>
    %293 = vector.multi_reduction <add>, %292, %cst_84 [2] : vector<2x8x8xf32> to vector<2x8xf32>
    %294 = vector.shape_cast %293 : vector<2x8xf32> to vector<2x8x1xf32>
    %295 = vector.broadcast %294 : vector<2x8x1xf32> to vector<2x8x8xf32>
    %296 = arith.divf %292, %295 : vector<2x8x8xf32>
    %297 = vector.broadcast %63 : vector<1x1x32xf32> to vector<2x8x32xf32>
    %298 = arith.mulf %231, %297 : vector<2x8x32xf32>
    "tpu.trace_start"() <{level = 10 : i32, message = "bqk,bkd->bqd"}> : () -> ()
    %cst_85 = arith.constant dense<0.000000e+00> : vector<2x8x32xf32>
    %299 = tpu.matmul %296, %298, %cst_85 {dimension_numbers = #tpu.dot_dimension_numbers<[2], [1], [1], [2], [0, 0, 0, 1, 1, 2], [0], [0]>} : vector<2x8x8xf32>, vector<2x8x32xf32>, vector<2x8x32xf32> -> vector<2x8x32xf32>
    "tpu.trace_stop"() : () -> ()
    %300 = arith.addf %283, %299 : vector<2x8x32xf32>
    %301 = vector.shape_cast %300 : vector<2x8x32xf32> to vector<16x32xf32>
    %cst_86 = arith.constant dense<0.000000e+00> : vector<16x32xf32>
    %302 = tpu.matmul %301, %216, %cst_86 {dimension_numbers = #tpu.dot_dimension_numbers<[1], [0], [0], [1], [0, 0, 1, 1], [], []>} : vector<16x32xf32>, vector<32x32xf32>, vector<16x32xf32> -> vector<16x32xf32>
    %303 = vector.extract_strided_slice %219 {offsets = [1, 0], sizes = [1, 32], strides = [1, 1]} : vector<8x128xf32> to vector<1x32xf32>
    %304 = vector.broadcast %303 : vector<1x32xf32> to vector<16x32xf32>
    %305 = arith.addf %302, %304 : vector<16x32xf32>
    %306 = arith.addf %214, %305 : vector<16x32xf32>
    %307 = vector.extract_strided_slice %219 {offsets = [4, 0], sizes = [1, 32], strides = [1, 1]} : vector<8x128xf32> to vector<1x32xf32>
    %308 = vector.extract_strided_slice %219 {offsets = [5, 0], sizes = [1, 32], strides = [1, 1]} : vector<8x128xf32> to vector<1x32xf32>
    %cst_87 = arith.constant dense<0.000000e+00> : vector<16xf32>
    %309 = vector.multi_reduction <add>, %306, %cst_87 [1] : vector<16x32xf32> to vector<16xf32>
    %310 = vector.shape_cast %309 : vector<16xf32> to vector<16x1xf32>
    %cst_88 = arith.constant 3.200000e+01 : f32
    %311 = vector.broadcast %cst_88 : f32 to vector<16x1xf32>
    %312 = arith.divf %310, %311 : vector<16x1xf32>
    %313 = vector.broadcast %312 : vector<16x1xf32> to vector<16x32xf32>
    %314 = arith.subf %306, %313 : vector<16x32xf32>
    %315 = arith.mulf %314, %314 : vector<16x32xf32>
    %cst_89 = arith.constant dense<0.000000e+00> : vector<16xf32>
    %316 = vector.multi_reduction <add>, %315, %cst_89 [1] : vector<16x32xf32> to vector<16xf32>
    %317 = vector.shape_cast %316 : vector<16xf32> to vector<16x1xf32>
    %cst_90 = arith.constant 3.200000e+01 : f32
    %318 = vector.broadcast %cst_90 : f32 to vector<16x1xf32>
    %319 = arith.divf %317, %318 : vector<16x1xf32>
    %320 = vector.broadcast %312 : vector<16x1xf32> to vector<16x32xf32>
    %321 = arith.subf %306, %320 : vector<16x32xf32>
    %cst_91 = arith.constant 9.99999974E-6 : f32
    %322 = vector.broadcast %cst_91 : f32 to vector<16x1xf32>
    %323 = arith.addf %319, %322 : vector<16x1xf32>
    %324 = math.rsqrt %323 : vector<16x1xf32>
    %325 = vector.broadcast %324 : vector<16x1xf32> to vector<16x32xf32>
    %326 = arith.mulf %321, %325 : vector<16x32xf32>
    %327 = vector.broadcast %307 : vector<1x32xf32> to vector<16x32xf32>
    %328 = arith.mulf %326, %327 : vector<16x32xf32>
    %329 = vector.broadcast %308 : vector<1x32xf32> to vector<16x32xf32>
    %330 = arith.addf %328, %329 : vector<16x32xf32>
    %cst_92 = arith.constant dense<0.000000e+00> : vector<16x64xf32>
    %331 = tpu.matmul %330, %217, %cst_92 {dimension_numbers = #tpu.dot_dimension_numbers<[1], [0], [0], [1], [0, 0, 1, 1], [], []>} : vector<16x32xf32>, vector<32x64xf32>, vector<16x64xf32> -> vector<16x64xf32>
    %332 = vector.extract_strided_slice %219 {offsets = [2, 0], sizes = [1, 64], strides = [1, 1]} : vector<8x128xf32> to vector<1x64xf32>
    %333 = vector.broadcast %332 : vector<1x64xf32> to vector<16x64xf32>
    %334 = arith.addf %331, %333 : vector<16x64xf32>
    %cst_93 = arith.constant 0.000000e+00 : f32
    %335 = vector.broadcast %cst_93 : f32 to vector<16x64xf32>
    %336 = arith.maximumf %334, %335 : vector<16x64xf32>
    %cst_94 = arith.constant dense<0.000000e+00> : vector<16x32xf32>
    %337 = tpu.matmul %336, %218, %cst_94 {dimension_numbers = #tpu.dot_dimension_numbers<[1], [0], [0], [1], [0, 0, 1, 1], [], []>} : vector<16x64xf32>, vector<64x32xf32>, vector<16x32xf32> -> vector<16x32xf32>
    %338 = vector.extract_strided_slice %219 {offsets = [3, 0], sizes = [1, 32], strides = [1, 1]} : vector<8x128xf32> to vector<1x32xf32>
    %339 = vector.broadcast %338 : vector<1x32xf32> to vector<16x32xf32>
    %340 = arith.addf %337, %339 : vector<16x32xf32>
    %341 = arith.addf %330, %340 : vector<16x32xf32>
    %342 = vector.extract_strided_slice %219 {offsets = [6, 0], sizes = [1, 32], strides = [1, 1]} : vector<8x128xf32> to vector<1x32xf32>
    %343 = vector.extract_strided_slice %219 {offsets = [7, 0], sizes = [1, 32], strides = [1, 1]} : vector<8x128xf32> to vector<1x32xf32>
    %cst_95 = arith.constant dense<0.000000e+00> : vector<16xf32>
    %344 = vector.multi_reduction <add>, %341, %cst_95 [1] : vector<16x32xf32> to vector<16xf32>
    %345 = vector.shape_cast %344 : vector<16xf32> to vector<16x1xf32>
    %cst_96 = arith.constant 3.200000e+01 : f32
    %346 = vector.broadcast %cst_96 : f32 to vector<16x1xf32>
    %347 = arith.divf %345, %346 : vector<16x1xf32>
    %348 = vector.broadcast %347 : vector<16x1xf32> to vector<16x32xf32>
    %349 = arith.subf %341, %348 : vector<16x32xf32>
    %350 = arith.mulf %349, %349 : vector<16x32xf32>
    %cst_97 = arith.constant dense<0.000000e+00> : vector<16xf32>
    %351 = vector.multi_reduction <add>, %350, %cst_97 [1] : vector<16x32xf32> to vector<16xf32>
    %352 = vector.shape_cast %351 : vector<16xf32> to vector<16x1xf32>
    %cst_98 = arith.constant 3.200000e+01 : f32
    %353 = vector.broadcast %cst_98 : f32 to vector<16x1xf32>
    %354 = arith.divf %352, %353 : vector<16x1xf32>
    %355 = vector.broadcast %347 : vector<16x1xf32> to vector<16x32xf32>
    %356 = arith.subf %341, %355 : vector<16x32xf32>
    %cst_99 = arith.constant 9.99999974E-6 : f32
    %357 = vector.broadcast %cst_99 : f32 to vector<16x1xf32>
    %358 = arith.addf %354, %357 : vector<16x1xf32>
    %359 = math.rsqrt %358 : vector<16x1xf32>
    %360 = vector.broadcast %359 : vector<16x1xf32> to vector<16x32xf32>
    %361 = arith.mulf %356, %360 : vector<16x32xf32>
    %362 = vector.broadcast %342 : vector<1x32xf32> to vector<16x32xf32>
    %363 = arith.mulf %361, %362 : vector<16x32xf32>
    %364 = vector.broadcast %343 : vector<1x32xf32> to vector<16x32xf32>
    %365 = arith.addf %363, %364 : vector<16x32xf32>
    %366 = vector.shape_cast %365 : vector<16x32xf32> to vector<2x8x32xf32>
    %c0_100 = arith.constant 0 : index
    %c0_101 = arith.constant 0 : index
    %367 = vector.load %arg5[%c0_100, %c0_101] : memref<8x32xf32, #tpu.memory_space<vmem>>, vector<8x32xf32>
    %368 = vector.shape_cast %367 : vector<8x32xf32> to vector<1x8x32xf32>
    %369 = vector.broadcast %368 : vector<1x8x32xf32> to vector<2x8x32xf32>
    %370 = arith.mulf %366, %369 : vector<2x8x32xf32>
    %cst_102 = arith.constant dense<0.000000e+00> : vector<2x8xf32>
    %371 = vector.multi_reduction <add>, %370, %cst_102 [2] : vector<2x8x32xf32> to vector<2x8xf32>
    %cst_103 = arith.constant dense<0.000000e+00> : vector<2xf32>
    %372 = vector.multi_reduction <add>, %371, %cst_103 [1] : vector<2x8xf32> to vector<2xf32>
    %373 = vector.shape_cast %372 : vector<2xf32> to vector<2x1xf32>
    %c0_104 = arith.constant 0 : index
    %c0_105 = arith.constant 0 : index
    %374 = vector.load %arg6[%c0_104, %c0_105] : memref<1x1xf32, #tpu.memory_space<vmem>>, vector<1x1xf32>
    %375 = vector.broadcast %374 : vector<1x1xf32> to vector<2x1xf32>
    %376 = arith.addf %373, %375 : vector<2x1xf32>
    %c0_106 = arith.constant 0 : index
    %c0_107 = arith.constant 0 : index
    %377 = vector.load %arg7[%c0_106, %c0_107] : memref<2x1xf32, #tpu.memory_space<vmem>>, vector<2x1xf32>
    tpu.vector_store %arg7[%c0_106, %c0_107], %376 {strides = array<i32>} : memref<2x1xf32, #tpu.memory_space<vmem>>, vector<2x1xf32>,
    return
  }
}

</mosaic_0001>

<llo_original>
// kernel: transformer_nli_forward.1
$region0: #{transformer_nli_forward.1}
  #allocation0 [shape = 'u32[]', space=smem, size = 0x4, offset = 0x4, fixed_abs, tag = 'smem constant byte address 0x4 - core index']
  #allocation1 [shape = 'u32[144,128]{1,0:T(1,128)}', space=vmem, size = 0x12000, scoped, tag = 'internal scratch']
  #allocation2 [shape = 'f32[1,1]{1,0:T(1,128)S(1)}', space=vmem, size = 0x200, scoped, tag = 'scoped memory for transformer_nli_forward.1']
  %s0 = inlined_call_operand.vmem [shape: s32[16,1], index: 0, kind: input, shape index: {}]
  %s1 = inlined_call_operand.vmem [shape: s32[2,1,8], index: 1, kind: input, shape index: {}]
  %s2 = inlined_call_operand.hbm [shape: f32[32,32], index: 2, kind: input, shape index: {}]
  %s3 = inlined_call_operand.vmem [shape: f32[8,32], index: 3, kind: input, shape index: {}]
  %s4 = inlined_call_operand.hbm [shape: f32[336,128], index: 4, kind: input, shape index: {}]
  %s5 = inlined_call_operand.vmem [shape: f32[8,32], index: 5, kind: input, shape index: {}]
  %s6 = inlined_call_operand.<no memory space> [shape: f32[1,1], index: 6, kind: input, shape index: {}]
  %s7 = inlined_call_operand.vmem [shape: f32[2,1], index: 7, kind: output, shape index: {}]
  %s8 = sld [smem:[#allocation0]]
  $region46: #{transformer_nli_forward.1} parent=0
    _
  %s10 = ssub.s32 1, %s8
  %s11 = scalar_select 0, %s10, %s8
  %v12 = vstv %s6
  %13 = vst [vmem:[#allocation2] sm:$0x1] %v12
  $region1: #{transformer_nli_forward.1} parent=0
    #allocation3 [shape = 'u8[16384]{0}', space=vmem, size = 0x4000, scoped, tag = 'input window, operand 2, single buffered']
    #allocation4 [shape = 's32[1]{0}', space=sflag, size = 0x4, scoped, tag = 'scoped memory for transformer_nli_forward.1']
    #allocation5 [shape = 'u8[172032]{0}', space=vmem, size = 0x2a000, scoped, tag = 'input window, operand 4, single buffered']
    #allocation6 [shape = 's32[1]{0}', space=sflag, size = 0x4, scoped, tag = 'scoped memory for transformer_nli_forward.1']
    %14 = vsyncpa [#allocation4], 0
    %15 = vsyncpa [#allocation6], 0
    // Predicated region
    $region2: #{transformer_nli_forward.1} parent=1 // pred_check
      _
    $region3: #{transformer_nli_forward.1} parent=1 // pred_check_branch
      %17 = sbr.rel (0) target = $region5
    $region4: #{transformer_nli_forward.1} parent=1 // pred_region
      _
    $region5: #{transformer_nli_forward.1} parent=1 // pred_fallthru
      _
    // Predicated region
    $region6: #{transformer_nli_forward.1} parent=1 // pred_check
      _
    $region7: #{transformer_nli_forward.1} parent=1 // pred_check_branch
      %19 = sbr.rel (0) target = $region9
    $region8: #{transformer_nli_forward.1} parent=1 // pred_region
      _
    $region9: #{transformer_nli_forward.1} parent=1 // pred_fallthru
      _
    // Predicated region
    $region10: #{transformer_nli_forward.1} parent=1 // pred_check
      _
    $region11: #{transformer_nli_forward.1} parent=1 // pred_check_branch
      %21 = sbr.rel (0) target = $region13
    $region12: #{transformer_nli_forward.1} parent=1 // pred_region
      %s23 = ssub.s32 512, 512
      %24 = vsyncadd [#allocation4], %s23
      %s25 = sshll.u32 [#allocation3], 4
      %s26 = int_to_ptr.vmem [resolvable:$true] %s25
      %31 = dma.hbm_to_vmem [thread:$0]  %s2, 512, %s26, [#allocation4], 128, 128, 8
    $region13: #{transformer_nli_forward.1} parent=1 // pred_fallthru
      _
    // Predicated region
    $region14: #{transformer_nli_forward.1} parent=1 // pred_check
      _
    $region15: #{transformer_nli_forward.1} parent=1 // pred_check_branch
      %33 = sbr.rel (0) target = $region17
    $region16: #{transformer_nli_forward.1} parent=1 // pred_region
      _
    $region17: #{transformer_nli_forward.1} parent=1 // pred_fallthru
      _
    // Predicated region
    $region18: #{transformer_nli_forward.1} parent=1 // pred_check
      _
    $region19: #{transformer_nli_forward.1} parent=1 // pred_check_branch
      %35 = sbr.rel (0) target = $region21
    $region20: #{transformer_nli_forward.1} parent=1 // pred_region
      %s37 = ssub.s32 5376, 5376
      %38 = vsyncadd [#allocation6], %s37
      %s39 = sshll.u32 [#allocation5], 4
      %s40 = int_to_ptr.vmem [resolvable:$true] %s39
      %45 = dma.hbm_to_vmem [thread:$0]  %s4, 5376, %s40, [#allocation6], 128, 128, 8
    $region21: #{transformer_nli_forward.1} parent=1 // pred_fallthru
      _
    // Predicated region
    $region22: #{transformer_nli_forward.1} parent=1 // pred_check
      _
    $region23: #{transformer_nli_forward.1} parent=1 // pred_check_branch
      %47 = sbr.rel (0) target = $region25
    $region24: #{transformer_nli_forward.1} parent=1 // pred_region
      _
    $region25: #{transformer_nli_forward.1} parent=1 // pred_fallthru
      _
    // Predicated region
    $region26: #{transformer_nli_forward.1} parent=1 // pred_check
      _
    $region27: #{transformer_nli_forward.1} parent=1 // pred_check_branch
      %49 = sbr.rel (0) target = $region29
    $region28: #{transformer_nli_forward.1} parent=1 // pred_region
      _
    $region29: #{transformer_nli_forward.1} parent=1 // pred_fallthru
      _
    // Predicated region
    $region30: #{transformer_nli_forward.1} parent=1 // pred_check
      _
    $region31: #{transformer_nli_forward.1} parent=1 // pred_check_branch
      %51 = sbr.rel (0) target = $region33
    $region32: #{transformer_nli_forward.1} parent=1 // pred_region
      %52 = dma.done [#allocation4], 512
    $region33: #{transformer_nli_forward.1} parent=1 // pred_fallthru
      _
    // Predicated region
    $region34: #{transformer_nli_forward.1} parent=1 // pred_check
      _
    $region35: #{transformer_nli_forward.1} parent=1 // pred_check_branch
      %54 = sbr.rel (0) target = $region37
    $region36: #{transformer_nli_forward.1} parent=1 // pred_region
      %55 = dma.done [#allocation6], 5376
    $region37: #{transformer_nli_forward.1} parent=1 // pred_fallthru
      _
    %v56 = vlaneseq
    %v57 = vand.u32 %v56, 127
    %v58 = vld [vmem:[%s0] sm:$0xff]
    %v59 = vld [vmem:[%s0 + $0x8] sm:$0xff]
    %60 = vset.pattern.permute.xlu0 0
    %61 = vperm.xlu0 %60, %v58
    %v62 = vpop.permute.xlu0 %61
    %63 = vset.pattern.permute.xlu0 0
    %64 = vperm.xlu0 %63, %v59
    %v65 = vpop.permute.xlu0 %64
    %vm66 = vcmp.eq.s32.totalorder %v57, %v62
    %vm67 = vcmp.eq.s32.totalorder %v57, %v65
    %v68 = vsel %vm66, 1, 0
    %v69 = vsel %vm67, 1, 0
    %v70 = vcvt.s32.f32 %v68
    %v71 = vcvt.s32.f32 %v69
    %v72 = vld [vmem:[#allocation3] sm:$0xff]
    %v73 = vld [vmem:[#allocation3 + $0x8] sm:$0xff]
    %v74 = vld [vmem:[#allocation3 + $0x10] sm:$0xff]
    %v75 = vld [vmem:[#allocation3 + $0x18] sm:$0xff]
    %vm76 = vcmask 261120
    %v78 = vsel %vm76, %v70, 0
    %v81 = vsel %vm76, %v71, 0
    %83 = vmatprep.subr.mxu0 0.0
    %84 = vmatpush1.msra.mxu0 %v72
    %85 = vmatprep.subr.mxu0 0.0
    %86 = vmatpush1.msra.mxu0 %v73
    %87 = vmatprep.subr.mxu0 0.0
    %88 = vmatpush1.msra.mxu0 %v74
    %89 = vmatprep.subr.mxu0 0.0
    %90 = vmatpush1.msra.mxu0 %v75
    %91 = vmatprep.subr.mxu0 0.0
    %92 = vmatpush1.msra.mxu0 0.0
    %93 = vmatprep.subr.mxu0 0.0
    %94 = vmatpush1.msra.mxu0 0.0
    %95 = vmatprep.subr.mxu0 0.0
    %96 = vmatpush1.msra.mxu0 0.0
    %97 = vmatprep.subr.mxu0 0.0
    %98 = vmatpush1.msra.mxu0 0.0
    %99 = vmatprep.subr.mxu0 0.0
    %100 = vmatpush1.msra.mxu0 0.0
    %101 = vmatprep.subr.mxu0 0.0
    %102 = vmatpush1.msra.mxu0 0.0
    %103 = vmatprep.subr.mxu0 0.0
    %104 = vmatpush1.msra.mxu0 0.0
    %105 = vmatprep.subr.mxu0 0.0
    %106 = vmatpush1.msra.mxu0 0.0
    %107 = vmatprep.subr.mxu0 0.0
    %108 = vmatpush1.msra.mxu0 0.0
    %109 = vmatprep.subr.mxu0 0.0
    %110 = vmatpush1.msra.mxu0 0.0
    %111 = vmatprep.subr.mxu0 0.0
    %112 = vmatpush1.msra.mxu0 0.0
    %113 = vmatprep.subr.mxu0 0.0
    %114 = vmatpush1.msra.mxu0 0.0
    %115 = vmatprep.subr.mxu0 0.0
    %116 = vmatpush1.msra.mxu0 0.0
    %117 = vmatprep.subr.mxu0 0.0
    %118 = vmatpush1.msra.mxu0 0.0
    %119 = vmatprep.subr.mxu0 0.0
    %120 = vmatpush1.msra.mxu0 0.0
    %121 = vmatprep.subr.mxu0 0.0
    %122 = vmatpush1.msra.mxu0 0.0
    %123 = vmatprep.subr.mxu0 0.0
    %124 = vmatpush1.msra.mxu0 0.0
    %125 = vmatprep.subr.mxu0 0.0
    %126 = vmatpush1.msra.mxu0 0.0
    %127 = vmatprep.subr.mxu0 0.0
    %128 = vmatpush1.msra.mxu0 0.0
    %129 = vmatprep.subr.mxu0 0.0
    %130 = vmatpush1.msra.mxu0 0.0
    %131 = vmatprep.subr.mxu0 0.0
    %132 = vmatpush1.msra.mxu0 0.0
    %133 = vmatprep.subr.mxu0 0.0
    %134 = vmatpush1.msra.mxu0 0.0
    %135 = vmatprep.subr.mxu0 0.0
    %136 = vmatpush1.msra.mxu0 0.0
    %137 = vmatprep.subr.mxu0 0.0
    %138 = vmatpush1.msra.mxu0 0.0
    %139 = vmatprep.subr.mxu0 0.0
    %140 = vmatpush1.msra.mxu0 0.0
    %141 = vmatprep.subr.mxu0 0.0
    %142 = vmatpush1.msra.mxu0 0.0
    %143 = vmatprep.subr.mxu0 0.0
    %144 = vmatpush1.msra.mxu0 0.0
    %145 = vmatprep.subr.mxu0 0.0
    %146 = vmatpush1.msra.mxu0 0.0
    %147 = vmatprep.mubr.f32.mxu0 0.0
    %148 = vmatmul.mubr.f32.gmra.mrb[0].mxu0 %v78
    %v149 = vpop.f32.mrb[0].mxu0
    %v150 = vadd.f32 0.0, %v149
    %v151 = vpop.f32.mrb[0].mxu0
    %152 = vmatprep.mubr.f32.mxu0 0.0
    %153 = vmatmul.mubr.f32.gmra.mrb[0].mxu0 %v81
    %v154 = vpop.f32.mrb[0].mxu0
    %v155 = vadd.f32 0.0, %v154
    %v156 = vpop.f32.mrb[0].mxu0
    %157 = vdwg.mxu0
    %v158 = vmul.f32 %v150, 5.656854
    %v159 = vmul.f32 %v155, 5.656854
    %v160 = vld [vmem:[%s3] sm:$0xff]
    %v161 = vadd.f32 %v158, %v160
    %v162 = vadd.f32 %v159, %v160
    %v163 = vlaneseq
    %v164 = vshrl.u32 %v163, 7
    %vm165 = vcmp.ge.s32.totalorder %v164, %v57
    %v166 = vsel %vm165, 0.0, -inf
    %v167 = vld [vmem:[%s1] sm:$0x1]
    %v168 = vld [vmem:[%s1 + $0x1] sm:$0x1]
    %vm169 = vcmp.ne.s32.totalorder %v167, 0
    %vm170 = vcmp.ne.s32.totalorder %v168, 0
    %v171 = vsel %vm169, 1, 0
    %v172 = vsel %vm170, 1, 0
    %v173 = vcvt.s32.f32 %v171
    %v174 = vcvt.s32.f32 %v172
    %v177 = vlaneseq
    %v178 = vshrl.u32 %v177, 7
    %v179 = vsub.s32 0, %v178
    %v180 = vrot.slane %v173, %v179
    %v181 = vlaneseq
    %v182 = vshrl.u32 %v181, 7
    %v183 = vsub.s32 0, %v182
    %v184 = vrot.slane %v174, %v183
    %v187 = vadd.f32 %v166, %v180
    %v188 = vadd.f32 %v166, %v184
    %vm189 = vcmp.ge.s32.totalorder %v57, 0
    %vm190 = vcmp.lt.s32.totalorder %v57, 8
    %vm191 = vmand %vm189, %vm190
    %v192 = vsel %vm191, 1.0, 0.0
    %vm193 = vcmp.ge.s32.totalorder %v57, 8
    %vm194 = vcmp.lt.s32.totalorder %v57, 16
    %vm195 = vmand %vm193, %vm194
    %v196 = vsel %vm195, 1.0, 0.0
    %vm197 = vcmp.ge.s32.totalorder %v57, 16
    %vm198 = vcmp.lt.s32.totalorder %v57, 24
    %vm199 = vmand %vm197, %vm198
    %v200 = vsel %vm199, 1.0, 0.0
    %vm201 = vcmp.ge.s32.totalorder %v57, 24
    %vm202 = vcmp.lt.s32.totalorder %v57, 32
    %vm203 = vmand %vm201, %vm202
    %v204 = vsel %vm203, 1.0, 0.0
    %v205 = vld [vmem:[#allocation5] sm:$0xff]
    %v206 = vld [vmem:[#allocation5 + $0x8] sm:$0xff]
    %v207 = vld [vmem:[#allocation5 + $0x10] sm:$0xff]
    %v208 = vld [vmem:[#allocation5 + $0x18] sm:$0xff]
    %v209 = vld [vmem:[#allocation5 + $0x20] sm:$0xff]
    %v210 = vld [vmem:[#allocation5 + $0x28] sm:$0xff]
    %v211 = vld [vmem:[#allocation5 + $0x30] sm:$0xff]
    %v212 = vld [vmem:[#allocation5 + $0x38] sm:$0xff]
    %v213 = vld [vmem:[#allocation5 + $0x40] sm:$0xff]
    %v214 = vld [vmem:[#allocation5 + $0x48] sm:$0xff]
    %v215 = vld [vmem:[#allocation5 + $0x50] sm:$0xff]
    %v216 = vld [vmem:[#allocation5 + $0x58] sm:$0xff]
    %v217 = vld [vmem:[#allocation5 + $0x60] sm:$0xff]
    %v218 = vld [vmem:[#allocation5 + $0x68] sm:$0xff]
    %v219 = vld [vmem:[#allocation5 + $0x70] sm:$0xff]
    %v220 = vld [vmem:[#allocation5 + $0x78] sm:$0xff]
    %v221 = vld [vmem:[#allocation5 + $0x80] sm:$0xff]
    %v222 = vld [vmem:[#allocation5 + $0x88] sm:$0xff]
    %v223 = vld [vmem:[#allocation5 + $0x90] sm:$0xff]
    %v224 = vld [vmem:[#allocation5 + $0x98] sm:$0xff]
    %v225 = vld [vmem:[#allocation5 + $0xa0] sm:$0xff]
    %v226 = vlaneseq
    %v227 = vshrl.u32 %v226, 7
    %v228 = vsub.s32 0, %v227
    %v229 = vrot.slane %v225, %v228
    %v231 = vsel %vm76, %v161, 0
    %v234 = vsel %vm76, %v162, 0
    %236 = vmatprep.subr.mxu0 0.0
    %237 = vmatpush1.msra.mxu0 %v205
    %238 = vmatprep.subr.mxu0 0.0
    %239 = vmatpush1.msra.mxu0 %v206
    %240 = vmatprep.subr.mxu0 0.0
    %241 = vmatpush1.msra.mxu0 %v207
    %242 = vmatprep.subr.mxu0 0.0
    %243 = vmatpush1.msra.mxu0 %v208
    %244 = vmatprep.subr.mxu0 0.0
    %245 = vmatpush1.msra.mxu0 0.0
    %246 = vmatprep.subr.mxu0 0.0
    %247 = vmatpush1.msra.mxu0 0.0
    %248 = vmatprep.subr.mxu0 0.0
    %249 = vmatpush1.msra.mxu0 0.0
    %250 = vmatprep.subr.mxu0 0.0
    %251 = vmatpush1.msra.mxu0 0.0
    %252 = vmatprep.subr.mxu0 0.0
    %253 = vmatpush1.msra.mxu0 0.0
    %254 = vmatprep.subr.mxu0 0.0
    %255 = vmatpush1.msra.mxu0 0.0
    %256 = vmatprep.subr.mxu0 0.0
    %257 = vmatpush1.msra.mxu0 0.0
    %258 = vmatprep.subr.mxu0 0.0
    %259 = vmatpush1.msra.mxu0 0.0
    %260 = vmatprep.subr.mxu0 0.0
    %261 = vmatpush1.msra.mxu0 0.0
    %262 = vmatprep.subr.mxu0 0.0
    %263 = vmatpush1.msra.mxu0 0.0
    %264 = vmatprep.subr.mxu0 0.0
    %265 = vmatpush1.msra.mxu0 0.0
    %266 = vmatprep.subr.mxu0 0.0
    %267 = vmatpush1.msra.mxu0 0.0
    %268 = vmatprep.subr.mxu0 0.0
    %269 = vmatpush1.msra.mxu0 0.0
    %270 = vmatprep.subr.mxu0 0.0
    %271 = vmatpush1.msra.mxu0 0.0
    %272 = vmatprep.subr.mxu0 0.0
    %273 = vmatpush1.msra.mxu0 0.0
    %274 = vmatprep.subr.mxu0 0.0
    %275 = vmatpush1.msra.mxu0 0.0
    %276 = vmatprep.subr.mxu0 0.0
    %277 = vmatpush1.msra.mxu0 0.0
    %278 = vmatprep.subr.mxu0 0.0
    %279 = vmatpush1.msra.mxu0 0.0
    %280 = vmatprep.subr.mxu0 0.0
    %281 = vmatpush1.msra.mxu0 0.0
    %282 = vmatprep.subr.mxu0 0.0
    %283 = vmatpush1.msra.mxu0 0.0
    %284 = vmatprep.subr.mxu0 0.0
    %285 = vmatpush1.msra.mxu0 0.0
    %286 = vmatprep.subr.mxu0 0.0
    %287 = vmatpush1.msra.mxu0 0.0
    %288 = vmatprep.subr.mxu0 0.0
    %289 = vmatpush1.msra.mxu0 0.0
    %290 = vmatprep.subr.mxu0 0.0
    %291 = vmatpush1.msra.mxu0 0.0
    %292 = vmatprep.subr.mxu0 0.0
    %293 = vmatpush1.msra.mxu0 0.0
    %294 = vmatprep.subr.mxu0 0.0
    %295 = vmatpush1.msra.mxu0 0.0
    %296 = vmatprep.subr.mxu0 0.0
    %297 = vmatpush1.msra.mxu0 0.0
    %298 = vmatprep.subr.mxu0 0.0
    %299 = vmatpush1.msra.mxu0 0.0
    %300 = vmatprep.mubr.f32.mxu0 0.0
    %301 = vmatmul.mubr.f32.gmra.mrb[0].mxu0 %v231
    %v302 = vpop.f32.mrb[0].mxu0
    %v303 = vadd.f32 %v229, %v302
    %v304 = vpop.f32.mrb[0].mxu0
    %305 = vmatprep.mubr.f32.mxu0 0.0
    %306 = vmatmul.mubr.f32.gmra.mrb[0].mxu0 %v234
    %v307 = vpop.f32.mrb[0].mxu0
    %v308 = vadd.f32 %v229, %v307
    %v309 = vpop.f32.mrb[0].mxu0
    %310 = vdwg.mxu0
    %v311 = vmul.f32 %v303, 0.35355338
    %v312 = vmul.f32 %v308, 0.35355338
    %v313 = vmul.f32 %v311, %v192
    %v314 = vmul.f32 %v312, %v192
    %316 = vrot.lane.b32.xlu0 %v303, 96
    %v317 = vpop.permute.xlu0 %316
    %v319 = vsel %vm76, %v313, 0
    %v321 = vsel %vm76, %v317, 0
    %323 = vmatprep.subr.mxu0 0.0
    %324 = vmatpush1.xpose.msra.mxu0 %v321
    %325 = vmatprep.subr.mxu0 0.0
    %326 = vmatpush1.xpose.msra.mxu0 0.0
    %327 = vmatprep.subr.mxu0 0.0
    %328 = vmatpush1.xpose.msra.mxu0 0.0
    %329 = vmatprep.subr.mxu0 0.0
    %330 = vmatpush1.xpose.msra.mxu0 0.0
    %331 = vmatprep.subr.mxu0 0.0
    %332 = vmatpush1.xpose.msra.mxu0 0.0
    %333 = vmatprep.subr.mxu0 0.0
    %334 = vmatpush1.xpose.msra.mxu0 0.0
    %335 = vmatprep.subr.mxu0 0.0
    %336 = vmatpush1.xpose.msra.mxu0 0.0
    %337 = vmatprep.subr.mxu0 0.0
    %338 = vmatpush1.xpose.msra.mxu0 0.0
    %339 = vmatprep.subr.mxu0 0.0
    %340 = vmatpush1.xpose.msra.mxu0 0.0
    %341 = vmatprep.subr.mxu0 0.0
    %342 = vmatpush1.xpose.msra.mxu0 0.0
    %343 = vmatprep.subr.mxu0 0.0
    %344 = vmatpush1.xpose.msra.mxu0 0.0
    %345 = vmatprep.subr.mxu0 0.0
    %346 = vmatpush1.xpose.msra.mxu0 0.0
    %347 = vmatprep.subr.mxu0 0.0
    %348 = vmatpush1.xpose.msra.mxu0 0.0
    %349 = vmatprep.subr.mxu0 0.0
    %350 = vmatpush1.xpose.msra.mxu0 0.0
    %351 = vmatprep.subr.mxu0 0.0
    %352 = vmatpush1.xpose.msra.mxu0 0.0
    %353 = vmatprep.subr.mxu0 0.0
    %354 = vmatpush1.xpose.msra.mxu0 0.0
    %355 = vmatprep.subr.mxu0 0.0
    %356 = vmatpush1.xpose.msra.mxu0 0.0
    %357 = vmatprep.subr.mxu0 0.0
    %358 = vmatpush1.xpose.msra.mxu0 0.0
    %359 = vmatprep.subr.mxu0 0.0
    %360 = vmatpush1.xpose.msra.mxu0 0.0
    %361 = vmatprep.subr.mxu0 0.0
    %362 = vmatpush1.xpose.msra.mxu0 0.0
    %363 = vmatprep.subr.mxu0 0.0
    %364 = vmatpush1.xpose.msra.mxu0 0.0
    %365 = vmatprep.subr.mxu0 0.0
    %366 = vmatpush1.xpose.msra.mxu0 0.0
    %367 = vmatprep.subr.mxu0 0.0
    %368 = vmatpush1.xpose.msra.mxu0 0.0
    %369 = vmatprep.subr.mxu0 0.0
    %370 = vmatpush1.xpose.msra.mxu0 0.0
    %371 = vmatprep.subr.mxu0 0.0
    %372 = vmatpush1.xpose.msra.mxu0 0.0
    %373 = vmatprep.subr.mxu0 0.0
    %374 = vmatpush1.xpose.msra.mxu0 0.0
    %375 = vmatprep.subr.mxu0 0.0
    %376 = vmatpush1.xpose.msra.mxu0 0.0
    %377 = vmatprep.subr.mxu0 0.0
    %378 = vmatpush1.xpose.msra.mxu0 0.0
    %379 = vmatprep.subr.mxu0 0.0
    %380 = vmatpush1.xpose.msra.mxu0 0.0
    %381 = vmatprep.subr.mxu0 0.0
    %382 = vmatpush1.xpose.msra.mxu0 0.0
    %383 = vmatprep.subr.mxu0 0.0
    %384 = vmatpush1.xpose.msra.mxu0 0.0
    %385 = vmatprep.subr.mxu0 0.0
    %386 = vmatpush1.xpose.msra.mxu0 0.0
    %387 = vmatprep.mubr.f32.mxu0 0.0
    %388 = vmatmul.mubr.f32.gmra.mrb[0].mxu0 %v319
    %v389 = vpop.f32.mrb[0].mxu0
    %v390 = vadd.f32 %v187, %v389
    %v391 = vpop.f32.mrb[0].mxu0
    %392 = vdwg.mxu0
    %394 = vrot.lane.b32.xlu0 %v308, 96
    %v395 = vpop.permute.xlu0 %394
    %v397 = vsel %vm76, %v314, 0
    %v399 = vsel %vm76, %v395, 0
    %401 = vmatprep.subr.mxu0 0.0
    %402 = vmatpush1.xpose.msra.mxu0 %v399
    %403 = vmatprep.subr.mxu0 0.0
    %404 = vmatpush1.xpose.msra.mxu0 0.0
    %405 = vmatprep.subr.mxu0 0.0
    %406 = vmatpush1.xpose.msra.mxu0 0.0
    %407 = vmatprep.subr.mxu0 0.0
    %408 = vmatpush1.xpose.msra.mxu0 0.0
    %409 = vmatprep.subr.mxu0 0.0
    %410 = vmatpush1.xpose.msra.mxu0 0.0
    %411 = vmatprep.subr.mxu0 0.0
    %412 = vmatpush1.xpose.msra.mxu0 0.0
    %413 = vmatprep.subr.mxu0 0.0
    %414 = vmatpush1.xpose.msra.mxu0 0.0
    %415 = vmatprep.subr.mxu0 0.0
    %416 = vmatpush1.xpose.msra.mxu0 0.0
    %417 = vmatprep.subr.mxu0 0.0
    %418 = vmatpush1.xpose.msra.mxu0 0.0
    %419 = vmatprep.subr.mxu0 0.0
    %420 = vmatpush1.xpose.msra.mxu0 0.0
    %421 = vmatprep.subr.mxu0 0.0
    %422 = vmatpush1.xpose.msra.mxu0 0.0
    %423 = vmatprep.subr.mxu0 0.0
    %424 = vmatpush1.xpose.msra.mxu0 0.0
    %425 = vmatprep.subr.mxu0 0.0
    %426 = vmatpush1.xpose.msra.mxu0 0.0
    %427 = vmatprep.subr.mxu0 0.0
    %428 = vmatpush1.xpose.msra.mxu0 0.0
    %429 = vmatprep.subr.mxu0 0.0
    %430 = vmatpush1.xpose.msra.mxu0 0.0
    %431 = vmatprep.subr.mxu0 0.0
    %432 = vmatpush1.xpose.msra.mxu0 0.0
    %433 = vmatprep.subr.mxu0 0.0
    %434 = vmatpush1.xpose.msra.mxu0 0.0
    %435 = vmatprep.subr.mxu0 0.0
    %436 = vmatpush1.xpose.msra.mxu0 0.0
    %437 = vmatprep.subr.mxu0 0.0
    %438 = vmatpush1.xpose.msra.mxu0 0.0
    %439 = vmatprep.subr.mxu0 0.0
    %440 = vmatpush1.xpose.msra.mxu0 0.0
    %441 = vmatprep.subr.mxu0 0.0
    %442 = vmatpush1.xpose.msra.mxu0 0.0
    %443 = vmatprep.subr.mxu0 0.0
    %444 = vmatpush1.xpose.msra.mxu0 0.0
    %445 = vmatprep.subr.mxu0 0.0
    %446 = vmatpush1.xpose.msra.mxu0 0.0
    %447 = vmatprep.subr.mxu0 0.0
    %448 = vmatpush1.xpose.msra.mxu0 0.0
    %449 = vmatprep.subr.mxu0 0.0
    %450 = vmatpush1.xpose.msra.mxu0 0.0
    %451 = vmatprep.subr.mxu0 0.0
    %452 = vmatpush1.xpose.msra.mxu0 0.0
    %453 = vmatprep.subr.mxu0 0.0
    %454 = vmatpush1.xpose.msra.mxu0 0.0
    %455 = vmatprep.subr.mxu0 0.0
    %456 = vmatpush1.xpose.msra.mxu0 0.0
    %457 = vmatprep.subr.mxu0 0.0
    %458 = vmatpush1.xpose.msra.mxu0 0.0
    %459 = vmatprep.subr.mxu0 0.0
    %460 = vmatpush1.xpose.msra.mxu0 0.0
    %461 = vmatprep.subr.mxu0 0.0
    %462 = vmatpush1.xpose.msra.mxu0 0.0
    %463 = vmatprep.subr.mxu0 0.0
    %464 = vmatpush1.xpose.msra.mxu0 0.0
    %465 = vmatprep.mubr.f32.mxu0 0.0
    %466 = vmatmul.mubr.f32.gmra.mrb[0].mxu0 %v397
    %v467 = vpop.f32.mrb[0].mxu0
    %v468 = vadd.f32 %v188, %v467
    %v469 = vpop.f32.mrb[0].mxu0
    %470 = vdwg.mxu0
    %vm471 = vcmask 64512
    %v472 = vsel %vm471, %v390, -inf
    %473 = vmax.xlane.f32.xlu0 %v472
    %v474 = vpop.xlane.xlu0 %473
    %v475 = vsel %vm471, %v468, -inf
    %476 = vmax.xlane.f32.xlu0 %v475
    %v477 = vpop.xlane.xlu0 %476
    %v478 = vsub.f32 %v390, %v474
    %v479 = vsub.f32 %v468, %v477
    %v480 = vmul.f32 %v478, 1.442695
    %v481 = vpow.pop %v480
    %v482 = vmul.f32 %v479, 1.442695
    %v483 = vpow.pop %v482
    %v484 = vsel %vm471, %v481, 0.0
    %485 = vadd.xlane.f32.xlu0 %v484
    %v486 = vpop.xlane.xlu0 %485
    %v487 = vsel %vm471, %v483, 0.0
    %488 = vadd.xlane.f32.xlu0 %v487
    %v489 = vpop.xlane.xlu0 %488
    %v490 = vrcp.pop %v486
    %v491 = vmul.f32 %v481, %v490
    %v492 = vrcp.pop %v489
    %v493 = vmul.f32 %v483, %v492
    %495 = vrot.lane.b32.xlu0 %v192, 64
    %v496 = vpop.permute.xlu0 %495
    %v498 = vmul.f32 %v303, %v496
    %v499 = vmul.f32 %v308, %v496
    %v500 = vmul.f32 %v311, %v196
    %v501 = vmul.f32 %v312, %v196
    %v503 = vsel %vm76, %v500, 0
    %505 = vmatprep.subr.mxu0 0.0
    %506 = vmatpush1.xpose.msra.mxu0 %v321
    %507 = vmatprep.subr.mxu0 0.0
    %508 = vmatpush1.xpose.msra.mxu0 0.0
    %509 = vmatprep.subr.mxu0 0.0
    %510 = vmatpush1.xpose.msra.mxu0 0.0
    %511 = vmatprep.subr.mxu0 0.0
    %512 = vmatpush1.xpose.msra.mxu0 0.0
    %513 = vmatprep.subr.mxu0 0.0
    %514 = vmatpush1.xpose.msra.mxu0 0.0
    %515 = vmatprep.subr.mxu0 0.0
    %516 = vmatpush1.xpose.msra.mxu0 0.0
    %517 = vmatprep.subr.mxu0 0.0
    %518 = vmatpush1.xpose.msra.mxu0 0.0
    %519 = vmatprep.subr.mxu0 0.0
    %520 = vmatpush1.xpose.msra.mxu0 0.0
    %521 = vmatprep.subr.mxu0 0.0
    %522 = vmatpush1.xpose.msra.mxu0 0.0
    %523 = vmatprep.subr.mxu0 0.0
    %524 = vmatpush1.xpose.msra.mxu0 0.0
    %525 = vmatprep.subr.mxu0 0.0
    %526 = vmatpush1.xpose.msra.mxu0 0.0
    %527 = vmatprep.subr.mxu0 0.0
    %528 = vmatpush1.xpose.msra.mxu0 0.0
    %529 = vmatprep.subr.mxu0 0.0
    %530 = vmatpush1.xpose.msra.mxu0 0.0
    %531 = vmatprep.subr.mxu0 0.0
    %532 = vmatpush1.xpose.msra.mxu0 0.0
    %533 = vmatprep.subr.mxu0 0.0
    %534 = vmatpush1.xpose.msra.mxu0 0.0
    %535 = vmatprep.subr.mxu0 0.0
    %536 = vmatpush1.xpose.msra.mxu0 0.0
    %537 = vmatprep.subr.mxu0 0.0
    %538 = vmatpush1.xpose.msra.mxu0 0.0
    %539 = vmatprep.subr.mxu0 0.0
    %540 = vmatpush1.xpose.msra.mxu0 0.0
    %541 = vmatprep.subr.mxu0 0.0
    %542 = vmatpush1.xpose.msra.mxu0 0.0
    %543 = vmatprep.subr.mxu0 0.0
    %544 = vmatpush1.xpose.msra.mxu0 0.0
    %545 = vmatprep.subr.mxu0 0.0
    %546 = vmatpush1.xpose.msra.mxu0 0.0
    %547 = vmatprep.subr.mxu0 0.0
    %548 = vmatpush1.xpose.msra.mxu0 0.0
    %549 = vmatprep.subr.mxu0 0.0
    %550 = vmatpush1.xpose.msra.mxu0 0.0
    %551 = vmatprep.subr.mxu0 0.0
    %552 = vmatpush1.xpose.msra.mxu0 0.0
    %553 = vmatprep.subr.mxu0 0.0
    %554 = vmatpush1.xpose.msra.mxu0 0.0
    %555 = vmatprep.subr.mxu0 0.0
    %556 = vmatpush1.xpose.msra.mxu0 0.0
    %557 = vmatprep.subr.mxu0 0.0
    %558 = vmatpush1.xpose.msra.mxu0 0.0
    %559 = vmatprep.subr.mxu0 0.0
    %560 = vmatpush1.xpose.msra.mxu0 0.0
    %561 = vmatprep.subr.mxu0 0.0
    %562 = vmatpush1.xpose.msra.mxu0 0.0
    %563 = vmatprep.subr.mxu0 0.0
    %564 = vmatpush1.xpose.msra.mxu0 0.0
    %565 = vmatprep.subr.mxu0 0.0
    %566 = vmatpush1.xpose.msra.mxu0 0.0
    %567 = vmatprep.subr.mxu0 0.0
    %568 = vmatpush1.xpose.msra.mxu0 0.0
    %569 = vmatprep.mubr.f32.mxu0 0.0
    %570 = vmatmul.mubr.f32.gmra.mrb[0].mxu0 %v503
    %v571 = vpop.f32.mrb[0].mxu0
    %v572 = vadd.f32 %v187, %v571
    %v573 = vpop.f32.mrb[0].mxu0
    %574 = vdwg.mxu0
    %v576 = vsel %vm76, %v501, 0
    %578 = vmatprep.subr.mxu0 0.0
    %579 = vmatpush1.xpose.msra.mxu0 %v399
    %580 = vmatprep.subr.mxu0 0.0
    %581 = vmatpush1.xpose.msra.mxu0 0.0
    %582 = vmatprep.subr.mxu0 0.0
    %583 = vmatpush1.xpose.msra.mxu0 0.0
    %584 = vmatprep.subr.mxu0 0.0
    %585 = vmatpush1.xpose.msra.mxu0 0.0
    %586 = vmatprep.subr.mxu0 0.0
    %587 = vmatpush1.xpose.msra.mxu0 0.0
    %588 = vmatprep.subr.mxu0 0.0
    %589 = vmatpush1.xpose.msra.mxu0 0.0
    %590 = vmatprep.subr.mxu0 0.0
    %591 = vmatpush1.xpose.msra.mxu0 0.0
    %592 = vmatprep.subr.mxu0 0.0
    %593 = vmatpush1.xpose.msra.mxu0 0.0
    %594 = vmatprep.subr.mxu0 0.0
    %595 = vmatpush1.xpose.msra.mxu0 0.0
    %596 = vmatprep.subr.mxu0 0.0
    %597 = vmatpush1.xpose.msra.mxu0 0.0
    %598 = vmatprep.subr.mxu0 0.0
    %599 = vmatpush1.xpose.msra.mxu0 0.0
    %600 = vmatprep.subr.mxu0 0.0
    %601 = vmatpush1.xpose.msra.mxu0 0.0
    %602 = vmatprep.subr.mxu0 0.0
    %603 = vmatpush1.xpose.msra.mxu0 0.0
    %604 = vmatprep.subr.mxu0 0.0
    %605 = vmatpush1.xpose.msra.mxu0 0.0
    %606 = vmatprep.subr.mxu0 0.0
    %607 = vmatpush1.xpose.msra.mxu0 0.0
    %608 = vmatprep.subr.mxu0 0.0
    %609 = vmatpush1.xpose.msra.mxu0 0.0
    %610 = vmatprep.subr.mxu0 0.0
    %611 = vmatpush1.xpose.msra.mxu0 0.0
    %612 = vmatprep.subr.mxu0 0.0
    %613 = vmatpush1.xpose.msra.mxu0 0.0
    %614 = vmatprep.subr.mxu0 0.0
    %615 = vmatpush1.xpose.msra.mxu0 0.0
    %616 = vmatprep.subr.mxu0 0.0
    %617 = vmatpush1.xpose.msra.mxu0 0.0
    %618 = vmatprep.subr.mxu0 0.0
    %619 = vmatpush1.xpose.msra.mxu0 0.0
    %620 = vmatprep.subr.mxu0 0.0
    %621 = vmatpush1.xpose.msra.mxu0 0.0
    %622 = vmatprep.subr.mxu0 0.0
    %623 = vmatpush1.xpose.msra.mxu0 0.0
    %624 = vmatprep.subr.mxu0 0.0
    %625 = vmatpush1.xpose.msra.mxu0 0.0
    %626 = vmatprep.subr.mxu0 0.0
    %627 = vmatpush1.xpose.msra.mxu0 0.0
    %628 = vmatprep.subr.mxu0 0.0
    %629 = vmatpush1.xpose.msra.mxu0 0.0
    %630 = vmatprep.subr.mxu0 0.0
    %631 = vmatpush1.xpose.msra.mxu0 0.0
    %632 = vmatprep.subr.mxu0 0.0
    %633 = vmatpush1.xpose.msra.mxu0 0.0
    %634 = vmatprep.subr.mxu0 0.0
    %635 = vmatpush1.xpose.msra.mxu0 0.0
    %636 = vmatprep.subr.mxu0 0.0
    %637 = vmatpush1.xpose.msra.mxu0 0.0
    %638 = vmatprep.subr.mxu0 0.0
    %639 = vmatpush1.xpose.msra.mxu0 0.0
    %640 = vmatprep.subr.mxu0 0.0
    %641 = vmatpush1.xpose.msra.mxu0 0.0
    %642 = vmatprep.mubr.f32.mxu0 0.0
    %643 = vmatmul.mubr.f32.gmra.mrb[0].mxu0 %v576
    %v644 = vpop.f32.mrb[0].mxu0
    %v645 = vadd.f32 %v188, %v644
    %v646 = vpop.f32.mrb[0].mxu0
    %647 = vdwg.mxu0
    %v648 = vsel %vm471, %v572, -inf
    %649 = vmax.xlane.f32.xlu0 %v648
    %v650 = vpop.xlane.xlu0 %649
    %v651 = vsel %vm471, %v645, -inf
    %652 = vmax.xlane.f32.xlu0 %v651
    %v653 = vpop.xlane.xlu0 %652
    %v654 = vsub.f32 %v572, %v650
    %v655 = vsub.f32 %v645, %v653
    %v656 = vmul.f32 %v654, 1.442695
    %v657 = vpow.pop %v656
    %v658 = vmul.f32 %v655, 1.442695
    %v659 = vpow.pop %v658
    %v660 = vsel %vm471, %v657, 0.0
    %661 = vadd.xlane.f32.xlu0 %v660
    %v662 = vpop.xlane.xlu0 %661
    %v663 = vsel %vm471, %v659, 0.0
    %664 = vadd.xlane.f32.xlu0 %v663
    %v665 = vpop.xlane.xlu0 %664
    %v666 = vrcp.pop %v662
    %v667 = vmul.f32 %v657, %v666
    %v668 = vrcp.pop %v665
    %v669 = vmul.f32 %v659, %v668
    %671 = vrot.lane.b32.xlu0 %v196, 64
    %v672 = vpop.permute.xlu0 %671
    %v674 = vmul.f32 %v303, %v672
    %v675 = vmul.f32 %v308, %v672
    %677 = vrot.lane.b32.xlu0 %v674, 64
    %v678 = vpop.permute.xlu0 %677
    %v681 = vsel %vm471, %v667, 0
    %683 = vmatprep.subr.mxu0 0.0
    %684 = vmatpush1.msra.mxu0 %v678
    %685 = vmatprep.subr.mxu0 0.0
    %686 = vmatpush1.msra.mxu0 0.0
    %687 = vmatprep.subr.mxu0 0.0
    %688 = vmatpush1.msra.mxu0 0.0
    %689 = vmatprep.subr.mxu0 0.0
    %690 = vmatpush1.msra.mxu0 0.0
    %691 = vmatprep.subr.mxu0 0.0
    %692 = vmatpush1.msra.mxu0 0.0
    %693 = vmatprep.subr.mxu0 0.0
    %694 = vmatpush1.msra.mxu0 0.0
    %695 = vmatprep.subr.mxu0 0.0
    %696 = vmatpush1.msra.mxu0 0.0
    %697 = vmatprep.subr.mxu0 0.0
    %698 = vmatpush1.msra.mxu0 0.0
    %699 = vmatprep.subr.mxu0 0.0
    %700 = vmatpush1.msra.mxu0 0.0
    %701 = vmatprep.subr.mxu0 0.0
    %702 = vmatpush1.msra.mxu0 0.0
    %703 = vmatprep.subr.mxu0 0.0
    %704 = vmatpush1.msra.mxu0 0.0
    %705 = vmatprep.subr.mxu0 0.0
    %706 = vmatpush1.msra.mxu0 0.0
    %707 = vmatprep.subr.mxu0 0.0
    %708 = vmatpush1.msra.mxu0 0.0
    %709 = vmatprep.subr.mxu0 0.0
    %710 = vmatpush1.msra.mxu0 0.0
    %711 = vmatprep.subr.mxu0 0.0
    %712 = vmatpush1.msra.mxu0 0.0
    %713 = vmatprep.subr.mxu0 0.0
    %714 = vmatpush1.msra.mxu0 0.0
    %715 = vmatprep.subr.mxu0 0.0
    %716 = vmatpush1.msra.mxu0 0.0
    %717 = vmatprep.subr.mxu0 0.0
    %718 = vmatpush1.msra.mxu0 0.0
    %719 = vmatprep.subr.mxu0 0.0
    %720 = vmatpush1.msra.mxu0 0.0
    %721 = vmatprep.subr.mxu0 0.0
    %722 = vmatpush1.msra.mxu0 0.0
    %723 = vmatprep.subr.mxu0 0.0
    %724 = vmatpush1.msra.mxu0 0.0
    %725 = vmatprep.subr.mxu0 0.0
    %726 = vmatpush1.msra.mxu0 0.0
    %727 = vmatprep.subr.mxu0 0.0
    %728 = vmatpush1.msra.mxu0 0.0
    %729 = vmatprep.subr.mxu0 0.0
    %730 = vmatpush1.msra.mxu0 0.0
    %731 = vmatprep.subr.mxu0 0.0
    %732 = vmatpush1.msra.mxu0 0.0
    %733 = vmatprep.subr.mxu0 0.0
    %734 = vmatpush1.msra.mxu0 0.0
    %735 = vmatprep.subr.mxu0 0.0
    %736 = vmatpush1.msra.mxu0 0.0
    %737 = vmatprep.subr.mxu0 0.0
    %738 = vmatpush1.msra.mxu0 0.0
    %739 = vmatprep.subr.mxu0 0.0
    %740 = vmatpush1.msra.mxu0 0.0
    %741 = vmatprep.subr.mxu0 0.0
    %742 = vmatpush1.msra.mxu0 0.0
    %743 = vmatprep.subr.mxu0 0.0
    %744 = vmatpush1.msra.mxu0 0.0
    %745 = vmatprep.subr.mxu0 0.0
    %746 = vmatpush1.msra.mxu0 0.0
    %747 = vmatprep.mubr.f32.mxu0 0.0
    %748 = vmatmul.mubr.f32.gmra.mrb[0].mxu0 %v681
    %v749 = vpop.f32.mrb[0].mxu0
    %v750 = vadd.f32 0.0, %v749
    %v751 = vpop.f32.mrb[0].mxu0
    %752 = vdwg.mxu0
    %754 = vrot.lane.b32.xlu0 %v675, 64
    %v755 = vpop.permute.xlu0 %754
    %v758 = vsel %vm471, %v669, 0
    %760 = vmatprep.subr.mxu0 0.0
    %761 = vmatpush1.msra.mxu0 %v755
    %762 = vmatprep.subr.mxu0 0.0
    %763 = vmatpush1.msra.mxu0 0.0
    %764 = vmatprep.subr.mxu0 0.0
    %765 = vmatpush1.msra.mxu0 0.0
    %766 = vmatprep.subr.mxu0 0.0
    %767 = vmatpush1.msra.mxu0 0.0
    %768 = vmatprep.subr.mxu0 0.0
    %769 = vmatpush1.msra.mxu0 0.0
    %770 = vmatprep.subr.mxu0 0.0
    %771 = vmatpush1.msra.mxu0 0.0
    %772 = vmatprep.subr.mxu0 0.0
    %773 = vmatpush1.msra.mxu0 0.0
    %774 = vmatprep.subr.mxu0 0.0
    %775 = vmatpush1.msra.mxu0 0.0
    %776 = vmatprep.subr.mxu0 0.0
    %777 = vmatpush1.msra.mxu0 0.0
    %778 = vmatprep.subr.mxu0 0.0
    %779 = vmatpush1.msra.mxu0 0.0
    %780 = vmatprep.subr.mxu0 0.0
    %781 = vmatpush1.msra.mxu0 0.0
    %782 = vmatprep.subr.mxu0 0.0
    %783 = vmatpush1.msra.mxu0 0.0
    %784 = vmatprep.subr.mxu0 0.0
    %785 = vmatpush1.msra.mxu0 0.0
    %786 = vmatprep.subr.mxu0 0.0
    %787 = vmatpush1.msra.mxu0 0.0
    %788 = vmatprep.subr.mxu0 0.0
    %789 = vmatpush1.msra.mxu0 0.0
    %790 = vmatprep.subr.mxu0 0.0
    %791 = vmatpush1.msra.mxu0 0.0
    %792 = vmatprep.subr.mxu0 0.0
    %793 = vmatpush1.msra.mxu0 0.0
    %794 = vmatprep.subr.mxu0 0.0
    %795 = vmatpush1.msra.mxu0 0.0
    %796 = vmatprep.subr.mxu0 0.0
    %797 = vmatpush1.msra.mxu0 0.0
    %798 = vmatprep.subr.mxu0 0.0
    %799 = vmatpush1.msra.mxu0 0.0
    %800 = vmatprep.subr.mxu0 0.0
    %801 = vmatpush1.msra.mxu0 0.0
    %802 = vmatprep.subr.mxu0 0.0
    %803 = vmatpush1.msra.mxu0 0.0
    %804 = vmatprep.subr.mxu0 0.0
    %805 = vmatpush1.msra.mxu0 0.0
    %806 = vmatprep.subr.mxu0 0.0
    %807 = vmatpush1.msra.mxu0 0.0
    %808 = vmatprep.subr.mxu0 0.0
    %809 = vmatpush1.msra.mxu0 0.0
    %810 = vmatprep.subr.mxu0 0.0
    %811 = vmatpush1.msra.mxu0 0.0
    %812 = vmatprep.subr.mxu0 0.0
    %813 = vmatpush1.msra.mxu0 0.0
    %814 = vmatprep.subr.mxu0 0.0
    %815 = vmatpush1.msra.mxu0 0.0
    %816 = vmatprep.subr.mxu0 0.0
    %817 = vmatpush1.msra.mxu0 0.0
    %818 = vmatprep.subr.mxu0 0.0
    %819 = vmatpush1.msra.mxu0 0.0
    %820 = vmatprep.subr.mxu0 0.0
    %821 = vmatpush1.msra.mxu0 0.0
    %822 = vmatprep.subr.mxu0 0.0
    %823 = vmatpush1.msra.mxu0 0.0
    %824 = vmatprep.mubr.f32.mxu0 0.0
    %825 = vmatmul.mubr.f32.gmra.mrb[0].mxu0 %v758
    %v826 = vpop.f32.mrb[0].mxu0
    %v827 = vadd.f32 0.0, %v826
    %v828 = vpop.f32.mrb[0].mxu0
    %829 = vdwg.mxu0
    %831 = vrot.lane.b32.xlu0 %v498, 64
    %v832 = vpop.permute.xlu0 %831
    %v835 = vsel %vm471, %v491, 0
    %837 = vmatprep.subr.mxu0 0.0
    %838 = vmatpush1.msra.mxu0 %v832
    %839 = vmatprep.subr.mxu0 0.0
    %840 = vmatpush1.msra.mxu0 0.0
    %841 = vmatprep.subr.mxu0 0.0
    %842 = vmatpush1.msra.mxu0 0.0
    %843 = vmatprep.subr.mxu0 0.0
    %844 = vmatpush1.msra.mxu0 0.0
    %845 = vmatprep.subr.mxu0 0.0
    %846 = vmatpush1.msra.mxu0 0.0
    %847 = vmatprep.subr.mxu0 0.0
    %848 = vmatpush1.msra.mxu0 0.0
    %849 = vmatprep.subr.mxu0 0.0
    %850 = vmatpush1.msra.mxu0 0.0
    %851 = vmatprep.subr.mxu0 0.0
    %852 = vmatpush1.msra.mxu0 0.0
    %853 = vmatprep.subr.mxu0 0.0
    %854 = vmatpush1.msra.mxu0 0.0
    %855 = vmatprep.subr.mxu0 0.0
    %856 = vmatpush1.msra.mxu0 0.0
    %857 = vmatprep.subr.mxu0 0.0
    %858 = vmatpush1.msra.mxu0 0.0
    %859 = vmatprep.subr.mxu0 0.0
    %860 = vmatpush1.msra.mxu0 0.0
    %861 = vmatprep.subr.mxu0 0.0
    %862 = vmatpush1.msra.mxu0 0.0
    %863 = vmatprep.subr.mxu0 0.0
    %864 = vmatpush1.msra.mxu0 0.0
    %865 = vmatprep.subr.mxu0 0.0
    %866 = vmatpush1.msra.mxu0 0.0
    %867 = vmatprep.subr.mxu0 0.0
    %868 = vmatpush1.msra.mxu0 0.0
    %869 = vmatprep.subr.mxu0 0.0
    %870 = vmatpush1.msra.mxu0 0.0
    %871 = vmatprep.subr.mxu0 0.0
    %872 = vmatpush1.msra.mxu0 0.0
    %873 = vmatprep.subr.mxu0 0.0
    %874 = vmatpush1.msra.mxu0 0.0
    %875 = vmatprep.subr.mxu0 0.0
    %876 = vmatpush1.msra.mxu0 0.0
    %877 = vmatprep.subr.mxu0 0.0
    %878 = vmatpush1.msra.mxu0 0.0
    %879 = vmatprep.subr.mxu0 0.0
    %880 = vmatpush1.msra.mxu0 0.0
    %881 = vmatprep.subr.mxu0 0.0
    %882 = vmatpush1.msra.mxu0 0.0
    %883 = vmatprep.subr.mxu0 0.0
    %884 = vmatpush1.msra.mxu0 0.0
    %885 = vmatprep.subr.mxu0 0.0
    %886 = vmatpush1.msra.mxu0 0.0
    %887 = vmatprep.subr.mxu0 0.0
    %888 = vmatpush1.msra.mxu0 0.0
    %889 = vmatprep.subr.mxu0 0.0
    %890 = vmatpush1.msra.mxu0 0.0
    %891 = vmatprep.subr.mxu0 0.0
    %892 = vmatpush1.msra.mxu0 0.0
    %893 = vmatprep.subr.mxu0 0.0
    %894 = vmatpush1.msra.mxu0 0.0
    %895 = vmatprep.subr.mxu0 0.0
    %896 = vmatpush1.msra.mxu0 0.0
    %897 = vmatprep.subr.mxu0 0.0
    %898 = vmatpush1.msra.mxu0 0.0
    %899 = vmatprep.subr.mxu0 0.0
    %900 = vmatpush1.msra.mxu0 0.0
    %901 = vmatprep.mubr.f32.mxu0 0.0
    %902 = vmatmul.mubr.f32.gmra.mrb[0].mxu0 %v835
    %v903 = vpop.f32.mrb[0].mxu0
    %v904 = vadd.f32 %v750, %v903
    %v905 = vpop.f32.mrb[0].mxu0
    %906 = vdwg.mxu0
    %908 = vrot.lane.b32.xlu0 %v499, 64
    %v909 = vpop.permute.xlu0 %908
    %v912 = vsel %vm471, %v493, 0
    %914 = vmatprep.subr.mxu0 0.0
    %915 = vmatpush1.msra.mxu0 %v909
    %916 = vmatprep.subr.mxu0 0.0
    %917 = vmatpush1.msra.mxu0 0.0
    %918 = vmatprep.subr.mxu0 0.0
    %919 = vmatpush1.msra.mxu0 0.0
    %920 = vmatprep.subr.mxu0 0.0
    %921 = vmatpush1.msra.mxu0 0.0
    %922 = vmatprep.subr.mxu0 0.0
    %923 = vmatpush1.msra.mxu0 0.0
    %924 = vmatprep.subr.mxu0 0.0
    %925 = vmatpush1.msra.mxu0 0.0
    %926 = vmatprep.subr.mxu0 0.0
    %927 = vmatpush1.msra.mxu0 0.0
    %928 = vmatprep.subr.mxu0 0.0
    %929 = vmatpush1.msra.mxu0 0.0
    %930 = vmatprep.subr.mxu0 0.0
    %931 = vmatpush1.msra.mxu0 0.0
    %932 = vmatprep.subr.mxu0 0.0
    %933 = vmatpush1.msra.mxu0 0.0
    %934 = vmatprep.subr.mxu0 0.0
    %935 = vmatpush1.msra.mxu0 0.0
    %936 = vmatprep.subr.mxu0 0.0
    %937 = vmatpush1.msra.mxu0 0.0
    %938 = vmatprep.subr.mxu0 0.0
    %939 = vmatpush1.msra.mxu0 0.0
    %940 = vmatprep.subr.mxu0 0.0
    %941 = vmatpush1.msra.mxu0 0.0
    %942 = vmatprep.subr.mxu0 0.0
    %943 = vmatpush1.msra.mxu0 0.0
    %944 = vmatprep.subr.mxu0 0.0
    %945 = vmatpush1.msra.mxu0 0.0
    %946 = vmatprep.subr.mxu0 0.0
    %947 = vmatpush1.msra.mxu0 0.0
    %948 = vmatprep.subr.mxu0 0.0
    %949 = vmatpush1.msra.mxu0 0.0
    %950 = vmatprep.subr.mxu0 0.0
    %951 = vmatpush1.msra.mxu0 0.0
    %952 = vmatprep.subr.mxu0 0.0
    %953 = vmatpush1.msra.mxu0 0.0
    %954 = vmatprep.subr.mxu0 0.0
    %955 = vmatpush1.msra.mxu0 0.0
    %956 = vmatprep.subr.mxu0 0.0
    %957 = vmatpush1.msra.mxu0 0.0
    %958 = vmatprep.subr.mxu0 0.0
    %959 = vmatpush1.msra.mxu0 0.0
    %960 = vmatprep.subr.mxu0 0.0
    %961 = vmatpush1.msra.mxu0 0.0
    %962 = vmatprep.subr.mxu0 0.0
    %963 = vmatpush1.msra.mxu0 0.0
    %964 = vmatprep.subr.mxu0 0.0
    %965 = vmatpush1.msra.mxu0 0.0
    %966 = vmatprep.subr.mxu0 0.0
    %967 = vmatpush1.msra.mxu0 0.0
    %968 = vmatprep.subr.mxu0 0.0
    %969 = vmatpush1.msra.mxu0 0.0
    %970 = vmatprep.subr.mxu0 0.0
    %971 = vmatpush1.msra.mxu0 0.0
    %972 = vmatprep.subr.mxu0 0.0
    %973 = vmatpush1.msra.mxu0 0.0
    %974 = vmatprep.subr.mxu0 0.0
    %975 = vmatpush1.msra.mxu0 0.0
    %976 = vmatprep.subr.mxu0 0.0
    %977 = vmatpush1.msra.mxu0 0.0
    %978 = vmatprep.mubr.f32.mxu0 0.0
    %979 = vmatmul.mubr.f32.gmra.mrb[0].mxu0 %v912
    %v980 = vpop.f32.mrb[0].mxu0
    %v981 = vadd.f32 %v827, %v980
    %v982 = vpop.f32.mrb[0].mxu0
    %983 = vdwg.mxu0
    %v984 = vmul.f32 %v311, %v200
    %v985 = vmul.f32 %v312, %v200
    %v987 = vsel %vm76, %v984, 0
    %989 = vmatprep.subr.mxu0 0.0
    %990 = vmatpush1.xpose.msra.mxu0 %v321
    %991 = vmatprep.subr.mxu0 0.0
    %992 = vmatpush1.xpose.msra.mxu0 0.0
    %993 = vmatprep.subr.mxu0 0.0
    %994 = vmatpush1.xpose.msra.mxu0 0.0
    %995 = vmatprep.subr.mxu0 0.0
    %996 = vmatpush1.xpose.msra.mxu0 0.0
    %997 = vmatprep.subr.mxu0 0.0
    %998 = vmatpush1.xpose.msra.mxu0 0.0
    %999 = vmatprep.subr.mxu0 0.0
    %1000 = vmatpush1.xpose.msra.mxu0 0.0
    %1001 = vmatprep.subr.mxu0 0.0
    %1002 = vmatpush1.xpose.msra.mxu0 0.0
    %1003 = vmatprep.subr.mxu0 0.0
    %1004 = vmatpush1.xpose.msra.mxu0 0.0
    %1005 = vmatprep.subr.mxu0 0.0
    %1006 = vmatpush1.xpose.msra.mxu0 0.0
    %1007 = vmatprep.subr.mxu0 0.0
    %1008 = vmatpush1.xpose.msra.mxu0 0.0
    %1009 = vmatprep.subr.mxu0 0.0
    %1010 = vmatpush1.xpose.msra.mxu0 0.0
    %1011 = vmatprep.subr.mxu0 0.0
    %1012 = vmatpush1.xpose.msra.mxu0 0.0
    %1013 = vmatprep.subr.mxu0 0.0
    %1014 = vmatpush1.xpose.msra.mxu0 0.0
    %1015 = vmatprep.subr.mxu0 0.0
    %1016 = vmatpush1.xpose.msra.mxu0 0.0
    %1017 = vmatprep.subr.mxu0 0.0
    %1018 = vmatpush1.xpose.msra.mxu0 0.0
    %1019 = vmatprep.subr.mxu0 0.0
    %1020 = vmatpush1.xpose.msra.mxu0 0.0
    %1021 = vmatprep.subr.mxu0 0.0
    %1022 = vmatpush1.xpose.msra.mxu0 0.0
    %1023 = vmatprep.subr.mxu0 0.0
    %1024 = vmatpush1.xpose.msra.mxu0 0.0
    %1025 = vmatprep.subr.mxu0 0.0
    %1026 = vmatpush1.xpose.msra.mxu0 0.0
    %1027 = vmatprep.subr.mxu0 0.0
    %1028 = vmatpush1.xpose.msra.mxu0 0.0
    %1029 = vmatprep.subr.mxu0 0.0
    %1030 = vmatpush1.xpose.msra.mxu0 0.0
    %1031 = vmatprep.subr.mxu0 0.0
    %1032 = vmatpush1.xpose.msra.mxu0 0.0
    %1033 = vmatprep.subr.mxu0 0.0
    %1034 = vmatpush1.xpose.msra.mxu0 0.0
    %1035 = vmatprep.subr.mxu0 0.0
    %1036 = vmatpush1.xpose.msra.mxu0 0.0
    %1037 = vmatprep.subr.mxu0 0.0
    %1038 = vmatpush1.xpose.msra.mxu0 0.0
    %1039 = vmatprep.subr.mxu0 0.0
    %1040 = vmatpush1.xpose.msra.mxu0 0.0
    %1041 = vmatprep.subr.mxu0 0.0
    %1042 = vmatpush1.xpose.msra.mxu0 0.0
    %1043 = vmatprep.subr.mxu0 0.0
    %1044 = vmatpush1.xpose.msra.mxu0 0.0
    %1045 = vmatprep.subr.mxu0 0.0
    %1046 = vmatpush1.xpose.msra.mxu0 0.0
    %1047 = vmatprep.subr.mxu0 0.0
    %1048 = vmatpush1.xpose.msra.mxu0 0.0
    %1049 = vmatprep.subr.mxu0 0.0
    %1050 = vmatpush1.xpose.msra.mxu0 0.0
    %1051 = vmatprep.subr.mxu0 0.0
    %1052 = vmatpush1.xpose.msra.mxu0 0.0
    %1053 = vmatprep.mubr.f32.mxu0 0.0
    %1054 = vmatmul.mubr.f32.gmra.mrb[0].mxu0 %v987
    %v1055 = vpop.f32.mrb[0].mxu0
    %v1056 = vadd.f32 %v187, %v1055
    %v1057 = vpop.f32.mrb[0].mxu0
    %1058 = vdwg.mxu0
    %v1060 = vsel %vm76, %v985, 0
    %1062 = vmatprep.subr.mxu0 0.0
    %1063 = vmatpush1.xpose.msra.mxu0 %v399
    %1064 = vmatprep.subr.mxu0 0.0
    %1065 = vmatpush1.xpose.msra.mxu0 0.0
    %1066 = vmatprep.subr.mxu0 0.0
    %1067 = vmatpush1.xpose.msra.mxu0 0.0
    %1068 = vmatprep.subr.mxu0 0.0
    %1069 = vmatpush1.xpose.msra.mxu0 0.0
    %1070 = vmatprep.subr.mxu0 0.0
    %1071 = vmatpush1.xpose.msra.mxu0 0.0
    %1072 = vmatprep.subr.mxu0 0.0
    %1073 = vmatpush1.xpose.msra.mxu0 0.0
    %1074 = vmatprep.subr.mxu0 0.0
    %1075 = vmatpush1.xpose.msra.mxu0 0.0
    %1076 = vmatprep.subr.mxu0 0.0
    %1077 = vmatpush1.xpose.msra.mxu0 0.0
    %1078 = vmatprep.subr.mxu0 0.0
    %1079 = vmatpush1.xpose.msra.mxu0 0.0
    %1080 = vmatprep.subr.mxu0 0.0
    %1081 = vmatpush1.xpose.msra.mxu0 0.0
    %1082 = vmatprep.subr.mxu0 0.0
    %1083 = vmatpush1.xpose.msra.mxu0 0.0
    %1084 = vmatprep.subr.mxu0 0.0
    %1085 = vmatpush1.xpose.msra.mxu0 0.0
    %1086 = vmatprep.subr.mxu0 0.0
    %1087 = vmatpush1.xpose.msra.mxu0 0.0
    %1088 = vmatprep.subr.mxu0 0.0
    %1089 = vmatpush1.xpose.msra.mxu0 0.0
    %1090 = vmatprep.subr.mxu0 0.0
    %1091 = vmatpush1.xpose.msra.mxu0 0.0
    %1092 = vmatprep.subr.mxu0 0.0
    %1093 = vmatpush1.xpose.msra.mxu0 0.0
    %1094 = vmatprep.subr.mxu0 0.0
    %1095 = vmatpush1.xpose.msra.mxu0 0.0
    %1096 = vmatprep.subr.mxu0 0.0
    %1097 = vmatpush1.xpose.msra.mxu0 0.0
    %1098 = vmatprep.subr.mxu0 0.0
    %1099 = vmatpush1.xpose.msra.mxu0 0.0
    %1100 = vmatprep.subr.mxu0 0.0
    %1101 = vmatpush1.xpose.msra.mxu0 0.0
    %1102 = vmatprep.subr.mxu0 0.0
    %1103 = vmatpush1.xpose.msra.mxu0 0.0
    %1104 = vmatprep.subr.mxu0 0.0
    %1105 = vmatpush1.xpose.msra.mxu0 0.0
    %1106 = vmatprep.subr.mxu0 0.0
    %1107 = vmatpush1.xpose.msra.mxu0 0.0
    %1108 = vmatprep.subr.mxu0 0.0
    %1109 = vmatpush1.xpose.msra.mxu0 0.0
    %1110 = vmatprep.subr.mxu0 0.0
    %1111 = vmatpush1.xpose.msra.mxu0 0.0
    %1112 = vmatprep.subr.mxu0 0.0
    %1113 = vmatpush1.xpose.msra.mxu0 0.0
    %1114 = vmatprep.subr.mxu0 0.0
    %1115 = vmatpush1.xpose.msra.mxu0 0.0
    %1116 = vmatprep.subr.mxu0 0.0
    %1117 = vmatpush1.xpose.msra.mxu0 0.0
    %1118 = vmatprep.subr.mxu0 0.0
    %1119 = vmatpush1.xpose.msra.mxu0 0.0
    %1120 = vmatprep.subr.mxu0 0.0
    %1121 = vmatpush1.xpose.msra.mxu0 0.0
    %1122 = vmatprep.subr.mxu0 0.0
    %1123 = vmatpush1.xpose.msra.mxu0 0.0
    %1124 = vmatprep.subr.mxu0 0.0
    %1125 = vmatpush1.xpose.msra.mxu0 0.0
    %1126 = vmatprep.mubr.f32.mxu0 0.0
    %1127 = vmatmul.mubr.f32.gmra.mrb[0].mxu0 %v1060
    %v1128 = vpop.f32.mrb[0].mxu0
    %v1129 = vadd.f32 %v188, %v1128
    %v1130 = vpop.f32.mrb[0].mxu0
    %1131 = vdwg.mxu0
    %v1132 = vsel %vm471, %v1056, -inf
    %1133 = vmax.xlane.f32.xlu0 %v1132
    %v1134 = vpop.xlane.xlu0 %1133
    %v1135 = vsel %vm471, %v1129, -inf
    %1136 = vmax.xlane.f32.xlu0 %v1135
    %v1137 = vpop.xlane.xlu0 %1136
    %v1138 = vsub.f32 %v1056, %v1134
    %v1139 = vsub.f32 %v1129, %v1137
    %v1140 = vmul.f32 %v1138, 1.442695
    %v1141 = vpow.pop %v1140
    %v1142 = vmul.f32 %v1139, 1.442695
    %v1143 = vpow.pop %v1142
    %v1144 = vsel %vm471, %v1141, 0.0
    %1145 = vadd.xlane.f32.xlu0 %v1144
    %v1146 = vpop.xlane.xlu0 %1145
    %v1147 = vsel %vm471, %v1143, 0.0
    %1148 = vadd.xlane.f32.xlu0 %v1147
    %v1149 = vpop.xlane.xlu0 %1148
    %v1150 = vrcp.pop %v1146
    %v1151 = vmul.f32 %v1141, %v1150
    %v1152 = vrcp.pop %v1149
    %v1153 = vmul.f32 %v1143, %v1152
    %1155 = vrot.lane.b32.xlu0 %v200, 64
    %v1156 = vpop.permute.xlu0 %1155
    %v1158 = vmul.f32 %v303, %v1156
    %v1159 = vmul.f32 %v308, %v1156
    %1161 = vrot.lane.b32.xlu0 %v1158, 64
    %v1162 = vpop.permute.xlu0 %1161
    %v1165 = vsel %vm471, %v1151, 0
    %1167 = vmatprep.subr.mxu0 0.0
    %1168 = vmatpush1.msra.mxu0 %v1162
    %1169 = vmatprep.subr.mxu0 0.0
    %1170 = vmatpush1.msra.mxu0 0.0
    %1171 = vmatprep.subr.mxu0 0.0
    %1172 = vmatpush1.msra.mxu0 0.0
    %1173 = vmatprep.subr.mxu0 0.0
    %1174 = vmatpush1.msra.mxu0 0.0
    %1175 = vmatprep.subr.mxu0 0.0
    %1176 = vmatpush1.msra.mxu0 0.0
    %1177 = vmatprep.subr.mxu0 0.0
    %1178 = vmatpush1.msra.mxu0 0.0
    %1179 = vmatprep.subr.mxu0 0.0
    %1180 = vmatpush1.msra.mxu0 0.0
    %1181 = vmatprep.subr.mxu0 0.0
    %1182 = vmatpush1.msra.mxu0 0.0
    %1183 = vmatprep.subr.mxu0 0.0
    %1184 = vmatpush1.msra.mxu0 0.0
    %1185 = vmatprep.subr.mxu0 0.0
    %1186 = vmatpush1.msra.mxu0 0.0
    %1187 = vmatprep.subr.mxu0 0.0
    %1188 = vmatpush1.msra.mxu0 0.0
    %1189 = vmatprep.subr.mxu0 0.0
    %1190 = vmatpush1.msra.mxu0 0.0
    %1191 = vmatprep.subr.mxu0 0.0
    %1192 = vmatpush1.msra.mxu0 0.0
    %1193 = vmatprep.subr.mxu0 0.0
    %1194 = vmatpush1.msra.mxu0 0.0
    %1195 = vmatprep.subr.mxu0 0.0
    %1196 = vmatpush1.msra.mxu0 0.0
    %1197 = vmatprep.subr.mxu0 0.0
    %1198 = vmatpush1.msra.mxu0 0.0
    %1199 = vmatprep.subr.mxu0 0.0
    %1200 = vmatpush1.msra.mxu0 0.0
    %1201 = vmatprep.subr.mxu0 0.0
    %1202 = vmatpush1.msra.mxu0 0.0
    %1203 = vmatprep.subr.mxu0 0.0
    %1204 = vmatpush1.msra.mxu0 0.0
    %1205 = vmatprep.subr.mxu0 0.0
    %1206 = vmatpush1.msra.mxu0 0.0
    %1207 = vmatprep.subr.mxu0 0.0
    %1208 = vmatpush1.msra.mxu0 0.0
    %1209 = vmatprep.subr.mxu0 0.0
    %1210 = vmatpush1.msra.mxu0 0.0
    %1211 = vmatprep.subr.mxu0 0.0
    %1212 = vmatpush1.msra.mxu0 0.0
    %1213 = vmatprep.subr.mxu0 0.0
    %1214 = vmatpush1.msra.mxu0 0.0
    %1215 = vmatprep.subr.mxu0 0.0
    %1216 = vmatpush1.msra.mxu0 0.0
    %1217 = vmatprep.subr.mxu0 0.0
    %1218 = vmatpush1.msra.mxu0 0.0
    %1219 = vmatprep.subr.mxu0 0.0
    %1220 = vmatpush1.msra.mxu0 0.0
    %1221 = vmatprep.subr.mxu0 0.0
    %1222 = vmatpush1.msra.mxu0 0.0
    %1223 = vmatprep.subr.mxu0 0.0
    %1224 = vmatpush1.msra.mxu0 0.0
    %1225 = vmatprep.subr.mxu0 0.0
    %1226 = vmatpush1.msra.mxu0 0.0
    %1227 = vmatprep.subr.mxu0 0.0
    %1228 = vmatpush1.msra.mxu0 0.0
    %1229 = vmatprep.subr.mxu0 0.0
    %1230 = vmatpush1.msra.mxu0 0.0
    %1231 = vmatprep.mubr.f32.mxu0 0.0
    %1232 = vmatmul.mubr.f32.gmra.mrb[0].mxu0 %v1165
    %v1233 = vpop.f32.mrb[0].mxu0
    %v1234 = vadd.f32 0.0, %v1233
    %v1235 = vpop.f32.mrb[0].mxu0
    %1236 = vdwg.mxu0
    %1238 = vrot.lane.b32.xlu0 %v1159, 64
    %v1239 = vpop.permute.xlu0 %1238
    %v1242 = vsel %vm471, %v1153, 0
    %1244 = vmatprep.subr.mxu0 0.0
    %1245 = vmatpush1.msra.mxu0 %v1239
    %1246 = vmatprep.subr.mxu0 0.0
    %1247 = vmatpush1.msra.mxu0 0.0
    %1248 = vmatprep.subr.mxu0 0.0
    %1249 = vmatpush1.msra.mxu0 0.0
    %1250 = vmatprep.subr.mxu0 0.0
    %1251 = vmatpush1.msra.mxu0 0.0
    %1252 = vmatprep.subr.mxu0 0.0
    %1253 = vmatpush1.msra.mxu0 0.0
    %1254 = vmatprep.subr.mxu0 0.0
    %1255 = vmatpush1.msra.mxu0 0.0
    %1256 = vmatprep.subr.mxu0 0.0
    %1257 = vmatpush1.msra.mxu0 0.0
    %1258 = vmatprep.subr.mxu0 0.0
    %1259 = vmatpush1.msra.mxu0 0.0
    %1260 = vmatprep.subr.mxu0 0.0
    %1261 = vmatpush1.msra.mxu0 0.0
    %1262 = vmatprep.subr.mxu0 0.0
    %1263 = vmatpush1.msra.mxu0 0.0
    %1264 = vmatprep.subr.mxu0 0.0
    %1265 = vmatpush1.msra.mxu0 0.0
    %1266 = vmatprep.subr.mxu0 0.0
    %1267 = vmatpush1.msra.mxu0 0.0
    %1268 = vmatprep.subr.mxu0 0.0
    %1269 = vmatpush1.msra.mxu0 0.0
    %1270 = vmatprep.subr.mxu0 0.0
    %1271 = vmatpush1.msra.mxu0 0.0
    %1272 = vmatprep.subr.mxu0 0.0
    %1273 = vmatpush1.msra.mxu0 0.0
    %1274 = vmatprep.subr.mxu0 0.0
    %1275 = vmatpush1.msra.mxu0 0.0
    %1276 = vmatprep.subr.mxu0 0.0
    %1277 = vmatpush1.msra.mxu0 0.0
    %1278 = vmatprep.subr.mxu0 0.0
    %1279 = vmatpush1.msra.mxu0 0.0
    %1280 = vmatprep.subr.mxu0 0.0
    %1281 = vmatpush1.msra.mxu0 0.0
    %1282 = vmatprep.subr.mxu0 0.0
    %1283 = vmatpush1.msra.mxu0 0.0
    %1284 = vmatprep.subr.mxu0 0.0
    %1285 = vmatpush1.msra.mxu0 0.0
    %1286 = vmatprep.subr.mxu0 0.0
    %1287 = vmatpush1.msra.mxu0 0.0
    %1288 = vmatprep.subr.mxu0 0.0
    %1289 = vmatpush1.msra.mxu0 0.0
    %1290 = vmatprep.subr.mxu0 0.0
    %1291 = vmatpush1.msra.mxu0 0.0
    %1292 = vmatprep.subr.mxu0 0.0
    %1293 = vmatpush1.msra.mxu0 0.0
    %1294 = vmatprep.subr.mxu0 0.0
    %1295 = vmatpush1.msra.mxu0 0.0
    %1296 = vmatprep.subr.mxu0 0.0
    %1297 = vmatpush1.msra.mxu0 0.0
    %1298 = vmatprep.subr.mxu0 0.0
    %1299 = vmatpush1.msra.mxu0 0.0
    %1300 = vmatprep.subr.mxu0 0.0
    %1301 = vmatpush1.msra.mxu0 0.0
    %1302 = vmatprep.subr.mxu0 0.0
    %1303 = vmatpush1.msra.mxu0 0.0
    %1304 = vmatprep.subr.mxu0 0.0
    %1305 = vmatpush1.msra.mxu0 0.0
    %1306 = vmatprep.subr.mxu0 0.0
    %1307 = vmatpush1.msra.mxu0 0.0
    %1308 = vmatprep.mubr.f32.mxu0 0.0
    %1309 = vmatmul.mubr.f32.gmra.mrb[0].mxu0 %v1242
    %v1310 = vpop.f32.mrb[0].mxu0
    %v1311 = vadd.f32 0.0, %v1310
    %v1312 = vpop.f32.mrb[0].mxu0
    %1313 = vdwg.mxu0
    %v1314 = vadd.f32 %v904, %v1234
    %v1315 = vadd.f32 %v981, %v1311
    %v1316 = vmul.f32 %v311, %v204
    %v1317 = vmul.f32 %v312, %v204
    %v1319 = vsel %vm76, %v1316, 0
    %1321 = vmatprep.subr.mxu0 0.0
    %1322 = vmatpush1.xpose.msra.mxu0 %v321
    %1323 = vmatprep.subr.mxu0 0.0
    %1324 = vmatpush1.xpose.msra.mxu0 0.0
    %1325 = vmatprep.subr.mxu0 0.0
    %1326 = vmatpush1.xpose.msra.mxu0 0.0
    %1327 = vmatprep.subr.mxu0 0.0
    %1328 = vmatpush1.xpose.msra.mxu0 0.0
    %1329 = vmatprep.subr.mxu0 0.0
    %1330 = vmatpush1.xpose.msra.mxu0 0.0
    %1331 = vmatprep.subr.mxu0 0.0
    %1332 = vmatpush1.xpose.msra.mxu0 0.0
    %1333 = vmatprep.subr.mxu0 0.0
    %1334 = vmatpush1.xpose.msra.mxu0 0.0
    %1335 = vmatprep.subr.mxu0 0.0
    %1336 = vmatpush1.xpose.msra.mxu0 0.0
    %1337 = vmatprep.subr.mxu0 0.0
    %1338 = vmatpush1.xpose.msra.mxu0 0.0
    %1339 = vmatprep.subr.mxu0 0.0
    %1340 = vmatpush1.xpose.msra.mxu0 0.0
    %1341 = vmatprep.subr.mxu0 0.0
    %1342 = vmatpush1.xpose.msra.mxu0 0.0
    %1343 = vmatprep.subr.mxu0 0.0
    %1344 = vmatpush1.xpose.msra.mxu0 0.0
    %1345 = vmatprep.subr.mxu0 0.0
    %1346 = vmatpush1.xpose.msra.mxu0 0.0
    %1347 = vmatprep.subr.mxu0 0.0
    %1348 = vmatpush1.xpose.msra.mxu0 0.0
    %1349 = vmatprep.subr.mxu0 0.0
    %1350 = vmatpush1.xpose.msra.mxu0 0.0
    %1351 = vmatprep.subr.mxu0 0.0
    %1352 = vmatpush1.xpose.msra.mxu0 0.0
    %1353 = vmatprep.subr.mxu0 0.0
    %1354 = vmatpush1.xpose.msra.mxu0 0.0
    %1355 = vmatprep.subr.mxu0 0.0
    %1356 = vmatpush1.xpose.msra.mxu0 0.0
    %1357 = vmatprep.subr.mxu0 0.0
    %1358 = vmatpush1.xpose.msra.mxu0 0.0
    %1359 = vmatprep.subr.mxu0 0.0
    %1360 = vmatpush1.xpose.msra.mxu0 0.0
    %1361 = vmatprep.subr.mxu0 0.0
    %1362 = vmatpush1.xpose.msra.mxu0 0.0
    %1363 = vmatprep.subr.mxu0 0.0
    %1364 = vmatpush1.xpose.msra.mxu0 0.0
    %1365 = vmatprep.subr.mxu0 0.0
    %1366 = vmatpush1.xpose.msra.mxu0 0.0
    %1367 = vmatprep.subr.mxu0 0.0
    %1368 = vmatpush1.xpose.msra.mxu0 0.0
    %1369 = vmatprep.subr.mxu0 0.0
    %1370 = vmatpush1.xpose.msra.mxu0 0.0
    %1371 = vmatprep.subr.mxu0 0.0
    %1372 = vmatpush1.xpose.msra.mxu0 0.0
    %1373 = vmatprep.subr.mxu0 0.0
    %1374 = vmatpush1.xpose.msra.mxu0 0.0
    %1375 = vmatprep.subr.mxu0 0.0
    %1376 = vmatpush1.xpose.msra.mxu0 0.0
    %1377 = vmatprep.subr.mxu0 0.0
    %1378 = vmatpush1.xpose.msra.mxu0 0.0
    %1379 = vmatprep.subr.mxu0 0.0
    %1380 = vmatpush1.xpose.msra.mxu0 0.0
    %1381 = vmatprep.subr.mxu0 0.0
    %1382 = vmatpush1.xpose.msra.mxu0 0.0
    %1383 = vmatprep.subr.mxu0 0.0
    %1384 = vmatpush1.xpose.msra.mxu0 0.0
    %1385 = vmatprep.mubr.f32.mxu0 0.0
    %1386 = vmatmul.mubr.f32.gmra.mrb[0].mxu0 %v1319
    %v1387 = vpop.f32.mrb[0].mxu0
    %v1388 = vadd.f32 %v187, %v1387
    %v1389 = vpop.f32.mrb[0].mxu0
    %1390 = vdwg.mxu0
    %v1392 = vsel %vm76, %v1317, 0
    %1394 = vmatprep.subr.mxu0 0.0
    %1395 = vmatpush1.xpose.msra.mxu0 %v399
    %1396 = vmatprep.subr.mxu0 0.0
    %1397 = vmatpush1.xpose.msra.mxu0 0.0
    %1398 = vmatprep.subr.mxu0 0.0
    %1399 = vmatpush1.xpose.msra.mxu0 0.0
    %1400 = vmatprep.subr.mxu0 0.0
    %1401 = vmatpush1.xpose.msra.mxu0 0.0
    %1402 = vmatprep.subr.mxu0 0.0
    %1403 = vmatpush1.xpose.msra.mxu0 0.0
    %1404 = vmatprep.subr.mxu0 0.0
    %1405 = vmatpush1.xpose.msra.mxu0 0.0
    %1406 = vmatprep.subr.mxu0 0.0
    %1407 = vmatpush1.xpose.msra.mxu0 0.0
    %1408 = vmatprep.subr.mxu0 0.0
    %1409 = vmatpush1.xpose.msra.mxu0 0.0
    %1410 = vmatprep.subr.mxu0 0.0
    %1411 = vmatpush1.xpose.msra.mxu0 0.0
    %1412 = vmatprep.subr.mxu0 0.0
    %1413 = vmatpush1.xpose.msra.mxu0 0.0
    %1414 = vmatprep.subr.mxu0 0.0
    %1415 = vmatpush1.xpose.msra.mxu0 0.0
    %1416 = vmatprep.subr.mxu0 0.0
    %1417 = vmatpush1.xpose.msra.mxu0 0.0
    %1418 = vmatprep.subr.mxu0 0.0
    %1419 = vmatpush1.xpose.msra.mxu0 0.0
    %1420 = vmatprep.subr.mxu0 0.0
    %1421 = vmatpush1.xpose.msra.mxu0 0.0
    %1422 = vmatprep.subr.mxu0 0.0
    %1423 = vmatpush1.xpose.msra.mxu0 0.0
    %1424 = vmatprep.subr.mxu0 0.0
    %1425 = vmatpush1.xpose.msra.mxu0 0.0
    %1426 = vmatprep.subr.mxu0 0.0
    %1427 = vmatpush1.xpose.msra.mxu0 0.0
    %1428 = vmatprep.subr.mxu0 0.0
    %1429 = vmatpush1.xpose.msra.mxu0 0.0
    %1430 = vmatprep.subr.mxu0 0.0
    %1431 = vmatpush1.xpose.msra.mxu0 0.0
    %1432 = vmatprep.subr.mxu0 0.0
    %1433 = vmatpush1.xpose.msra.mxu0 0.0
    %1434 = vmatprep.subr.mxu0 0.0
    %1435 = vmatpush1.xpose.msra.mxu0 0.0
    %1436 = vmatprep.subr.mxu0 0.0
    %1437 = vmatpush1.xpose.msra.mxu0 0.0
    %1438 = vmatprep.subr.mxu0 0.0
    %1439 = vmatpush1.xpose.msra.mxu0 0.0
    %1440 = vmatprep.subr.mxu0 0.0
    %1441 = vmatpush1.xpose.msra.mxu0 0.0
    %1442 = vmatprep.subr.mxu0 0.0
    %1443 = vmatpush1.xpose.msra.mxu0 0.0
    %1444 = vmatprep.subr.mxu0 0.0
    %1445 = vmatpush1.xpose.msra.mxu0 0.0
    %1446 = vmatprep.subr.mxu0 0.0
    %1447 = vmatpush1.xpose.msra.mxu0 0.0
    %1448 = vmatprep.subr.mxu0 0.0
    %1449 = vmatpush1.xpose.msra.mxu0 0.0
    %1450 = vmatprep.subr.mxu0 0.0
    %1451 = vmatpush1.xpose.msra.mxu0 0.0
    %1452 = vmatprep.subr.mxu0 0.0
    %1453 = vmatpush1.xpose.msra.mxu0 0.0
    %1454 = vmatprep.subr.mxu0 0.0
    %1455 = vmatpush1.xpose.msra.mxu0 0.0
    %1456 = vmatprep.subr.mxu0 0.0
    %1457 = vmatpush1.xpose.msra.mxu0 0.0
    %1458 = vmatprep.mubr.f32.mxu0 0.0
    %1459 = vmatmul.mubr.f32.gmra.mrb[0].mxu0 %v1392
    %v1460 = vpop.f32.mrb[0].mxu0
    %v1461 = vadd.f32 %v188, %v1460
    %v1462 = vpop.f32.mrb[0].mxu0
    %1463 = vdwg.mxu0
    %v1464 = vsel %vm471, %v1388, -inf
    %1465 = vmax.xlane.f32.xlu0 %v1464
    %v1466 = vpop.xlane.xlu0 %1465
    %v1467 = vsel %vm471, %v1461, -inf
    %1468 = vmax.xlane.f32.xlu0 %v1467
    %v1469 = vpop.xlane.xlu0 %1468
    %v1470 = vsub.f32 %v1388, %v1466
    %v1471 = vsub.f32 %v1461, %v1469
    %v1472 = vmul.f32 %v1470, 1.442695
    %v1473 = vpow.pop %v1472
    %v1474 = vmul.f32 %v1471, 1.442695
    %v1475 = vpow.pop %v1474
    %v1476 = vsel %vm471, %v1473, 0.0
    %1477 = vadd.xlane.f32.xlu0 %v1476
    %v1478 = vpop.xlane.xlu0 %1477
    %v1479 = vsel %vm471, %v1475, 0.0
    %1480 = vadd.xlane.f32.xlu0 %v1479
    %v1481 = vpop.xlane.xlu0 %1480
    %v1482 = vrcp.pop %v1478
    %v1483 = vmul.f32 %v1473, %v1482
    %v1484 = vrcp.pop %v1481
    %v1485 = vmul.f32 %v1475, %v1484
    %1487 = vrot.lane.b32.xlu0 %v204, 64
    %v1488 = vpop.permute.xlu0 %1487
    %v1490 = vmul.f32 %v303, %v1488
    %v1491 = vmul.f32 %v308, %v1488
    %1493 = vrot.lane.b32.xlu0 %v1490, 64
    %v1494 = vpop.permute.xlu0 %1493
    %v1497 = vsel %vm471, %v1483, 0
    %1499 = vmatprep.subr.mxu0 0.0
    %1500 = vmatpush1.msra.mxu0 %v1494
    %1501 = vmatprep.subr.mxu0 0.0
    %1502 = vmatpush1.msra.mxu0 0.0
    %1503 = vmatprep.subr.mxu0 0.0
    %1504 = vmatpush1.msra.mxu0 0.0
    %1505 = vmatprep.subr.mxu0 0.0
    %1506 = vmatpush1.msra.mxu0 0.0
    %1507 = vmatprep.subr.mxu0 0.0
    %1508 = vmatpush1.msra.mxu0 0.0
    %1509 = vmatprep.subr.mxu0 0.0
    %1510 = vmatpush1.msra.mxu0 0.0
    %1511 = vmatprep.subr.mxu0 0.0
    %1512 = vmatpush1.msra.mxu0 0.0
    %1513 = vmatprep.subr.mxu0 0.0
    %1514 = vmatpush1.msra.mxu0 0.0
    %1515 = vmatprep.subr.mxu0 0.0
    %1516 = vmatpush1.msra.mxu0 0.0
    %1517 = vmatprep.subr.mxu0 0.0
    %1518 = vmatpush1.msra.mxu0 0.0
    %1519 = vmatprep.subr.mxu0 0.0
    %1520 = vmatpush1.msra.mxu0 0.0
    %1521 = vmatprep.subr.mxu0 0.0
    %1522 = vmatpush1.msra.mxu0 0.0
    %1523 = vmatprep.subr.mxu0 0.0
    %1524 = vmatpush1.msra.mxu0 0.0
    %1525 = vmatprep.subr.mxu0 0.0
    %1526 = vmatpush1.msra.mxu0 0.0
    %1527 = vmatprep.subr.mxu0 0.0
    %1528 = vmatpush1.msra.mxu0 0.0
    %1529 = vmatprep.subr.mxu0 0.0
    %1530 = vmatpush1.msra.mxu0 0.0
    %1531 = vmatprep.subr.mxu0 0.0
    %1532 = vmatpush1.msra.mxu0 0.0
    %1533 = vmatprep.subr.mxu0 0.0
    %1534 = vmatpush1.msra.mxu0 0.0
    %1535 = vmatprep.subr.mxu0 0.0
    %1536 = vmatpush1.msra.mxu0 0.0
    %1537 = vmatprep.subr.mxu0 0.0
    %1538 = vmatpush1.msra.mxu0 0.0
    %1539 = vmatprep.subr.mxu0 0.0
    %1540 = vmatpush1.msra.mxu0 0.0
    %1541 = vmatprep.subr.mxu0 0.0
    %1542 = vmatpush1.msra.mxu0 0.0
    %1543 = vmatprep.subr.mxu0 0.0
    %1544 = vmatpush1.msra.mxu0 0.0
    %1545 = vmatprep.subr.mxu0 0.0
    %1546 = vmatpush1.msra.mxu0 0.0
    %1547 = vmatprep.subr.mxu0 0.0
    %1548 = vmatpush1.msra.mxu0 0.0
    %1549 = vmatprep.subr.mxu0 0.0
    %1550 = vmatpush1.msra.mxu0 0.0
    %1551 = vmatprep.subr.mxu0 0.0
    %1552 = vmatpush1.msra.mxu0 0.0
    %1553 = vmatprep.subr.mxu0 0.0
    %1554 = vmatpush1.msra.mxu0 0.0
    %1555 = vmatprep.subr.mxu0 0.0
    %1556 = vmatpush1.msra.mxu0 0.0
    %1557 = vmatprep.subr.mxu0 0.0
    %1558 = vmatpush1.msra.mxu0 0.0
    %1559 = vmatprep.subr.mxu0 0.0
    %1560 = vmatpush1.msra.mxu0 0.0
    %1561 = vmatprep.subr.mxu0 0.0
    %1562 = vmatpush1.msra.mxu0 0.0
    %1563 = vmatprep.mubr.f32.mxu0 0.0
    %1564 = vmatmul.mubr.f32.gmra.mrb[0].mxu0 %v1497
    %v1565 = vpop.f32.mrb[0].mxu0
    %v1566 = vadd.f32 0.0, %v1565
    %v1567 = vpop.f32.mrb[0].mxu0
    %1568 = vdwg.mxu0
    %1570 = vrot.lane.b32.xlu0 %v1491, 64
    %v1571 = vpop.permute.xlu0 %1570
    %v1574 = vsel %vm471, %v1485, 0
    %1576 = vmatprep.subr.mxu0 0.0
    %1577 = vmatpush1.msra.mxu0 %v1571
    %1578 = vmatprep.subr.mxu0 0.0
    %1579 = vmatpush1.msra.mxu0 0.0
    %1580 = vmatprep.subr.mxu0 0.0
    %1581 = vmatpush1.msra.mxu0 0.0
    %1582 = vmatprep.subr.mxu0 0.0
    %1583 = vmatpush1.msra.mxu0 0.0
    %1584 = vmatprep.subr.mxu0 0.0
    %1585 = vmatpush1.msra.mxu0 0.0
    %1586 = vmatprep.subr.mxu0 0.0
    %1587 = vmatpush1.msra.mxu0 0.0
    %1588 = vmatprep.subr.mxu0 0.0
    %1589 = vmatpush1.msra.mxu0 0.0
    %1590 = vmatprep.subr.mxu0 0.0
    %1591 = vmatpush1.msra.mxu0 0.0
    %1592 = vmatprep.subr.mxu0 0.0
    %1593 = vmatpush1.msra.mxu0 0.0
    %1594 = vmatprep.subr.mxu0 0.0
    %1595 = vmatpush1.msra.mxu0 0.0
    %1596 = vmatprep.subr.mxu0 0.0
    %1597 = vmatpush1.msra.mxu0 0.0
    %1598 = vmatprep.subr.mxu0 0.0
    %1599 = vmatpush1.msra.mxu0 0.0
    %1600 = vmatprep.subr.mxu0 0.0
    %1601 = vmatpush1.msra.mxu0 0.0
    %1602 = vmatprep.subr.mxu0 0.0
    %1603 = vmatpush1.msra.mxu0 0.0
    %1604 = vmatprep.subr.mxu0 0.0
    %1605 = vmatpush1.msra.mxu0 0.0
    %1606 = vmatprep.subr.mxu0 0.0
    %1607 = vmatpush1.msra.mxu0 0.0
    %1608 = vmatprep.subr.mxu0 0.0
    %1609 = vmatpush1.msra.mxu0 0.0
    %1610 = vmatprep.subr.mxu0 0.0
    %1611 = vmatpush1.msra.mxu0 0.0
    %1612 = vmatprep.subr.mxu0 0.0
    %1613 = vmatpush1.msra.mxu0 0.0
    %1614 = vmatprep.subr.mxu0 0.0
    %1615 = vmatpush1.msra.mxu0 0.0
    %1616 = vmatprep.subr.mxu0 0.0
    %1617 = vmatpush1.msra.mxu0 0.0
    %1618 = vmatprep.subr.mxu0 0.0
    %1619 = vmatpush1.msra.mxu0 0.0
    %1620 = vmatprep.subr.mxu0 0.0
    %1621 = vmatpush1.msra.mxu0 0.0
    %1622 = vmatprep.subr.mxu0 0.0
    %1623 = vmatpush1.msra.mxu0 0.0
    %1624 = vmatprep.subr.mxu0 0.0
    %1625 = vmatpush1.msra.mxu0 0.0
    %1626 = vmatprep.subr.mxu0 0.0
    %1627 = vmatpush1.msra.mxu0 0.0
    %1628 = vmatprep.subr.mxu0 0.0
    %1629 = vmatpush1.msra.mxu0 0.0
    %1630 = vmatprep.subr.mxu0 0.0
    %1631 = vmatpush1.msra.mxu0 0.0
    %1632 = vmatprep.subr.mxu0 0.0
    %1633 = vmatpush1.msra.mxu0 0.0
    %1634 = vmatprep.subr.mxu0 0.0
    %1635 = vmatpush1.msra.mxu0 0.0
    %1636 = vmatprep.subr.mxu0 0.0
    %1637 = vmatpush1.msra.mxu0 0.0
    %1638 = vmatprep.subr.mxu0 0.0
    %1639 = vmatpush1.msra.mxu0 0.0
    %1640 = vmatprep.mubr.f32.mxu0 0.0
    %1641 = vmatmul.mubr.f32.gmra.mrb[0].mxu0 %v1574
    %v1642 = vpop.f32.mrb[0].mxu0
    %v1643 = vadd.f32 0.0, %v1642
    %v1644 = vpop.f32.mrb[0].mxu0
    %1645 = vdwg.mxu0
    %v1646 = vadd.f32 %v1314, %v1566
    %v1647 = vadd.f32 %v1315, %v1643
    %v1648 = vlaneseq
    %v1649 = vshrl.u32 %v1648, 7
    %v1650 = vsub.s32 1, %v1649
    %v1651 = vrot.slane %v225, %v1650
    %v1653 = vsel %vm76, %v1646, 0
    %v1656 = vsel %vm76, %v1647, 0
    %1658 = vmatprep.subr.mxu0 0.0
    %1659 = vmatpush1.msra.mxu0 %v209
    %1660 = vmatprep.subr.mxu0 0.0
    %1661 = vmatpush1.msra.mxu0 %v210
    %1662 = vmatprep.subr.mxu0 0.0
    %1663 = vmatpush1.msra.mxu0 %v211
    %1664 = vmatprep.subr.mxu0 0.0
    %1665 = vmatpush1.msra.mxu0 %v212
    %1666 = vmatprep.subr.mxu0 0.0
    %1667 = vmatpush1.msra.mxu0 0.0
    %1668 = vmatprep.subr.mxu0 0.0
    %1669 = vmatpush1.msra.mxu0 0.0
    %1670 = vmatprep.subr.mxu0 0.0
    %1671 = vmatpush1.msra.mxu0 0.0
    %1672 = vmatprep.subr.mxu0 0.0
    %1673 = vmatpush1.msra.mxu0 0.0
    %1674 = vmatprep.subr.mxu0 0.0
    %1675 = vmatpush1.msra.mxu0 0.0
    %1676 = vmatprep.subr.mxu0 0.0
    %1677 = vmatpush1.msra.mxu0 0.0
    %1678 = vmatprep.subr.mxu0 0.0
    %1679 = vmatpush1.msra.mxu0 0.0
    %1680 = vmatprep.subr.mxu0 0.0
    %1681 = vmatpush1.msra.mxu0 0.0
    %1682 = vmatprep.subr.mxu0 0.0
    %1683 = vmatpush1.msra.mxu0 0.0
    %1684 = vmatprep.subr.mxu0 0.0
    %1685 = vmatpush1.msra.mxu0 0.0
    %1686 = vmatprep.subr.mxu0 0.0
    %1687 = vmatpush1.msra.mxu0 0.0
    %1688 = vmatprep.subr.mxu0 0.0
    %1689 = vmatpush1.msra.mxu0 0.0
    %1690 = vmatprep.subr.mxu0 0.0
    %1691 = vmatpush1.msra.mxu0 0.0
    %1692 = vmatprep.subr.mxu0 0.0
    %1693 = vmatpush1.msra.mxu0 0.0
    %1694 = vmatprep.subr.mxu0 0.0
    %1695 = vmatpush1.msra.mxu0 0.0
    %1696 = vmatprep.subr.mxu0 0.0
    %1697 = vmatpush1.msra.mxu0 0.0
    %1698 = vmatprep.subr.mxu0 0.0
    %1699 = vmatpush1.msra.mxu0 0.0
    %1700 = vmatprep.subr.mxu0 0.0
    %1701 = vmatpush1.msra.mxu0 0.0
    %1702 = vmatprep.subr.mxu0 0.0
    %1703 = vmatpush1.msra.mxu0 0.0
    %1704 = vmatprep.subr.mxu0 0.0
    %1705 = vmatpush1.msra.mxu0 0.0
    %1706 = vmatprep.subr.mxu0 0.0
    %1707 = vmatpush1.msra.mxu0 0.0
    %1708 = vmatprep.subr.mxu0 0.0
    %1709 = vmatpush1.msra.mxu0 0.0
    %1710 = vmatprep.subr.mxu0 0.0
    %1711 = vmatpush1.msra.mxu0 0.0
    %1712 = vmatprep.subr.mxu0 0.0
    %1713 = vmatpush1.msra.mxu0 0.0
    %1714 = vmatprep.subr.mxu0 0.0
    %1715 = vmatpush1.msra.mxu0 0.0
    %1716 = vmatprep.subr.mxu0 0.0
    %1717 = vmatpush1.msra.mxu0 0.0
    %1718 = vmatprep.subr.mxu0 0.0
    %1719 = vmatpush1.msra.mxu0 0.0
    %1720 = vmatprep.subr.mxu0 0.0
    %1721 = vmatpush1.msra.mxu0 0.0
    %1722 = vmatprep.mubr.f32.mxu0 0.0
    %1723 = vmatmul.mubr.f32.gmra.mrb[0].mxu0 %v1653
    %v1724 = vpop.f32.mrb[0].mxu0
    %v1725 = vadd.f32 %v1651, %v1724
    %v1726 = vpop.f32.mrb[0].mxu0
    %1727 = vmatprep.mubr.f32.mxu0 0.0
    %1728 = vmatmul.mubr.f32.gmra.mrb[0].mxu0 %v1656
    %v1729 = vpop.f32.mrb[0].mxu0
    %v1730 = vadd.f32 %v1651, %v1729
    %v1731 = vpop.f32.mrb[0].mxu0
    %1732 = vdwg.mxu0
    %v1733 = vadd.f32 %v161, %v1725
    %v1734 = vadd.f32 %v162, %v1730
    %v1735 = vsel %vm76, %v1733, 0.0
    %1736 = vadd.xlane.f32.xlu0 %v1735
    %v1737 = vpop.xlane.xlu0 %1736
    %v1738 = vsel %vm76, %v1734, 0.0
    %1739 = vadd.xlane.f32.xlu0 %v1738
    %v1740 = vpop.xlane.xlu0 %1739
    %v1741 = vrcp.pop 32.0
    %v1742 = vmul.f32 %v1737, %v1741
    %v1743 = vmul.f32 %v1740, %v1741
    %v1744 = vsub.f32 %v1733, %v1742
    %v1745 = vsub.f32 %v1734, %v1743
    %v1746 = vmul.f32 %v1744, %v1744
    %v1747 = vmul.f32 %v1745, %v1745
    %v1748 = vsel %vm76, %v1746, 0.0
    %1749 = vadd.xlane.f32.xlu0 %v1748
    %v1750 = vpop.xlane.xlu0 %1749
    %v1751 = vsel %vm76, %v1747, 0.0
    %1752 = vadd.xlane.f32.xlu0 %v1751
    %v1753 = vpop.xlane.xlu0 %1752
    %v1754 = vmul.f32 %v1750, %v1741
    %v1755 = vmul.f32 %v1753, %v1741
    %v1756 = vadd.f32 %v1754, 1e-05
    %v1757 = vadd.f32 %v1755, 1e-05
    %v1758 = vrsqrt.pop %v1756
    %v1759 = vrsqrt.pop %v1757
    %v1760 = vmul.f32 %v1744, %v1758
    %v1761 = vmul.f32 %v1745, %v1759
    %v1762 = vlaneseq
    %v1763 = vshrl.u32 %v1762, 7
    %v1764 = vsub.s32 4, %v1763
    %v1765 = vrot.slane %v225, %v1764
    %v1766 = vmul.f32 %v1760, %v1765
    %v1767 = vmul.f32 %v1761, %v1765
    %v1768 = vlaneseq
    %v1769 = vshrl.u32 %v1768, 7
    %v1770 = vsub.s32 5, %v1769
    %v1771 = vrot.slane %v225, %v1770
    %v1772 = vadd.f32 %v1766, %v1771
    %v1773 = vadd.f32 %v1767, %v1771
    %v1774 = vlaneseq
    %v1775 = vshrl.u32 %v1774, 7
    %v1776 = vsub.s32 2, %v1775
    %v1777 = vrot.slane %v225, %v1776
    %v1779 = vsel %vm76, %v1772, 0
    %v1782 = vsel %vm76, %v1773, 0
    %1784 = vmatprep.subr.mxu0 0.0
    %1785 = vmatpush1.msra.mxu0 %v213
    %1786 = vmatprep.subr.mxu0 0.0
    %1787 = vmatpush1.msra.mxu0 %v214
    %1788 = vmatprep.subr.mxu0 0.0
    %1789 = vmatpush1.msra.mxu0 %v215
    %1790 = vmatprep.subr.mxu0 0.0
    %1791 = vmatpush1.msra.mxu0 %v216
    %1792 = vmatprep.subr.mxu0 0.0
    %1793 = vmatpush1.msra.mxu0 0.0
    %1794 = vmatprep.subr.mxu0 0.0
    %1795 = vmatpush1.msra.mxu0 0.0
    %1796 = vmatprep.subr.mxu0 0.0
    %1797 = vmatpush1.msra.mxu0 0.0
    %1798 = vmatprep.subr.mxu0 0.0
    %1799 = vmatpush1.msra.mxu0 0.0
    %1800 = vmatprep.subr.mxu0 0.0
    %1801 = vmatpush1.msra.mxu0 0.0
    %1802 = vmatprep.subr.mxu0 0.0
    %1803 = vmatpush1.msra.mxu0 0.0
    %1804 = vmatprep.subr.mxu0 0.0
    %1805 = vmatpush1.msra.mxu0 0.0
    %1806 = vmatprep.subr.mxu0 0.0
    %1807 = vmatpush1.msra.mxu0 0.0
    %1808 = vmatprep.subr.mxu0 0.0
    %1809 = vmatpush1.msra.mxu0 0.0
    %1810 = vmatprep.subr.mxu0 0.0
    %1811 = vmatpush1.msra.mxu0 0.0
    %1812 = vmatprep.subr.mxu0 0.0
    %1813 = vmatpush1.msra.mxu0 0.0
    %1814 = vmatprep.subr.mxu0 0.0
    %1815 = vmatpush1.msra.mxu0 0.0
    %1816 = vmatprep.subr.mxu0 0.0
    %1817 = vmatpush1.msra.mxu0 0.0
    %1818 = vmatprep.subr.mxu0 0.0
    %1819 = vmatpush1.msra.mxu0 0.0
    %1820 = vmatprep.subr.mxu0 0.0
    %1821 = vmatpush1.msra.mxu0 0.0
    %1822 = vmatprep.subr.mxu0 0.0
    %1823 = vmatpush1.msra.mxu0 0.0
    %1824 = vmatprep.subr.mxu0 0.0
    %1825 = vmatpush1.msra.mxu0 0.0
    %1826 = vmatprep.subr.mxu0 0.0
    %1827 = vmatpush1.msra.mxu0 0.0
    %1828 = vmatprep.subr.mxu0 0.0
    %1829 = vmatpush1.msra.mxu0 0.0
    %1830 = vmatprep.subr.mxu0 0.0
    %1831 = vmatpush1.msra.mxu0 0.0
    %1832 = vmatprep.subr.mxu0 0.0
    %1833 = vmatpush1.msra.mxu0 0.0
    %1834 = vmatprep.subr.mxu0 0.0
    %1835 = vmatpush1.msra.mxu0 0.0
    %1836 = vmatprep.subr.mxu0 0.0
    %1837 = vmatpush1.msra.mxu0 0.0
    %1838 = vmatprep.subr.mxu0 0.0
    %1839 = vmatpush1.msra.mxu0 0.0
    %1840 = vmatprep.subr.mxu0 0.0
    %1841 = vmatpush1.msra.mxu0 0.0
    %1842 = vmatprep.subr.mxu0 0.0
    %1843 = vmatpush1.msra.mxu0 0.0
    %1844 = vmatprep.subr.mxu0 0.0
    %1845 = vmatpush1.msra.mxu0 0.0
    %1846 = vmatprep.subr.mxu0 0.0
    %1847 = vmatpush1.msra.mxu0 0.0
    %1848 = vmatprep.mubr.f32.mxu0 0.0
    %1849 = vmatmul.mubr.f32.gmra.mrb[0].mxu0 %v1779
    %v1850 = vpop.f32.mrb[0].mxu0
    %v1851 = vadd.f32 %v1777, %v1850
    %v1852 = vpop.f32.mrb[0].mxu0
    %1853 = vmatprep.mubr.f32.mxu0 0.0
    %1854 = vmatmul.mubr.f32.gmra.mrb[0].mxu0 %v1782
    %v1855 = vpop.f32.mrb[0].mxu0
    %v1856 = vadd.f32 %v1777, %v1855
    %v1857 = vpop.f32.mrb[0].mxu0
    %1858 = vdwg.mxu0
    %v1859 = vmax.f32 %v1851, 0.0
    %v1860 = vmax.f32 %v1856, 0.0
    %v1861 = vlaneseq
    %v1862 = vshrl.u32 %v1861, 7
    %v1863 = vsub.s32 3, %v1862
    %v1864 = vrot.slane %v225, %v1863
    %vm1865 = vcmask 523264
    %v1867 = vsel %vm1865, %v1859, 0
    %v1870 = vsel %vm1865, %v1860, 0
    %1872 = vmatprep.subr.mxu0 0.0
    %1873 = vmatpush1.msra.mxu0 %v217
    %1874 = vmatprep.subr.mxu0 0.0
    %1875 = vmatpush1.msra.mxu0 %v218
    %1876 = vmatprep.subr.mxu0 0.0
    %1877 = vmatpush1.msra.mxu0 %v219
    %1878 = vmatprep.subr.mxu0 0.0
    %1879 = vmatpush1.msra.mxu0 %v220
    %1880 = vmatprep.subr.mxu0 0.0
    %1881 = vmatpush1.msra.mxu0 %v221
    %1882 = vmatprep.subr.mxu0 0.0
    %1883 = vmatpush1.msra.mxu0 %v222
    %1884 = vmatprep.subr.mxu0 0.0
    %1885 = vmatpush1.msra.mxu0 %v223
    %1886 = vmatprep.subr.mxu0 0.0
    %1887 = vmatpush1.msra.mxu0 %v224
    %1888 = vmatprep.subr.mxu0 0.0
    %1889 = vmatpush1.msra.mxu0 0.0
    %1890 = vmatprep.subr.mxu0 0.0
    %1891 = vmatpush1.msra.mxu0 0.0
    %1892 = vmatprep.subr.mxu0 0.0
    %1893 = vmatpush1.msra.mxu0 0.0
    %1894 = vmatprep.subr.mxu0 0.0
    %1895 = vmatpush1.msra.mxu0 0.0
    %1896 = vmatprep.subr.mxu0 0.0
    %1897 = vmatpush1.msra.mxu0 0.0
    %1898 = vmatprep.subr.mxu0 0.0
    %1899 = vmatpush1.msra.mxu0 0.0
    %1900 = vmatprep.subr.mxu0 0.0
    %1901 = vmatpush1.msra.mxu0 0.0
    %1902 = vmatprep.subr.mxu0 0.0
    %1903 = vmatpush1.msra.mxu0 0.0
    %1904 = vmatprep.subr.mxu0 0.0
    %1905 = vmatpush1.msra.mxu0 0.0
    %1906 = vmatprep.subr.mxu0 0.0
    %1907 = vmatpush1.msra.mxu0 0.0
    %1908 = vmatprep.subr.mxu0 0.0
    %1909 = vmatpush1.msra.mxu0 0.0
    %1910 = vmatprep.subr.mxu0 0.0
    %1911 = vmatpush1.msra.mxu0 0.0
    %1912 = vmatprep.subr.mxu0 0.0
    %1913 = vmatpush1.msra.mxu0 0.0
    %1914 = vmatprep.subr.mxu0 0.0
    %1915 = vmatpush1.msra.mxu0 0.0
    %1916 = vmatprep.subr.mxu0 0.0
    %1917 = vmatpush1.msra.mxu0 0.0
    %1918 = vmatprep.subr.mxu0 0.0
    %1919 = vmatpush1.msra.mxu0 0.0
    %1920 = vmatprep.subr.mxu0 0.0
    %1921 = vmatpush1.msra.mxu0 0.0
    %1922 = vmatprep.subr.mxu0 0.0
    %1923 = vmatpush1.msra.mxu0 0.0
    %1924 = vmatprep.subr.mxu0 0.0
    %1925 = vmatpush1.msra.mxu0 0.0
    %1926 = vmatprep.subr.mxu0 0.0
    %1927 = vmatpush1.msra.mxu0 0.0
    %1928 = vmatprep.subr.mxu0 0.0
    %1929 = vmatpush1.msra.mxu0 0.0
    %1930 = vmatprep.subr.mxu0 0.0
    %1931 = vmatpush1.msra.mxu0 0.0
    %1932 = vmatprep.subr.mxu0 0.0
    %1933 = vmatpush1.msra.mxu0 0.0
    %1934 = vmatprep.subr.mxu0 0.0
    %1935 = vmatpush1.msra.mxu0 0.0
    %1936 = vmatprep.mubr.f32.mxu0 0.0
    %1937 = vmatmul.mubr.f32.gmra.mrb[0].mxu0 %v1867
    %v1938 = vpop.f32.mrb[0].mxu0
    %v1939 = vadd.f32 %v1864, %v1938
    %v1940 = vpop.f32.mrb[0].mxu0
    %1941 = vmatprep.mubr.f32.mxu0 0.0
    %1942 = vmatmul.mubr.f32.gmra.mrb[0].mxu0 %v1870
    %v1943 = vpop.f32.mrb[0].mxu0
    %v1944 = vadd.f32 %v1864, %v1943
    %v1945 = vpop.f32.mrb[0].mxu0
    %1946 = vdwg.mxu0
    %v1947 = vadd.f32 %v1772, %v1939
    %v1948 = vadd.f32 %v1773, %v1944
    %v1949 = vsel %vm76, %v1947, 0.0
    %1950 = vadd.xlane.f32.xlu0 %v1949
    %v1951 = vpop.xlane.xlu0 %1950
    %v1952 = vsel %vm76, %v1948, 0.0
    %1953 = vadd.xlane.f32.xlu0 %v1952
    %v1954 = vpop.xlane.xlu0 %1953
    %v1955 = vmul.f32 %v1951, %v1741
    %v1956 = vmul.f32 %v1954, %v1741
    %v1957 = vsub.f32 %v1947, %v1955
    %v1958 = vsub.f32 %v1948, %v1956
    %v1959 = vmul.f32 %v1957, %v1957
    %v1960 = vmul.f32 %v1958, %v1958
    %v1961 = vsel %vm76, %v1959, 0.0
    %1962 = vadd.xlane.f32.xlu0 %v1961
    %v1963 = vpop.xlane.xlu0 %1962
    %v1964 = vsel %vm76, %v1960, 0.0
    %1965 = vadd.xlane.f32.xlu0 %v1964
    %v1966 = vpop.xlane.xlu0 %1965
    %v1967 = vmul.f32 %v1963, %v1741
    %v1968 = vmul.f32 %v1966, %v1741
    %v1969 = vadd.f32 %v1967, 1e-05
    %v1970 = vadd.f32 %v1968, 1e-05
    %v1971 = vrsqrt.pop %v1969
    %v1972 = vrsqrt.pop %v1970
    %v1973 = vmul.f32 %v1957, %v1971
    %v1974 = vmul.f32 %v1958, %v1972
    %v1975 = vlaneseq
    %v1976 = vshrl.u32 %v1975, 7
    %v1977 = vsub.s32 6, %v1976
    %v1978 = vrot.slane %v225, %v1977
    %v1979 = vmul.f32 %v1973, %v1978
    %v1980 = vmul.f32 %v1974, %v1978
    %v1981 = vlaneseq
    %v1982 = vshrl.u32 %v1981, 7
    %v1983 = vsub.s32 7, %v1982
    %v1984 = vrot.slane %v225, %v1983
    %v1985 = vadd.f32 %v1979, %v1984
    %v1986 = vadd.f32 %v1980, %v1984
    %v1987 = vld [vmem:[#allocation5 + $0xa8] sm:$0xff]
    %v1988 = vld [vmem:[#allocation5 + $0xb0] sm:$0xff]
    %v1989 = vld [vmem:[#allocation5 + $0xb8] sm:$0xff]
    %v1990 = vld [vmem:[#allocation5 + $0xc0] sm:$0xff]
    %v1991 = vld [vmem:[#allocation5 + $0xc8] sm:$0xff]
    %v1992 = vld [vmem:[#allocation5 + $0xd0] sm:$0xff]
    %v1993 = vld [vmem:[#allocation5 + $0xd8] sm:$0xff]
    %v1994 = vld [vmem:[#allocation5 + $0xe0] sm:$0xff]
    %v1995 = vld [vmem:[#allocation5 + $0xe8] sm:$0xff]
    %v1996 = vld [vmem:[#allocation5 + $0xf0] sm:$0xff]
    %v1997 = vld [vmem:[#allocation5 + $0xf8] sm:$0xff]
    %v1998 = vld [vmem:[#allocation5 + $0x100] sm:$0xff]
    %v1999 = vld [vmem:[#allocation5 + $0x108] sm:$0xff]
    %v2000 = vld [vmem:[#allocation5 + $0x110] sm:$0xff]
    %v2001 = vld [vmem:[#allocation5 + $0x118] sm:$0xff]
    %v2002 = vld [vmem:[#allocation5 + $0x120] sm:$0xff]
    %v2003 = vld [vmem:[#allocation5 + $0x128] sm:$0xff]
    %v2004 = vld [vmem:[#allocation5 + $0x130] sm:$0xff]
    %v2005 = vld [vmem:[#allocation5 + $0x138] sm:$0xff]
    %v2006 = vld [vmem:[#allocation5 + $0x140] sm:$0xff]
    %v2007 = vld [vmem:[#allocation5 + $0x148] sm:$0xff]
    %v2008 = vlaneseq
    %v2009 = vshrl.u32 %v2008, 7
    %v2010 = vsub.s32 0, %v2009
    %v2011 = vrot.slane %v2007, %v2010
    %v2013 = vsel %vm76, %v1985, 0
    %v2016 = vsel %vm76, %v1986, 0
    %2018 = vmatprep.subr.mxu0 0.0
    %2019 = vmatpush1.msra.mxu0 %v1987
    %2020 = vmatprep.subr.mxu0 0.0
    %2021 = vmatpush1.msra.mxu0 %v1988
    %2022 = vmatprep.subr.mxu0 0.0
    %2023 = vmatpush1.msra.mxu0 %v1989
    %2024 = vmatprep.subr.mxu0 0.0
    %2025 = vmatpush1.msra.mxu0 %v1990
    %2026 = vmatprep.subr.mxu0 0.0
    %2027 = vmatpush1.msra.mxu0 0.0
    %2028 = vmatprep.subr.mxu0 0.0
    %2029 = vmatpush1.msra.mxu0 0.0
    %2030 = vmatprep.subr.mxu0 0.0
    %2031 = vmatpush1.msra.mxu0 0.0
    %2032 = vmatprep.subr.mxu0 0.0
    %2033 = vmatpush1.msra.mxu0 0.0
    %2034 = vmatprep.subr.mxu0 0.0
    %2035 = vmatpush1.msra.mxu0 0.0
    %2036 = vmatprep.subr.mxu0 0.0
    %2037 = vmatpush1.msra.mxu0 0.0
    %2038 = vmatprep.subr.mxu0 0.0
    %2039 = vmatpush1.msra.mxu0 0.0
    %2040 = vmatprep.subr.mxu0 0.0
    %2041 = vmatpush1.msra.mxu0 0.0
    %2042 = vmatprep.subr.mxu0 0.0
    %2043 = vmatpush1.msra.mxu0 0.0
    %2044 = vmatprep.subr.mxu0 0.0
    %2045 = vmatpush1.msra.mxu0 0.0
    %2046 = vmatprep.subr.mxu0 0.0
    %2047 = vmatpush1.msra.mxu0 0.0
    %2048 = vmatprep.subr.mxu0 0.0
    %2049 = vmatpush1.msra.mxu0 0.0
    %2050 = vmatprep.subr.mxu0 0.0
    %2051 = vmatpush1.msra.mxu0 0.0
    %2052 = vmatprep.subr.mxu0 0.0
    %2053 = vmatpush1.msra.mxu0 0.0
    %2054 = vmatprep.subr.mxu0 0.0
    %2055 = vmatpush1.msra.mxu0 0.0
    %2056 = vmatprep.subr.mxu0 0.0
    %2057 = vmatpush1.msra.mxu0 0.0
    %2058 = vmatprep.subr.mxu0 0.0
    %2059 = vmatpush1.msra.mxu0 0.0
    %2060 = vmatprep.subr.mxu0 0.0
    %2061 = vmatpush1.msra.mxu0 0.0
    %2062 = vmatprep.subr.mxu0 0.0
    %2063 = vmatpush1.msra.mxu0 0.0
    %2064 = vmatprep.subr.mxu0 0.0
    %2065 = vmatpush1.msra.mxu0 0.0
    %2066 = vmatprep.subr.mxu0 0.0
    %2067 = vmatpush1.msra.mxu0 0.0
    %2068 = vmatprep.subr.mxu0 0.0
    %2069 = vmatpush1.msra.mxu0 0.0
    %2070 = vmatprep.subr.mxu0 0.0
    %2071 = vmatpush1.msra.mxu0 0.0
    %2072 = vmatprep.subr.mxu0 0.0
    %2073 = vmatpush1.msra.mxu0 0.0
    %2074 = vmatprep.subr.mxu0 0.0
    %2075 = vmatpush1.msra.mxu0 0.0
    %2076 = vmatprep.subr.mxu0 0.0
    %2077 = vmatpush1.msra.mxu0 0.0
    %2078 = vmatprep.subr.mxu0 0.0
    %2079 = vmatpush1.msra.mxu0 0.0
    %2080 = vmatprep.subr.mxu0 0.0
    %2081 = vmatpush1.msra.mxu0 0.0
    %2082 = vmatprep.mubr.f32.mxu0 0.0
    %2083 = vmatmul.mubr.f32.gmra.mrb[0].mxu0 %v2013
    %v2084 = vpop.f32.mrb[0].mxu0
    %v2085 = vadd.f32 %v2011, %v2084
    %v2086 = vpop.f32.mrb[0].mxu0
    %2087 = vmatprep.mubr.f32.mxu0 0.0
    %2088 = vmatmul.mubr.f32.gmra.mrb[0].mxu0 %v2016
    %v2089 = vpop.f32.mrb[0].mxu0
    %v2090 = vadd.f32 %v2011, %v2089
    %v2091 = vpop.f32.mrb[0].mxu0
    %2092 = vdwg.mxu0
    %v2093 = vmul.f32 %v2085, 0.35355338
    %v2094 = vmul.f32 %v2090, 0.35355338
    %v2095 = vmul.f32 %v2093, %v192
    %v2096 = vmul.f32 %v2094, %v192
    %2098 = vrot.lane.b32.xlu0 %v2085, 96
    %v2099 = vpop.permute.xlu0 %2098
    %v2101 = vsel %vm76, %v2095, 0
    %v2103 = vsel %vm76, %v2099, 0
    %2105 = vmatprep.subr.mxu0 0.0
    %2106 = vmatpush1.xpose.msra.mxu0 %v2103
    %2107 = vmatprep.subr.mxu0 0.0
    %2108 = vmatpush1.xpose.msra.mxu0 0.0
    %2109 = vmatprep.subr.mxu0 0.0
    %2110 = vmatpush1.xpose.msra.mxu0 0.0
    %2111 = vmatprep.subr.mxu0 0.0
    %2112 = vmatpush1.xpose.msra.mxu0 0.0
    %2113 = vmatprep.subr.mxu0 0.0
    %2114 = vmatpush1.xpose.msra.mxu0 0.0
    %2115 = vmatprep.subr.mxu0 0.0
    %2116 = vmatpush1.xpose.msra.mxu0 0.0
    %2117 = vmatprep.subr.mxu0 0.0
    %2118 = vmatpush1.xpose.msra.mxu0 0.0
    %2119 = vmatprep.subr.mxu0 0.0
    %2120 = vmatpush1.xpose.msra.mxu0 0.0
    %2121 = vmatprep.subr.mxu0 0.0
    %2122 = vmatpush1.xpose.msra.mxu0 0.0
    %2123 = vmatprep.subr.mxu0 0.0
    %2124 = vmatpush1.xpose.msra.mxu0 0.0
    %2125 = vmatprep.subr.mxu0 0.0
    %2126 = vmatpush1.xpose.msra.mxu0 0.0
    %2127 = vmatprep.subr.mxu0 0.0
    %2128 = vmatpush1.xpose.msra.mxu0 0.0
    %2129 = vmatprep.subr.mxu0 0.0
    %2130 = vmatpush1.xpose.msra.mxu0 0.0
    %2131 = vmatprep.subr.mxu0 0.0
    %2132 = vmatpush1.xpose.msra.mxu0 0.0
    %2133 = vmatprep.subr.mxu0 0.0
    %2134 = vmatpush1.xpose.msra.mxu0 0.0
    %2135 = vmatprep.subr.mxu0 0.0
    %2136 = vmatpush1.xpose.msra.mxu0 0.0
    %2137 = vmatprep.subr.mxu0 0.0
    %2138 = vmatpush1.xpose.msra.mxu0 0.0
    %2139 = vmatprep.subr.mxu0 0.0
    %2140 = vmatpush1.xpose.msra.mxu0 0.0
    %2141 = vmatprep.subr.mxu0 0.0
    %2142 = vmatpush1.xpose.msra.mxu0 0.0
    %2143 = vmatprep.subr.mxu0 0.0
    %2144 = vmatpush1.xpose.msra.mxu0 0.0
    %2145 = vmatprep.subr.mxu0 0.0
    %2146 = vmatpush1.xpose.msra.mxu0 0.0
    %2147 = vmatprep.subr.mxu0 0.0
    %2148 = vmatpush1.xpose.msra.mxu0 0.0
    %2149 = vmatprep.subr.mxu0 0.0
    %2150 = vmatpush1.xpose.msra.mxu0 0.0
    %2151 = vmatprep.subr.mxu0 0.0
    %2152 = vmatpush1.xpose.msra.mxu0 0.0
    %2153 = vmatprep.subr.mxu0 0.0
    %2154 = vmatpush1.xpose.msra.mxu0 0.0
    %2155 = vmatprep.subr.mxu0 0.0
    %2156 = vmatpush1.xpose.msra.mxu0 0.0
    %2157 = vmatprep.subr.mxu0 0.0
    %2158 = vmatpush1.xpose.msra.mxu0 0.0
    %2159 = vmatprep.subr.mxu0 0.0
    %2160 = vmatpush1.xpose.msra.mxu0 0.0
    %2161 = vmatprep.subr.mxu0 0.0
    %2162 = vmatpush1.xpose.msra.mxu0 0.0
    %2163 = vmatprep.subr.mxu0 0.0
    %2164 = vmatpush1.xpose.msra.mxu0 0.0
    %2165 = vmatprep.subr.mxu0 0.0
    %2166 = vmatpush1.xpose.msra.mxu0 0.0
    %2167 = vmatprep.subr.mxu0 0.0
    %2168 = vmatpush1.xpose.msra.mxu0 0.0
    %2169 = vmatprep.mubr.f32.mxu0 0.0
    %2170 = vmatmul.mubr.f32.gmra.mrb[0].mxu0 %v2101
    %v2171 = vpop.f32.mrb[0].mxu0
    %v2172 = vadd.f32 %v187, %v2171
    %v2173 = vpop.f32.mrb[0].mxu0
    %2174 = vdwg.mxu0
    %2176 = vrot.lane.b32.xlu0 %v2090, 96
    %v2177 = vpop.permute.xlu0 %2176
    %v2179 = vsel %vm76, %v2096, 0
    %v2181 = vsel %vm76, %v2177, 0
    %2183 = vmatprep.subr.mxu0 0.0
    %2184 = vmatpush1.xpose.msra.mxu0 %v2181
    %2185 = vmatprep.subr.mxu0 0.0
    %2186 = vmatpush1.xpose.msra.mxu0 0.0
    %2187 = vmatprep.subr.mxu0 0.0
    %2188 = vmatpush1.xpose.msra.mxu0 0.0
    %2189 = vmatprep.subr.mxu0 0.0
    %2190 = vmatpush1.xpose.msra.mxu0 0.0
    %2191 = vmatprep.subr.mxu0 0.0
    %2192 = vmatpush1.xpose.msra.mxu0 0.0
    %2193 = vmatprep.subr.mxu0 0.0
    %2194 = vmatpush1.xpose.msra.mxu0 0.0
    %2195 = vmatprep.subr.mxu0 0.0
    %2196 = vmatpush1.xpose.msra.mxu0 0.0
    %2197 = vmatprep.subr.mxu0 0.0
    %2198 = vmatpush1.xpose.msra.mxu0 0.0
    %2199 = vmatprep.subr.mxu0 0.0
    %2200 = vmatpush1.xpose.msra.mxu0 0.0
    %2201 = vmatprep.subr.mxu0 0.0
    %2202 = vmatpush1.xpose.msra.mxu0 0.0
    %2203 = vmatprep.subr.mxu0 0.0
    %2204 = vmatpush1.xpose.msra.mxu0 0.0
    %2205 = vmatprep.subr.mxu0 0.0
    %2206 = vmatpush1.xpose.msra.mxu0 0.0
    %2207 = vmatprep.subr.mxu0 0.0
    %2208 = vmatpush1.xpose.msra.mxu0 0.0
    %2209 = vmatprep.subr.mxu0 0.0
    %2210 = vmatpush1.xpose.msra.mxu0 0.0
    %2211 = vmatprep.subr.mxu0 0.0
    %2212 = vmatpush1.xpose.msra.mxu0 0.0
    %2213 = vmatprep.subr.mxu0 0.0
    %2214 = vmatpush1.xpose.msra.mxu0 0.0
    %2215 = vmatprep.subr.mxu0 0.0
    %2216 = vmatpush1.xpose.msra.mxu0 0.0
    %2217 = vmatprep.subr.mxu0 0.0
    %2218 = vmatpush1.xpose.msra.mxu0 0.0
    %2219 = vmatprep.subr.mxu0 0.0
    %2220 = vmatpush1.xpose.msra.mxu0 0.0
    %2221 = vmatprep.subr.mxu0 0.0
    %2222 = vmatpush1.xpose.msra.mxu0 0.0
    %2223 = vmatprep.subr.mxu0 0.0
    %2224 = vmatpush1.xpose.msra.mxu0 0.0
    %2225 = vmatprep.subr.mxu0 0.0
    %2226 = vmatpush1.xpose.msra.mxu0 0.0
    %2227 = vmatprep.subr.mxu0 0.0
    %2228 = vmatpush1.xpose.msra.mxu0 0.0
    %2229 = vmatprep.subr.mxu0 0.0
    %2230 = vmatpush1.xpose.msra.mxu0 0.0
    %2231 = vmatprep.subr.mxu0 0.0
    %2232 = vmatpush1.xpose.msra.mxu0 0.0
    %2233 = vmatprep.subr.mxu0 0.0
    %2234 = vmatpush1.xpose.msra.mxu0 0.0
    %2235 = vmatprep.subr.mxu0 0.0
    %2236 = vmatpush1.xpose.msra.mxu0 0.0
    %2237 = vmatprep.subr.mxu0 0.0
    %2238 = vmatpush1.xpose.msra.mxu0 0.0
    %2239 = vmatprep.subr.mxu0 0.0
    %2240 = vmatpush1.xpose.msra.mxu0 0.0
    %2241 = vmatprep.subr.mxu0 0.0
    %2242 = vmatpush1.xpose.msra.mxu0 0.0
    %2243 = vmatprep.subr.mxu0 0.0
    %2244 = vmatpush1.xpose.msra.mxu0 0.0
    %2245 = vmatprep.subr.mxu0 0.0
    %2246 = vmatpush1.xpose.msra.mxu0 0.0
    %2247 = vmatprep.mubr.f32.mxu0 0.0
    %2248 = vmatmul.mubr.f32.gmra.mrb[0].mxu0 %v2179
    %v2249 = vpop.f32.mrb[0].mxu0
    %v2250 = vadd.f32 %v188, %v2249
    %v2251 = vpop.f32.mrb[0].mxu0
    %2252 = vdwg.mxu0
    %v2253 = vsel %vm471, %v2172, -inf
    %2254 = vmax.xlane.f32.xlu0 %v2253
    %v2255 = vpop.xlane.xlu0 %2254
    %v2256 = vsel %vm471, %v2250, -inf
    %2257 = vmax.xlane.f32.xlu0 %v2256
    %v2258 = vpop.xlane.xlu0 %2257
    %v2259 = vsub.f32 %v2172, %v2255
    %v2260 = vsub.f32 %v2250, %v2258
    %v2261 = vmul.f32 %v2259, 1.442695
    %v2262 = vpow.pop %v2261
    %v2263 = vmul.f32 %v2260, 1.442695
    %v2264 = vpow.pop %v2263
    %v2265 = vsel %vm471, %v2262, 0.0
    %2266 = vadd.xlane.f32.xlu0 %v2265
    %v2267 = vpop.xlane.xlu0 %2266
    %v2268 = vsel %vm471, %v2264, 0.0
    %2269 = vadd.xlane.f32.xlu0 %v2268
    %v2270 = vpop.xlane.xlu0 %2269
    %v2271 = vrcp.pop %v2267
    %v2272 = vmul.f32 %v2262, %v2271
    %v2273 = vrcp.pop %v2270
    %v2274 = vmul.f32 %v2264, %v2273
    %v2275 = vmul.f32 %v2085, %v496
    %v2276 = vmul.f32 %v2090, %v496
    %v2277 = vmul.f32 %v2093, %v196
    %v2278 = vmul.f32 %v2094, %v196
    %v2280 = vsel %vm76, %v2277, 0
    %2282 = vmatprep.subr.mxu0 0.0
    %2283 = vmatpush1.xpose.msra.mxu0 %v2103
    %2284 = vmatprep.subr.mxu0 0.0
    %2285 = vmatpush1.xpose.msra.mxu0 0.0
    %2286 = vmatprep.subr.mxu0 0.0
    %2287 = vmatpush1.xpose.msra.mxu0 0.0
    %2288 = vmatprep.subr.mxu0 0.0
    %2289 = vmatpush1.xpose.msra.mxu0 0.0
    %2290 = vmatprep.subr.mxu0 0.0
    %2291 = vmatpush1.xpose.msra.mxu0 0.0
    %2292 = vmatprep.subr.mxu0 0.0
    %2293 = vmatpush1.xpose.msra.mxu0 0.0
    %2294 = vmatprep.subr.mxu0 0.0
    %2295 = vmatpush1.xpose.msra.mxu0 0.0
    %2296 = vmatprep.subr.mxu0 0.0
    %2297 = vmatpush1.xpose.msra.mxu0 0.0
    %2298 = vmatprep.subr.mxu0 0.0
    %2299 = vmatpush1.xpose.msra.mxu0 0.0
    %2300 = vmatprep.subr.mxu0 0.0
    %2301 = vmatpush1.xpose.msra.mxu0 0.0
    %2302 = vmatprep.subr.mxu0 0.0
    %2303 = vmatpush1.xpose.msra.mxu0 0.0
    %2304 = vmatprep.subr.mxu0 0.0
    %2305 = vmatpush1.xpose.msra.mxu0 0.0
    %2306 = vmatprep.subr.mxu0 0.0
    %2307 = vmatpush1.xpose.msra.mxu0 0.0
    %2308 = vmatprep.subr.mxu0 0.0
    %2309 = vmatpush1.xpose.msra.mxu0 0.0
    %2310 = vmatprep.subr.mxu0 0.0
    %2311 = vmatpush1.xpose.msra.mxu0 0.0
    %2312 = vmatprep.subr.mxu0 0.0
    %2313 = vmatpush1.xpose.msra.mxu0 0.0
    %2314 = vmatprep.subr.mxu0 0.0
    %2315 = vmatpush1.xpose.msra.mxu0 0.0
    %2316 = vmatprep.subr.mxu0 0.0
    %2317 = vmatpush1.xpose.msra.mxu0 0.0
    %2318 = vmatprep.subr.mxu0 0.0
    %2319 = vmatpush1.xpose.msra.mxu0 0.0
    %2320 = vmatprep.subr.mxu0 0.0
    %2321 = vmatpush1.xpose.msra.mxu0 0.0
    %2322 = vmatprep.subr.mxu0 0.0
    %2323 = vmatpush1.xpose.msra.mxu0 0.0
    %2324 = vmatprep.subr.mxu0 0.0
    %2325 = vmatpush1.xpose.msra.mxu0 0.0
    %2326 = vmatprep.subr.mxu0 0.0
    %2327 = vmatpush1.xpose.msra.mxu0 0.0
    %2328 = vmatprep.subr.mxu0 0.0
    %2329 = vmatpush1.xpose.msra.mxu0 0.0
    %2330 = vmatprep.subr.mxu0 0.0
    %2331 = vmatpush1.xpose.msra.mxu0 0.0
    %2332 = vmatprep.subr.mxu0 0.0
    %2333 = vmatpush1.xpose.msra.mxu0 0.0
    %2334 = vmatprep.subr.mxu0 0.0
    %2335 = vmatpush1.xpose.msra.mxu0 0.0
    %2336 = vmatprep.subr.mxu0 0.0
    %2337 = vmatpush1.xpose.msra.mxu0 0.0
    %2338 = vmatprep.subr.mxu0 0.0
    %2339 = vmatpush1.xpose.msra.mxu0 0.0
    %2340 = vmatprep.subr.mxu0 0.0
    %2341 = vmatpush1.xpose.msra.mxu0 0.0
    %2342 = vmatprep.subr.mxu0 0.0
    %2343 = vmatpush1.xpose.msra.mxu0 0.0
    %2344 = vmatprep.subr.mxu0 0.0
    %2345 = vmatpush1.xpose.msra.mxu0 0.0
    %2346 = vmatprep.mubr.f32.mxu0 0.0
    %2347 = vmatmul.mubr.f32.gmra.mrb[0].mxu0 %v2280
    %v2348 = vpop.f32.mrb[0].mxu0
    %v2349 = vadd.f32 %v187, %v2348
    %v2350 = vpop.f32.mrb[0].mxu0
    %2351 = vdwg.mxu0
    %v2353 = vsel %vm76, %v2278, 0
    %2355 = vmatprep.subr.mxu0 0.0
    %2356 = vmatpush1.xpose.msra.mxu0 %v2181
    %2357 = vmatprep.subr.mxu0 0.0
    %2358 = vmatpush1.xpose.msra.mxu0 0.0
    %2359 = vmatprep.subr.mxu0 0.0
    %2360 = vmatpush1.xpose.msra.mxu0 0.0
    %2361 = vmatprep.subr.mxu0 0.0
    %2362 = vmatpush1.xpose.msra.mxu0 0.0
    %2363 = vmatprep.subr.mxu0 0.0
    %2364 = vmatpush1.xpose.msra.mxu0 0.0
    %2365 = vmatprep.subr.mxu0 0.0
    %2366 = vmatpush1.xpose.msra.mxu0 0.0
    %2367 = vmatprep.subr.mxu0 0.0
    %2368 = vmatpush1.xpose.msra.mxu0 0.0
    %2369 = vmatprep.subr.mxu0 0.0
    %2370 = vmatpush1.xpose.msra.mxu0 0.0
    %2371 = vmatprep.subr.mxu0 0.0
    %2372 = vmatpush1.xpose.msra.mxu0 0.0
    %2373 = vmatprep.subr.mxu0 0.0
    %2374 = vmatpush1.xpose.msra.mxu0 0.0
    %2375 = vmatprep.subr.mxu0 0.0
    %2376 = vmatpush1.xpose.msra.mxu0 0.0
    %2377 = vmatprep.subr.mxu0 0.0
    %2378 = vmatpush1.xpose.msra.mxu0 0.0
    %2379 = vmatprep.subr.mxu0 0.0
    %2380 = vmatpush1.xpose.msra.mxu0 0.0
    %2381 = vmatprep.subr.mxu0 0.0
    %2382 = vmatpush1.xpose.msra.mxu0 0.0
    %2383 = vmatprep.subr.mxu0 0.0
    %2384 = vmatpush1.xpose.msra.mxu0 0.0
    %2385 = vmatprep.subr.mxu0 0.0
    %2386 = vmatpush1.xpose.msra.mxu0 0.0
    %2387 = vmatprep.subr.mxu0 0.0
    %2388 = vmatpush1.xpose.msra.mxu0 0.0
    %2389 = vmatprep.subr.mxu0 0.0
    %2390 = vmatpush1.xpose.msra.mxu0 0.0
    %2391 = vmatprep.subr.mxu0 0.0
    %2392 = vmatpush1.xpose.msra.mxu0 0.0
    %2393 = vmatprep.subr.mxu0 0.0
    %2394 = vmatpush1.xpose.msra.mxu0 0.0
    %2395 = vmatprep.subr.mxu0 0.0
    %2396 = vmatpush1.xpose.msra.mxu0 0.0
    %2397 = vmatprep.subr.mxu0 0.0
    %2398 = vmatpush1.xpose.msra.mxu0 0.0
    %2399 = vmatprep.subr.mxu0 0.0
    %2400 = vmatpush1.xpose.msra.mxu0 0.0
    %2401 = vmatprep.subr.mxu0 0.0
    %2402 = vmatpush1.xpose.msra.mxu0 0.0
    %2403 = vmatprep.subr.mxu0 0.0
    %2404 = vmatpush1.xpose.msra.mxu0 0.0
    %2405 = vmatprep.subr.mxu0 0.0
    %2406 = vmatpush1.xpose.msra.mxu0 0.0
    %2407 = vmatprep.subr.mxu0 0.0
    %2408 = vmatpush1.xpose.msra.mxu0 0.0
    %2409 = vmatprep.subr.mxu0 0.0
    %2410 = vmatpush1.xpose.msra.mxu0 0.0
    %2411 = vmatprep.subr.mxu0 0.0
    %2412 = vmatpush1.xpose.msra.mxu0 0.0
    %2413 = vmatprep.subr.mxu0 0.0
    %2414 = vmatpush1.xpose.msra.mxu0 0.0
    %2415 = vmatprep.subr.mxu0 0.0
    %2416 = vmatpush1.xpose.msra.mxu0 0.0
    %2417 = vmatprep.subr.mxu0 0.0
    %2418 = vmatpush1.xpose.msra.mxu0 0.0
    %2419 = vmatprep.mubr.f32.mxu0 0.0
    %2420 = vmatmul.mubr.f32.gmra.mrb[0].mxu0 %v2353
    %v2421 = vpop.f32.mrb[0].mxu0
    %v2422 = vadd.f32 %v188, %v2421
    %v2423 = vpop.f32.mrb[0].mxu0
    %2424 = vdwg.mxu0
    %v2425 = vsel %vm471, %v2349, -inf
    %2426 = vmax.xlane.f32.xlu0 %v2425
    %v2427 = vpop.xlane.xlu0 %2426
    %v2428 = vsel %vm471, %v2422, -inf
    %2429 = vmax.xlane.f32.xlu0 %v2428
    %v2430 = vpop.xlane.xlu0 %2429
    %v2431 = vsub.f32 %v2349, %v2427
    %v2432 = vsub.f32 %v2422, %v2430
    %v2433 = vmul.f32 %v2431, 1.442695
    %v2434 = vpow.pop %v2433
    %v2435 = vmul.f32 %v2432, 1.442695
    %v2436 = vpow.pop %v2435
    %v2437 = vsel %vm471, %v2434, 0.0
    %2438 = vadd.xlane.f32.xlu0 %v2437
    %v2439 = vpop.xlane.xlu0 %2438
    %v2440 = vsel %vm471, %v2436, 0.0
    %2441 = vadd.xlane.f32.xlu0 %v2440
    %v2442 = vpop.xlane.xlu0 %2441
    %v2443 = vrcp.pop %v2439
    %v2444 = vmul.f32 %v2434, %v2443
    %v2445 = vrcp.pop %v2442
    %v2446 = vmul.f32 %v2436, %v2445
    %v2447 = vmul.f32 %v2085, %v672
    %v2448 = vmul.f32 %v2090, %v672
    %2450 = vrot.lane.b32.xlu0 %v2447, 64
    %v2451 = vpop.permute.xlu0 %2450
    %v2454 = vsel %vm471, %v2444, 0
    %2456 = vmatprep.subr.mxu0 0.0
    %2457 = vmatpush1.msra.mxu0 %v2451
    %2458 = vmatprep.subr.mxu0 0.0
    %2459 = vmatpush1.msra.mxu0 0.0
    %2460 = vmatprep.subr.mxu0 0.0
    %2461 = vmatpush1.msra.mxu0 0.0
    %2462 = vmatprep.subr.mxu0 0.0
    %2463 = vmatpush1.msra.mxu0 0.0
    %2464 = vmatprep.subr.mxu0 0.0
    %2465 = vmatpush1.msra.mxu0 0.0
    %2466 = vmatprep.subr.mxu0 0.0
    %2467 = vmatpush1.msra.mxu0 0.0
    %2468 = vmatprep.subr.mxu0 0.0
    %2469 = vmatpush1.msra.mxu0 0.0
    %2470 = vmatprep.subr.mxu0 0.0
    %2471 = vmatpush1.msra.mxu0 0.0
    %2472 = vmatprep.subr.mxu0 0.0
    %2473 = vmatpush1.msra.mxu0 0.0
    %2474 = vmatprep.subr.mxu0 0.0
    %2475 = vmatpush1.msra.mxu0 0.0
    %2476 = vmatprep.subr.mxu0 0.0
    %2477 = vmatpush1.msra.mxu0 0.0
    %2478 = vmatprep.subr.mxu0 0.0
    %2479 = vmatpush1.msra.mxu0 0.0
    %2480 = vmatprep.subr.mxu0 0.0
    %2481 = vmatpush1.msra.mxu0 0.0
    %2482 = vmatprep.subr.mxu0 0.0
    %2483 = vmatpush1.msra.mxu0 0.0
    %2484 = vmatprep.subr.mxu0 0.0
    %2485 = vmatpush1.msra.mxu0 0.0
    %2486 = vmatprep.subr.mxu0 0.0
    %2487 = vmatpush1.msra.mxu0 0.0
    %2488 = vmatprep.subr.mxu0 0.0
    %2489 = vmatpush1.msra.mxu0 0.0
    %2490 = vmatprep.subr.mxu0 0.0
    %2491 = vmatpush1.msra.mxu0 0.0
    %2492 = vmatprep.subr.mxu0 0.0
    %2493 = vmatpush1.msra.mxu0 0.0
    %2494 = vmatprep.subr.mxu0 0.0
    %2495 = vmatpush1.msra.mxu0 0.0
    %2496 = vmatprep.subr.mxu0 0.0
    %2497 = vmatpush1.msra.mxu0 0.0
    %2498 = vmatprep.subr.mxu0 0.0
    %2499 = vmatpush1.msra.mxu0 0.0
    %2500 = vmatprep.subr.mxu0 0.0
    %2501 = vmatpush1.msra.mxu0 0.0
    %2502 = vmatprep.subr.mxu0 0.0
    %2503 = vmatpush1.msra.mxu0 0.0
    %2504 = vmatprep.subr.mxu0 0.0
    %2505 = vmatpush1.msra.mxu0 0.0
    %2506 = vmatprep.subr.mxu0 0.0
    %2507 = vmatpush1.msra.mxu0 0.0
    %2508 = vmatprep.subr.mxu0 0.0
    %2509 = vmatpush1.msra.mxu0 0.0
    %2510 = vmatprep.subr.mxu0 0.0
    %2511 = vmatpush1.msra.mxu0 0.0
    %2512 = vmatprep.subr.mxu0 0.0
    %2513 = vmatpush1.msra.mxu0 0.0
    %2514 = vmatprep.subr.mxu0 0.0
    %2515 = vmatpush1.msra.mxu0 0.0
    %2516 = vmatprep.subr.mxu0 0.0
    %2517 = vmatpush1.msra.mxu0 0.0
    %2518 = vmatprep.subr.mxu0 0.0
    %2519 = vmatpush1.msra.mxu0 0.0
    %2520 = vmatprep.mubr.f32.mxu0 0.0
    %2521 = vmatmul.mubr.f32.gmra.mrb[0].mxu0 %v2454
    %v2522 = vpop.f32.mrb[0].mxu0
    %v2523 = vadd.f32 0.0, %v2522
    %v2524 = vpop.f32.mrb[0].mxu0
    %2525 = vdwg.mxu0
    %2527 = vrot.lane.b32.xlu0 %v2448, 64
    %v2528 = vpop.permute.xlu0 %2527
    %v2531 = vsel %vm471, %v2446, 0
    %2533 = vmatprep.subr.mxu0 0.0
    %2534 = vmatpush1.msra.mxu0 %v2528
    %2535 = vmatprep.subr.mxu0 0.0
    %2536 = vmatpush1.msra.mxu0 0.0
    %2537 = vmatprep.subr.mxu0 0.0
    %2538 = vmatpush1.msra.mxu0 0.0
    %2539 = vmatprep.subr.mxu0 0.0
    %2540 = vmatpush1.msra.mxu0 0.0
    %2541 = vmatprep.subr.mxu0 0.0
    %2542 = vmatpush1.msra.mxu0 0.0
    %2543 = vmatprep.subr.mxu0 0.0
    %2544 = vmatpush1.msra.mxu0 0.0
    %2545 = vmatprep.subr.mxu0 0.0
    %2546 = vmatpush1.msra.mxu0 0.0
    %2547 = vmatprep.subr.mxu0 0.0
    %2548 = vmatpush1.msra.mxu0 0.0
    %2549 = vmatprep.subr.mxu0 0.0
    %2550 = vmatpush1.msra.mxu0 0.0
    %2551 = vmatprep.subr.mxu0 0.0
    %2552 = vmatpush1.msra.mxu0 0.0
    %2553 = vmatprep.subr.mxu0 0.0
    %2554 = vmatpush1.msra.mxu0 0.0
    %2555 = vmatprep.subr.mxu0 0.0
    %2556 = vmatpush1.msra.mxu0 0.0
    %2557 = vmatprep.subr.mxu0 0.0
    %2558 = vmatpush1.msra.mxu0 0.0
    %2559 = vmatprep.subr.mxu0 0.0
    %2560 = vmatpush1.msra.mxu0 0.0
    %2561 = vmatprep.subr.mxu0 0.0
    %2562 = vmatpush1.msra.mxu0 0.0
    %2563 = vmatprep.subr.mxu0 0.0
    %2564 = vmatpush1.msra.mxu0 0.0
    %2565 = vmatprep.subr.mxu0 0.0
    %2566 = vmatpush1.msra.mxu0 0.0
    %2567 = vmatprep.subr.mxu0 0.0
    %2568 = vmatpush1.msra.mxu0 0.0
    %2569 = vmatprep.subr.mxu0 0.0
    %2570 = vmatpush1.msra.mxu0 0.0
    %2571 = vmatprep.subr.mxu0 0.0
    %2572 = vmatpush1.msra.mxu0 0.0
    %2573 = vmatprep.subr.mxu0 0.0
    %2574 = vmatpush1.msra.mxu0 0.0
    %2575 = vmatprep.subr.mxu0 0.0
    %2576 = vmatpush1.msra.mxu0 0.0
    %2577 = vmatprep.subr.mxu0 0.0
    %2578 = vmatpush1.msra.mxu0 0.0
    %2579 = vmatprep.subr.mxu0 0.0
    %2580 = vmatpush1.msra.mxu0 0.0
    %2581 = vmatprep.subr.mxu0 0.0
    %2582 = vmatpush1.msra.mxu0 0.0
    %2583 = vmatprep.subr.mxu0 0.0
    %2584 = vmatpush1.msra.mxu0 0.0
    %2585 = vmatprep.subr.mxu0 0.0
    %2586 = vmatpush1.msra.mxu0 0.0
    %2587 = vmatprep.subr.mxu0 0.0
    %2588 = vmatpush1.msra.mxu0 0.0
    %2589 = vmatprep.subr.mxu0 0.0
    %2590 = vmatpush1.msra.mxu0 0.0
    %2591 = vmatprep.subr.mxu0 0.0
    %2592 = vmatpush1.msra.mxu0 0.0
    %2593 = vmatprep.subr.mxu0 0.0
    %2594 = vmatpush1.msra.mxu0 0.0
    %2595 = vmatprep.subr.mxu0 0.0
    %2596 = vmatpush1.msra.mxu0 0.0
    %2597 = vmatprep.mubr.f32.mxu0 0.0
    %2598 = vmatmul.mubr.f32.gmra.mrb[0].mxu0 %v2531
    %v2599 = vpop.f32.mrb[0].mxu0
    %v2600 = vadd.f32 0.0, %v2599
    %v2601 = vpop.f32.mrb[0].mxu0
    %2602 = vdwg.mxu0
    %2604 = vrot.lane.b32.xlu0 %v2275, 64
    %v2605 = vpop.permute.xlu0 %2604
    %v2608 = vsel %vm471, %v2272, 0
    %2610 = vmatprep.subr.mxu0 0.0
    %2611 = vmatpush1.msra.mxu0 %v2605
    %2612 = vmatprep.subr.mxu0 0.0
    %2613 = vmatpush1.msra.mxu0 0.0
    %2614 = vmatprep.subr.mxu0 0.0
    %2615 = vmatpush1.msra.mxu0 0.0
    %2616 = vmatprep.subr.mxu0 0.0
    %2617 = vmatpush1.msra.mxu0 0.0
    %2618 = vmatprep.subr.mxu0 0.0
    %2619 = vmatpush1.msra.mxu0 0.0
    %2620 = vmatprep.subr.mxu0 0.0
    %2621 = vmatpush1.msra.mxu0 0.0
    %2622 = vmatprep.subr.mxu0 0.0
    %2623 = vmatpush1.msra.mxu0 0.0
    %2624 = vmatprep.subr.mxu0 0.0
    %2625 = vmatpush1.msra.mxu0 0.0
    %2626 = vmatprep.subr.mxu0 0.0
    %2627 = vmatpush1.msra.mxu0 0.0
    %2628 = vmatprep.subr.mxu0 0.0
    %2629 = vmatpush1.msra.mxu0 0.0
    %2630 = vmatprep.subr.mxu0 0.0
    %2631 = vmatpush1.msra.mxu0 0.0
    %2632 = vmatprep.subr.mxu0 0.0
    %2633 = vmatpush1.msra.mxu0 0.0
    %2634 = vmatprep.subr.mxu0 0.0
    %2635 = vmatpush1.msra.mxu0 0.0
    %2636 = vmatprep.subr.mxu0 0.0
    %2637 = vmatpush1.msra.mxu0 0.0
    %2638 = vmatprep.subr.mxu0 0.0
    %2639 = vmatpush1.msra.mxu0 0.0
    %2640 = vmatprep.subr.mxu0 0.0
    %2641 = vmatpush1.msra.mxu0 0.0
    %2642 = vmatprep.subr.mxu0 0.0
    %2643 = vmatpush1.msra.mxu0 0.0
    %2644 = vmatprep.subr.mxu0 0.0
    %2645 = vmatpush1.msra.mxu0 0.0
    %2646 = vmatprep.subr.mxu0 0.0
    %2647 = vmatpush1.msra.mxu0 0.0
    %2648 = vmatprep.subr.mxu0 0.0
    %2649 = vmatpush1.msra.mxu0 0.0
    %2650 = vmatprep.subr.mxu0 0.0
    %2651 = vmatpush1.msra.mxu0 0.0
    %2652 = vmatprep.subr.mxu0 0.0
    %2653 = vmatpush1.msra.mxu0 0.0
    %2654 = vmatprep.subr.mxu0 0.0
    %2655 = vmatpush1.msra.mxu0 0.0
    %2656 = vmatprep.subr.mxu0 0.0
    %2657 = vmatpush1.msra.mxu0 0.0
    %2658 = vmatprep.subr.mxu0 0.0
    %2659 = vmatpush1.msra.mxu0 0.0
    %2660 = vmatprep.subr.mxu0 0.0
    %2661 = vmatpush1.msra.mxu0 0.0
    %2662 = vmatprep.subr.mxu0 0.0
    %2663 = vmatpush1.msra.mxu0 0.0
    %2664 = vmatprep.subr.mxu0 0.0
    %2665 = vmatpush1.msra.mxu0 0.0
    %2666 = vmatprep.subr.mxu0 0.0
    %2667 = vmatpush1.msra.mxu0 0.0
    %2668 = vmatprep.subr.mxu0 0.0
    %2669 = vmatpush1.msra.mxu0 0.0
    %2670 = vmatprep.subr.mxu0 0.0
    %2671 = vmatpush1.msra.mxu0 0.0
    %2672 = vmatprep.subr.mxu0 0.0
    %2673 = vmatpush1.msra.mxu0 0.0
    %2674 = vmatprep.mubr.f32.mxu0 0.0
    %2675 = vmatmul.mubr.f32.gmra.mrb[0].mxu0 %v2608
    %v2676 = vpop.f32.mrb[0].mxu0
    %v2677 = vadd.f32 %v2523, %v2676
    %v2678 = vpop.f32.mrb[0].mxu0
    %2679 = vdwg.mxu0
    %2681 = vrot.lane.b32.xlu0 %v2276, 64
    %v2682 = vpop.permute.xlu0 %2681
    %v2685 = vsel %vm471, %v2274, 0
    %2687 = vmatprep.subr.mxu0 0.0
    %2688 = vmatpush1.msra.mxu0 %v2682
    %2689 = vmatprep.subr.mxu0 0.0
    %2690 = vmatpush1.msra.mxu0 0.0
    %2691 = vmatprep.subr.mxu0 0.0
    %2692 = vmatpush1.msra.mxu0 0.0
    %2693 = vmatprep.subr.mxu0 0.0
    %2694 = vmatpush1.msra.mxu0 0.0
    %2695 = vmatprep.subr.mxu0 0.0
    %2696 = vmatpush1.msra.mxu0 0.0
    %2697 = vmatprep.subr.mxu0 0.0
    %2698 = vmatpush1.msra.mxu0 0.0
    %2699 = vmatprep.subr.mxu0 0.0
    %2700 = vmatpush1.msra.mxu0 0.0
    %2701 = vmatprep.subr.mxu0 0.0
    %2702 = vmatpush1.msra.mxu0 0.0
    %2703 = vmatprep.subr.mxu0 0.0
    %2704 = vmatpush1.msra.mxu0 0.0
    %2705 = vmatprep.subr.mxu0 0.0
    %2706 = vmatpush1.msra.mxu0 0.0
    %2707 = vmatprep.subr.mxu0 0.0
    %2708 = vmatpush1.msra.mxu0 0.0
    %2709 = vmatprep.subr.mxu0 0.0
    %2710 = vmatpush1.msra.mxu0 0.0
    %2711 = vmatprep.subr.mxu0 0.0
    %2712 = vmatpush1.msra.mxu0 0.0
    %2713 = vmatprep.subr.mxu0 0.0
    %2714 = vmatpush1.msra.mxu0 0.0
    %2715 = vmatprep.subr.mxu0 0.0
    %2716 = vmatpush1.msra.mxu0 0.0
    %2717 = vmatprep.subr.mxu0 0.0
    %2718 = vmatpush1.msra.mxu0 0.0
    %2719 = vmatprep.subr.mxu0 0.0
    %2720 = vmatpush1.msra.mxu0 0.0
    %2721 = vmatprep.subr.mxu0 0.0
    %2722 = vmatpush1.msra.mxu0 0.0
    %2723 = vmatprep.subr.mxu0 0.0
    %2724 = vmatpush1.msra.mxu0 0.0
    %2725 = vmatprep.subr.mxu0 0.0
    %2726 = vmatpush1.msra.mxu0 0.0
    %2727 = vmatprep.subr.mxu0 0.0
    %2728 = vmatpush1.msra.mxu0 0.0
    %2729 = vmatprep.subr.mxu0 0.0
    %2730 = vmatpush1.msra.mxu0 0.0
    %2731 = vmatprep.subr.mxu0 0.0
    %2732 = vmatpush1.msra.mxu0 0.0
    %2733 = vmatprep.subr.mxu0 0.0
    %2734 = vmatpush1.msra.mxu0 0.0
    %2735 = vmatprep.subr.mxu0 0.0
    %2736 = vmatpush1.msra.mxu0 0.0
    %2737 = vmatprep.subr.mxu0 0.0
    %2738 = vmatpush1.msra.mxu0 0.0
    %2739 = vmatprep.subr.mxu0 0.0
    %2740 = vmatpush1.msra.mxu0 0.0
    %2741 = vmatprep.subr.mxu0 0.0
    %2742 = vmatpush1.msra.mxu0 0.0
    %2743 = vmatprep.subr.mxu0 0.0
    %2744 = vmatpush1.msra.mxu0 0.0
    %2745 = vmatprep.subr.mxu0 0.0
    %2746 = vmatpush1.msra.mxu0 0.0
    %2747 = vmatprep.subr.mxu0 0.0
    %2748 = vmatpush1.msra.mxu0 0.0
    %2749 = vmatprep.subr.mxu0 0.0
    %2750 = vmatpush1.msra.mxu0 0.0
    %2751 = vmatprep.mubr.f32.mxu0 0.0
    %2752 = vmatmul.mubr.f32.gmra.mrb[0].mxu0 %v2685
    %v2753 = vpop.f32.mrb[0].mxu0
    %v2754 = vadd.f32 %v2600, %v2753
    %v2755 = vpop.f32.mrb[0].mxu0
    %2756 = vdwg.mxu0
    %v2757 = vmul.f32 %v2093, %v200
    %v2758 = vmul.f32 %v2094, %v200
    %v2760 = vsel %vm76, %v2757, 0
    %2762 = vmatprep.subr.mxu0 0.0
    %2763 = vmatpush1.xpose.msra.mxu0 %v2103
    %2764 = vmatprep.subr.mxu0 0.0
    %2765 = vmatpush1.xpose.msra.mxu0 0.0
    %2766 = vmatprep.subr.mxu0 0.0
    %2767 = vmatpush1.xpose.msra.mxu0 0.0
    %2768 = vmatprep.subr.mxu0 0.0
    %2769 = vmatpush1.xpose.msra.mxu0 0.0
    %2770 = vmatprep.subr.mxu0 0.0
    %2771 = vmatpush1.xpose.msra.mxu0 0.0
    %2772 = vmatprep.subr.mxu0 0.0
    %2773 = vmatpush1.xpose.msra.mxu0 0.0
    %2774 = vmatprep.subr.mxu0 0.0
    %2775 = vmatpush1.xpose.msra.mxu0 0.0
    %2776 = vmatprep.subr.mxu0 0.0
    %2777 = vmatpush1.xpose.msra.mxu0 0.0
    %2778 = vmatprep.subr.mxu0 0.0
    %2779 = vmatpush1.xpose.msra.mxu0 0.0
    %2780 = vmatprep.subr.mxu0 0.0
    %2781 = vmatpush1.xpose.msra.mxu0 0.0
    %2782 = vmatprep.subr.mxu0 0.0
    %2783 = vmatpush1.xpose.msra.mxu0 0.0
    %2784 = vmatprep.subr.mxu0 0.0
    %2785 = vmatpush1.xpose.msra.mxu0 0.0
    %2786 = vmatprep.subr.mxu0 0.0
    %2787 = vmatpush1.xpose.msra.mxu0 0.0
    %2788 = vmatprep.subr.mxu0 0.0
    %2789 = vmatpush1.xpose.msra.mxu0 0.0
    %2790 = vmatprep.subr.mxu0 0.0
    %2791 = vmatpush1.xpose.msra.mxu0 0.0
    %2792 = vmatprep.subr.mxu0 0.0
    %2793 = vmatpush1.xpose.msra.mxu0 0.0
    %2794 = vmatprep.subr.mxu0 0.0
    %2795 = vmatpush1.xpose.msra.mxu0 0.0
    %2796 = vmatprep.subr.mxu0 0.0
    %2797 = vmatpush1.xpose.msra.mxu0 0.0
    %2798 = vmatprep.subr.mxu0 0.0
    %2799 = vmatpush1.xpose.msra.mxu0 0.0
    %2800 = vmatprep.subr.mxu0 0.0
    %2801 = vmatpush1.xpose.msra.mxu0 0.0
    %2802 = vmatprep.subr.mxu0 0.0
    %2803 = vmatpush1.xpose.msra.mxu0 0.0
    %2804 = vmatprep.subr.mxu0 0.0
    %2805 = vmatpush1.xpose.msra.mxu0 0.0
    %2806 = vmatprep.subr.mxu0 0.0
    %2807 = vmatpush1.xpose.msra.mxu0 0.0
    %2808 = vmatprep.subr.mxu0 0.0
    %2809 = vmatpush1.xpose.msra.mxu0 0.0
    %2810 = vmatprep.subr.mxu0 0.0
    %2811 = vmatpush1.xpose.msra.mxu0 0.0
    %2812 = vmatprep.subr.mxu0 0.0
    %2813 = vmatpush1.xpose.msra.mxu0 0.0
    %2814 = vmatprep.subr.mxu0 0.0
    %2815 = vmatpush1.xpose.msra.mxu0 0.0
    %2816 = vmatprep.subr.mxu0 0.0
    %2817 = vmatpush1.xpose.msra.mxu0 0.0
    %2818 = vmatprep.subr.mxu0 0.0
    %2819 = vmatpush1.xpose.msra.mxu0 0.0
    %2820 = vmatprep.subr.mxu0 0.0
    %2821 = vmatpush1.xpose.msra.mxu0 0.0
    %2822 = vmatprep.subr.mxu0 0.0
    %2823 = vmatpush1.xpose.msra.mxu0 0.0
    %2824 = vmatprep.subr.mxu0 0.0
    %2825 = vmatpush1.xpose.msra.mxu0 0.0
    %2826 = vmatprep.mubr.f32.mxu0 0.0
    %2827 = vmatmul.mubr.f32.gmra.mrb[0].mxu0 %v2760
    %v2828 = vpop.f32.mrb[0].mxu0
    %v2829 = vadd.f32 %v187, %v2828
    %v2830 = vpop.f32.mrb[0].mxu0
    %2831 = vdwg.mxu0
    %v2833 = vsel %vm76, %v2758, 0
    %2835 = vmatprep.subr.mxu0 0.0
    %2836 = vmatpush1.xpose.msra.mxu0 %v2181
    %2837 = vmatprep.subr.mxu0 0.0
    %2838 = vmatpush1.xpose.msra.mxu0 0.0
    %2839 = vmatprep.subr.mxu0 0.0
    %2840 = vmatpush1.xpose.msra.mxu0 0.0
    %2841 = vmatprep.subr.mxu0 0.0
    %2842 = vmatpush1.xpose.msra.mxu0 0.0
    %2843 = vmatprep.subr.mxu0 0.0
    %2844 = vmatpush1.xpose.msra.mxu0 0.0
    %2845 = vmatprep.subr.mxu0 0.0
    %2846 = vmatpush1.xpose.msra.mxu0 0.0
    %2847 = vmatprep.subr.mxu0 0.0
    %2848 = vmatpush1.xpose.msra.mxu0 0.0
    %2849 = vmatprep.subr.mxu0 0.0
    %2850 = vmatpush1.xpose.msra.mxu0 0.0
    %2851 = vmatprep.subr.mxu0 0.0
    %2852 = vmatpush1.xpose.msra.mxu0 0.0
    %2853 = vmatprep.subr.mxu0 0.0
    %2854 = vmatpush1.xpose.msra.mxu0 0.0
    %2855 = vmatprep.subr.mxu0 0.0
    %2856 = vmatpush1.xpose.msra.mxu0 0.0
    %2857 = vmatprep.subr.mxu0 0.0
    %2858 = vmatpush1.xpose.msra.mxu0 0.0
    %2859 = vmatprep.subr.mxu0 0.0
    %2860 = vmatpush1.xpose.msra.mxu0 0.0
    %2861 = vmatprep.subr.mxu0 0.0
    %2862 = vmatpush1.xpose.msra.mxu0 0.0
    %2863 = vmatprep.subr.mxu0 0.0
    %2864 = vmatpush1.xpose.msra.mxu0 0.0
    %2865 = vmatprep.subr.mxu0 0.0
    %2866 = vmatpush1.xpose.msra.mxu0 0.0
    %2867 = vmatprep.subr.mxu0 0.0
    %2868 = vmatpush1.xpose.msra.mxu0 0.0
    %2869 = vmatprep.subr.mxu0 0.0
    %2870 = vmatpush1.xpose.msra.mxu0 0.0
    %2871 = vmatprep.subr.mxu0 0.0
    %2872 = vmatpush1.xpose.msra.mxu0 0.0
    %2873 = vmatprep.subr.mxu0 0.0
    %2874 = vmatpush1.xpose.msra.mxu0 0.0
    %2875 = vmatprep.subr.mxu0 0.0
    %2876 = vmatpush1.xpose.msra.mxu0 0.0
    %2877 = vmatprep.subr.mxu0 0.0
    %2878 = vmatpush1.xpose.msra.mxu0 0.0
    %2879 = vmatprep.subr.mxu0 0.0
    %2880 = vmatpush1.xpose.msra.mxu0 0.0
    %2881 = vmatprep.subr.mxu0 0.0
    %2882 = vmatpush1.xpose.msra.mxu0 0.0
    %2883 = vmatprep.subr.mxu0 0.0
    %2884 = vmatpush1.xpose.msra.mxu0 0.0
    %2885 = vmatprep.subr.mxu0 0.0
    %2886 = vmatpush1.xpose.msra.mxu0 0.0
    %2887 = vmatprep.subr.mxu0 0.0
    %2888 = vmatpush1.xpose.msra.mxu0 0.0
    %2889 = vmatprep.subr.mxu0 0.0
    %2890 = vmatpush1.xpose.msra.mxu0 0.0
    %2891 = vmatprep.subr.mxu0 0.0
    %2892 = vmatpush1.xpose.msra.mxu0 0.0
    %2893 = vmatprep.subr.mxu0 0.0
    %2894 = vmatpush1.xpose.msra.mxu0 0.0
    %2895 = vmatprep.subr.mxu0 0.0
    %2896 = vmatpush1.xpose.msra.mxu0 0.0
    %2897 = vmatprep.subr.mxu0 0.0
    %2898 = vmatpush1.xpose.msra.mxu0 0.0
    %2899 = vmatprep.mubr.f32.mxu0 0.0
    %2900 = vmatmul.mubr.f32.gmra.mrb[0].mxu0 %v2833
    %v2901 = vpop.f32.mrb[0].mxu0
    %v2902 = vadd.f32 %v188, %v2901
    %v2903 = vpop.f32.mrb[0].mxu0
    %2904 = vdwg.mxu0
    %v2905 = vsel %vm471, %v2829, -inf
    %2906 = vmax.xlane.f32.xlu0 %v2905
    %v2907 = vpop.xlane.xlu0 %2906
    %v2908 = vsel %vm471, %v2902, -inf
    %2909 = vmax.xlane.f32.xlu0 %v2908
    %v2910 = vpop.xlane.xlu0 %2909
    %v2911 = vsub.f32 %v2829, %v2907
    %v2912 = vsub.f32 %v2902, %v2910
    %v2913 = vmul.f32 %v2911, 1.442695
    %v2914 = vpow.pop %v2913
    %v2915 = vmul.f32 %v2912, 1.442695
    %v2916 = vpow.pop %v2915
    %v2917 = vsel %vm471, %v2914, 0.0
    %2918 = vadd.xlane.f32.xlu0 %v2917
    %v2919 = vpop.xlane.xlu0 %2918
    %v2920 = vsel %vm471, %v2916, 0.0
    %2921 = vadd.xlane.f32.xlu0 %v2920
    %v2922 = vpop.xlane.xlu0 %2921
    %v2923 = vrcp.pop %v2919
    %v2924 = vmul.f32 %v2914, %v2923
    %v2925 = vrcp.pop %v2922
    %v2926 = vmul.f32 %v2916, %v2925
    %v2927 = vmul.f32 %v2085, %v1156
    %v2928 = vmul.f32 %v2090, %v1156
    %2930 = vrot.lane.b32.xlu0 %v2927, 64
    %v2931 = vpop.permute.xlu0 %2930
    %v2934 = vsel %vm471, %v2924, 0
    %2936 = vmatprep.subr.mxu0 0.0
    %2937 = vmatpush1.msra.mxu0 %v2931
    %2938 = vmatprep.subr.mxu0 0.0
    %2939 = vmatpush1.msra.mxu0 0.0
    %2940 = vmatprep.subr.mxu0 0.0
    %2941 = vmatpush1.msra.mxu0 0.0
    %2942 = vmatprep.subr.mxu0 0.0
    %2943 = vmatpush1.msra.mxu0 0.0
    %2944 = vmatprep.subr.mxu0 0.0
    %2945 = vmatpush1.msra.mxu0 0.0
    %2946 = vmatprep.subr.mxu0 0.0
    %2947 = vmatpush1.msra.mxu0 0.0
    %2948 = vmatprep.subr.mxu0 0.0
    %2949 = vmatpush1.msra.mxu0 0.0
    %2950 = vmatprep.subr.mxu0 0.0
    %2951 = vmatpush1.msra.mxu0 0.0
    %2952 = vmatprep.subr.mxu0 0.0
    %2953 = vmatpush1.msra.mxu0 0.0
    %2954 = vmatprep.subr.mxu0 0.0
    %2955 = vmatpush1.msra.mxu0 0.0
    %2956 = vmatprep.subr.mxu0 0.0
    %2957 = vmatpush1.msra.mxu0 0.0
    %2958 = vmatprep.subr.mxu0 0.0
    %2959 = vmatpush1.msra.mxu0 0.0
    %2960 = vmatprep.subr.mxu0 0.0
    %2961 = vmatpush1.msra.mxu0 0.0
    %2962 = vmatprep.subr.mxu0 0.0
    %2963 = vmatpush1.msra.mxu0 0.0
    %2964 = vmatprep.subr.mxu0 0.0
    %2965 = vmatpush1.msra.mxu0 0.0
    %2966 = vmatprep.subr.mxu0 0.0
    %2967 = vmatpush1.msra.mxu0 0.0
    %2968 = vmatprep.subr.mxu0 0.0
    %2969 = vmatpush1.msra.mxu0 0.0
    %2970 = vmatprep.subr.mxu0 0.0
    %2971 = vmatpush1.msra.mxu0 0.0
    %2972 = vmatprep.subr.mxu0 0.0
    %2973 = vmatpush1.msra.mxu0 0.0
    %2974 = vmatprep.subr.mxu0 0.0
    %2975 = vmatpush1.msra.mxu0 0.0
    %2976 = vmatprep.subr.mxu0 0.0
    %2977 = vmatpush1.msra.mxu0 0.0
    %2978 = vmatprep.subr.mxu0 0.0
    %2979 = vmatpush1.msra.mxu0 0.0
    %2980 = vmatprep.subr.mxu0 0.0
    %2981 = vmatpush1.msra.mxu0 0.0
    %2982 = vmatprep.subr.mxu0 0.0
    %2983 = vmatpush1.msra.mxu0 0.0
    %2984 = vmatprep.subr.mxu0 0.0
    %2985 = vmatpush1.msra.mxu0 0.0
    %2986 = vmatprep.subr.mxu0 0.0
    %2987 = vmatpush1.msra.mxu0 0.0
    %2988 = vmatprep.subr.mxu0 0.0
    %2989 = vmatpush1.msra.mxu0 0.0
    %2990 = vmatprep.subr.mxu0 0.0
    %2991 = vmatpush1.msra.mxu0 0.0
    %2992 = vmatprep.subr.mxu0 0.0
    %2993 = vmatpush1.msra.mxu0 0.0
    %2994 = vmatprep.subr.mxu0 0.0
    %2995 = vmatpush1.msra.mxu0 0.0
    %2996 = vmatprep.subr.mxu0 0.0
    %2997 = vmatpush1.msra.mxu0 0.0
    %2998 = vmatprep.subr.mxu0 0.0
    %2999 = vmatpush1.msra.mxu0 0.0
    %3000 = vmatprep.mubr.f32.mxu0 0.0
    %3001 = vmatmul.mubr.f32.gmra.mrb[0].mxu0 %v2934
    %v3002 = vpop.f32.mrb[0].mxu0
    %v3003 = vadd.f32 0.0, %v3002
    %v3004 = vpop.f32.mrb[0].mxu0
    %3005 = vdwg.mxu0
    %3007 = vrot.lane.b32.xlu0 %v2928, 64
    %v3008 = vpop.permute.xlu0 %3007
    %v3011 = vsel %vm471, %v2926, 0
    %3013 = vmatprep.subr.mxu0 0.0
    %3014 = vmatpush1.msra.mxu0 %v3008
    %3015 = vmatprep.subr.mxu0 0.0
    %3016 = vmatpush1.msra.mxu0 0.0
    %3017 = vmatprep.subr.mxu0 0.0
    %3018 = vmatpush1.msra.mxu0 0.0
    %3019 = vmatprep.subr.mxu0 0.0
    %3020 = vmatpush1.msra.mxu0 0.0
    %3021 = vmatprep.subr.mxu0 0.0
    %3022 = vmatpush1.msra.mxu0 0.0
    %3023 = vmatprep.subr.mxu0 0.0
    %3024 = vmatpush1.msra.mxu0 0.0
    %3025 = vmatprep.subr.mxu0 0.0
    %3026 = vmatpush1.msra.mxu0 0.0
    %3027 = vmatprep.subr.mxu0 0.0
    %3028 = vmatpush1.msra.mxu0 0.0
    %3029 = vmatprep.subr.mxu0 0.0
    %3030 = vmatpush1.msra.mxu0 0.0
    %3031 = vmatprep.subr.mxu0 0.0
    %3032 = vmatpush1.msra.mxu0 0.0
    %3033 = vmatprep.subr.mxu0 0.0
    %3034 = vmatpush1.msra.mxu0 0.0
    %3035 = vmatprep.subr.mxu0 0.0
    %3036 = vmatpush1.msra.mxu0 0.0
    %3037 = vmatprep.subr.mxu0 0.0
    %3038 = vmatpush1.msra.mxu0 0.0
    %3039 = vmatprep.subr.mxu0 0.0
    %3040 = vmatpush1.msra.mxu0 0.0
    %3041 = vmatprep.subr.mxu0 0.0
    %3042 = vmatpush1.msra.mxu0 0.0
    %3043 = vmatprep.subr.mxu0 0.0
    %3044 = vmatpush1.msra.mxu0 0.0
    %3045 = vmatprep.subr.mxu0 0.0
    %3046 = vmatpush1.msra.mxu0 0.0
    %3047 = vmatprep.subr.mxu0 0.0
    %3048 = vmatpush1.msra.mxu0 0.0
    %3049 = vmatprep.subr.mxu0 0.0
    %3050 = vmatpush1.msra.mxu0 0.0
    %3051 = vmatprep.subr.mxu0 0.0
    %3052 = vmatpush1.msra.mxu0 0.0
    %3053 = vmatprep.subr.mxu0 0.0
    %3054 = vmatpush1.msra.mxu0 0.0
    %3055 = vmatprep.subr.mxu0 0.0
    %3056 = vmatpush1.msra.mxu0 0.0
    %3057 = vmatprep.subr.mxu0 0.0
    %3058 = vmatpush1.msra.mxu0 0.0
    %3059 = vmatprep.subr.mxu0 0.0
    %3060 = vmatpush1.msra.mxu0 0.0
    %3061 = vmatprep.subr.mxu0 0.0
    %3062 = vmatpush1.msra.mxu0 0.0
    %3063 = vmatprep.subr.mxu0 0.0
    %3064 = vmatpush1.msra.mxu0 0.0
    %3065 = vmatprep.subr.mxu0 0.0
    %3066 = vmatpush1.msra.mxu0 0.0
    %3067 = vmatprep.subr.mxu0 0.0
    %3068 = vmatpush1.msra.mxu0 0.0
    %3069 = vmatprep.subr.mxu0 0.0
    %3070 = vmatpush1.msra.mxu0 0.0
    %3071 = vmatprep.subr.mxu0 0.0
    %3072 = vmatpush1.msra.mxu0 0.0
    %3073 = vmatprep.subr.mxu0 0.0
    %3074 = vmatpush1.msra.mxu0 0.0
    %3075 = vmatprep.subr.mxu0 0.0
    %3076 = vmatpush1.msra.mxu0 0.0
    %3077 = vmatprep.mubr.f32.mxu0 0.0
    %3078 = vmatmul.mubr.f32.gmra.mrb[0].mxu0 %v3011
    %v3079 = vpop.f32.mrb[0].mxu0
    %v3080 = vadd.f32 0.0, %v3079
    %v3081 = vpop.f32.mrb[0].mxu0
    %3082 = vdwg.mxu0
    %v3083 = vadd.f32 %v2677, %v3003
    %v3084 = vadd.f32 %v2754, %v3080
    %v3085 = vmul.f32 %v2093, %v204
    %v3086 = vmul.f32 %v2094, %v204
    %v3088 = vsel %vm76, %v3085, 0
    %3090 = vmatprep.subr.mxu0 0.0
    %3091 = vmatpush1.xpose.msra.mxu0 %v2103
    %3092 = vmatprep.subr.mxu0 0.0
    %3093 = vmatpush1.xpose.msra.mxu0 0.0
    %3094 = vmatprep.subr.mxu0 0.0
    %3095 = vmatpush1.xpose.msra.mxu0 0.0
    %3096 = vmatprep.subr.mxu0 0.0
    %3097 = vmatpush1.xpose.msra.mxu0 0.0
    %3098 = vmatprep.subr.mxu0 0.0
    %3099 = vmatpush1.xpose.msra.mxu0 0.0
    %3100 = vmatprep.subr.mxu0 0.0
    %3101 = vmatpush1.xpose.msra.mxu0 0.0
    %3102 = vmatprep.subr.mxu0 0.0
    %3103 = vmatpush1.xpose.msra.mxu0 0.0
    %3104 = vmatprep.subr.mxu0 0.0
    %3105 = vmatpush1.xpose.msra.mxu0 0.0
    %3106 = vmatprep.subr.mxu0 0.0
    %3107 = vmatpush1.xpose.msra.mxu0 0.0
    %3108 = vmatprep.subr.mxu0 0.0
    %3109 = vmatpush1.xpose.msra.mxu0 0.0
    %3110 = vmatprep.subr.mxu0 0.0
    %3111 = vmatpush1.xpose.msra.mxu0 0.0
    %3112 = vmatprep.subr.mxu0 0.0
    %3113 = vmatpush1.xpose.msra.mxu0 0.0
    %3114 = vmatprep.subr.mxu0 0.0
    %3115 = vmatpush1.xpose.msra.mxu0 0.0
    %3116 = vmatprep.subr.mxu0 0.0
    %3117 = vmatpush1.xpose.msra.mxu0 0.0
    %3118 = vmatprep.subr.mxu0 0.0
    %3119 = vmatpush1.xpose.msra.mxu0 0.0
    %3120 = vmatprep.subr.mxu0 0.0
    %3121 = vmatpush1.xpose.msra.mxu0 0.0
    %3122 = vmatprep.subr.mxu0 0.0
    %3123 = vmatpush1.xpose.msra.mxu0 0.0
    %3124 = vmatprep.subr.mxu0 0.0
    %3125 = vmatpush1.xpose.msra.mxu0 0.0
    %3126 = vmatprep.subr.mxu0 0.0
    %3127 = vmatpush1.xpose.msra.mxu0 0.0
    %3128 = vmatprep.subr.mxu0 0.0
    %3129 = vmatpush1.xpose.msra.mxu0 0.0
    %3130 = vmatprep.subr.mxu0 0.0
    %3131 = vmatpush1.xpose.msra.mxu0 0.0
    %3132 = vmatprep.subr.mxu0 0.0
    %3133 = vmatpush1.xpose.msra.mxu0 0.0
    %3134 = vmatprep.subr.mxu0 0.0
    %3135 = vmatpush1.xpose.msra.mxu0 0.0
    %3136 = vmatprep.subr.mxu0 0.0
    %3137 = vmatpush1.xpose.msra.mxu0 0.0
    %3138 = vmatprep.subr.mxu0 0.0
    %3139 = vmatpush1.xpose.msra.mxu0 0.0
    %3140 = vmatprep.subr.mxu0 0.0
    %3141 = vmatpush1.xpose.msra.mxu0 0.0
    %3142 = vmatprep.subr.mxu0 0.0
    %3143 = vmatpush1.xpose.msra.mxu0 0.0
    %3144 = vmatprep.subr.mxu0 0.0
    %3145 = vmatpush1.xpose.msra.mxu0 0.0
    %3146 = vmatprep.subr.mxu0 0.0
    %3147 = vmatpush1.xpose.msra.mxu0 0.0
    %3148 = vmatprep.subr.mxu0 0.0
    %3149 = vmatpush1.xpose.msra.mxu0 0.0
    %3150 = vmatprep.subr.mxu0 0.0
    %3151 = vmatpush1.xpose.msra.mxu0 0.0
    %3152 = vmatprep.subr.mxu0 0.0
    %3153 = vmatpush1.xpose.msra.mxu0 0.0
    %3154 = vmatprep.mubr.f32.mxu0 0.0
    %3155 = vmatmul.mubr.f32.gmra.mrb[0].mxu0 %v3088
    %v3156 = vpop.f32.mrb[0].mxu0
    %v3157 = vadd.f32 %v187, %v3156
    %v3158 = vpop.f32.mrb[0].mxu0
    %3159 = vdwg.mxu0
    %v3161 = vsel %vm76, %v3086, 0
    %3163 = vmatprep.subr.mxu0 0.0
    %3164 = vmatpush1.xpose.msra.mxu0 %v2181
    %3165 = vmatprep.subr.mxu0 0.0
    %3166 = vmatpush1.xpose.msra.mxu0 0.0
    %3167 = vmatprep.subr.mxu0 0.0
    %3168 = vmatpush1.xpose.msra.mxu0 0.0
    %3169 = vmatprep.subr.mxu0 0.0
    %3170 = vmatpush1.xpose.msra.mxu0 0.0
    %3171 = vmatprep.subr.mxu0 0.0
    %3172 = vmatpush1.xpose.msra.mxu0 0.0
    %3173 = vmatprep.subr.mxu0 0.0
    %3174 = vmatpush1.xpose.msra.mxu0 0.0
    %3175 = vmatprep.subr.mxu0 0.0
    %3176 = vmatpush1.xpose.msra.mxu0 0.0
    %3177 = vmatprep.subr.mxu0 0.0
    %3178 = vmatpush1.xpose.msra.mxu0 0.0
    %3179 = vmatprep.subr.mxu0 0.0
    %3180 = vmatpush1.xpose.msra.mxu0 0.0
    %3181 = vmatprep.subr.mxu0 0.0
    %3182 = vmatpush1.xpose.msra.mxu0 0.0
    %3183 = vmatprep.subr.mxu0 0.0
    %3184 = vmatpush1.xpose.msra.mxu0 0.0
    %3185 = vmatprep.subr.mxu0 0.0
    %3186 = vmatpush1.xpose.msra.mxu0 0.0
    %3187 = vmatprep.subr.mxu0 0.0
    %3188 = vmatpush1.xpose.msra.mxu0 0.0
    %3189 = vmatprep.subr.mxu0 0.0
    %3190 = vmatpush1.xpose.msra.mxu0 0.0
    %3191 = vmatprep.subr.mxu0 0.0
    %3192 = vmatpush1.xpose.msra.mxu0 0.0
    %3193 = vmatprep.subr.mxu0 0.0
    %3194 = vmatpush1.xpose.msra.mxu0 0.0
    %3195 = vmatprep.subr.mxu0 0.0
    %3196 = vmatpush1.xpose.msra.mxu0 0.0
    %3197 = vmatprep.subr.mxu0 0.0
    %3198 = vmatpush1.xpose.msra.mxu0 0.0
    %3199 = vmatprep.subr.mxu0 0.0
    %3200 = vmatpush1.xpose.msra.mxu0 0.0
    %3201 = vmatprep.subr.mxu0 0.0
    %3202 = vmatpush1.xpose.msra.mxu0 0.0
    %3203 = vmatprep.subr.mxu0 0.0
    %3204 = vmatpush1.xpose.msra.mxu0 0.0
    %3205 = vmatprep.subr.mxu0 0.0
    %3206 = vmatpush1.xpose.msra.mxu0 0.0
    %3207 = vmatprep.subr.mxu0 0.0
    %3208 = vmatpush1.xpose.msra.mxu0 0.0
    %3209 = vmatprep.subr.mxu0 0.0
    %3210 = vmatpush1.xpose.msra.mxu0 0.0
    %3211 = vmatprep.subr.mxu0 0.0
    %3212 = vmatpush1.xpose.msra.mxu0 0.0
    %3213 = vmatprep.subr.mxu0 0.0
    %3214 = vmatpush1.xpose.msra.mxu0 0.0
    %3215 = vmatprep.subr.mxu0 0.0
    %3216 = vmatpush1.xpose.msra.mxu0 0.0
    %3217 = vmatprep.subr.mxu0 0.0
    %3218 = vmatpush1.xpose.msra.mxu0 0.0
    %3219 = vmatprep.subr.mxu0 0.0
    %3220 = vmatpush1.xpose.msra.mxu0 0.0
    %3221 = vmatprep.subr.mxu0 0.0
    %3222 = vmatpush1.xpose.msra.mxu0 0.0
    %3223 = vmatprep.subr.mxu0 0.0
    %3224 = vmatpush1.xpose.msra.mxu0 0.0
    %3225 = vmatprep.subr.mxu0 0.0
    %3226 = vmatpush1.xpose.msra.mxu0 0.0
    %3227 = vmatprep.mubr.f32.mxu0 0.0
    %3228 = vmatmul.mubr.f32.gmra.mrb[0].mxu0 %v3161
    %v3229 = vpop.f32.mrb[0].mxu0
    %v3230 = vadd.f32 %v188, %v3229
    %v3231 = vpop.f32.mrb[0].mxu0
    %3232 = vdwg.mxu0
    %v3233 = vsel %vm471, %v3157, -inf
    %3234 = vmax.xlane.f32.xlu0 %v3233
    %v3235 = vpop.xlane.xlu0 %3234
    %v3236 = vsel %vm471, %v3230, -inf
    %3237 = vmax.xlane.f32.xlu0 %v3236
    %v3238 = vpop.xlane.xlu0 %3237
    %v3239 = vsub.f32 %v3157, %v3235
    %v3240 = vsub.f32 %v3230, %v3238
    %v3241 = vmul.f32 %v3239, 1.442695
    %v3242 = vpow.pop %v3241
    %v3243 = vmul.f32 %v3240, 1.442695
    %v3244 = vpow.pop %v3243
    %v3245 = vsel %vm471, %v3242, 0.0
    %3246 = vadd.xlane.f32.xlu0 %v3245
    %v3247 = vpop.xlane.xlu0 %3246
    %v3248 = vsel %vm471, %v3244, 0.0
    %3249 = vadd.xlane.f32.xlu0 %v3248
    %v3250 = vpop.xlane.xlu0 %3249
    %v3251 = vrcp.pop %v3247
    %v3252 = vmul.f32 %v3242, %v3251
    %v3253 = vrcp.pop %v3250
    %v3254 = vmul.f32 %v3244, %v3253
    %v3255 = vmul.f32 %v2085, %v1488
    %v3256 = vmul.f32 %v2090, %v1488
    %3258 = vrot.lane.b32.xlu0 %v3255, 64
    %v3259 = vpop.permute.xlu0 %3258
    %v3262 = vsel %vm471, %v3252, 0
    %3264 = vmatprep.subr.mxu0 0.0
    %3265 = vmatpush1.msra.mxu0 %v3259
    %3266 = vmatprep.subr.mxu0 0.0
    %3267 = vmatpush1.msra.mxu0 0.0
    %3268 = vmatprep.subr.mxu0 0.0
    %3269 = vmatpush1.msra.mxu0 0.0
    %3270 = vmatprep.subr.mxu0 0.0
    %3271 = vmatpush1.msra.mxu0 0.0
    %3272 = vmatprep.subr.mxu0 0.0
    %3273 = vmatpush1.msra.mxu0 0.0
    %3274 = vmatprep.subr.mxu0 0.0
    %3275 = vmatpush1.msra.mxu0 0.0
    %3276 = vmatprep.subr.mxu0 0.0
    %3277 = vmatpush1.msra.mxu0 0.0
    %3278 = vmatprep.subr.mxu0 0.0
    %3279 = vmatpush1.msra.mxu0 0.0
    %3280 = vmatprep.subr.mxu0 0.0
    %3281 = vmatpush1.msra.mxu0 0.0
    %3282 = vmatprep.subr.mxu0 0.0
    %3283 = vmatpush1.msra.mxu0 0.0
    %3284 = vmatprep.subr.mxu0 0.0
    %3285 = vmatpush1.msra.mxu0 0.0
    %3286 = vmatprep.subr.mxu0 0.0
    %3287 = vmatpush1.msra.mxu0 0.0
    %3288 = vmatprep.subr.mxu0 0.0
    %3289 = vmatpush1.msra.mxu0 0.0
    %3290 = vmatprep.subr.mxu0 0.0
    %3291 = vmatpush1.msra.mxu0 0.0
    %3292 = vmatprep.subr.mxu0 0.0
    %3293 = vmatpush1.msra.mxu0 0.0
    %3294 = vmatprep.subr.mxu0 0.0
    %3295 = vmatpush1.msra.mxu0 0.0
    %3296 = vmatprep.subr.mxu0 0.0
    %3297 = vmatpush1.msra.mxu0 0.0
    %3298 = vmatprep.subr.mxu0 0.0
    %3299 = vmatpush1.msra.mxu0 0.0
    %3300 = vmatprep.subr.mxu0 0.0
    %3301 = vmatpush1.msra.mxu0 0.0
    %3302 = vmatprep.subr.mxu0 0.0
    %3303 = vmatpush1.msra.mxu0 0.0
    %3304 = vmatprep.subr.mxu0 0.0
    %3305 = vmatpush1.msra.mxu0 0.0
    %3306 = vmatprep.subr.mxu0 0.0
    %3307 = vmatpush1.msra.mxu0 0.0
    %3308 = vmatprep.subr.mxu0 0.0
    %3309 = vmatpush1.msra.mxu0 0.0
    %3310 = vmatprep.subr.mxu0 0.0
    %3311 = vmatpush1.msra.mxu0 0.0
    %3312 = vmatprep.subr.mxu0 0.0
    %3313 = vmatpush1.msra.mxu0 0.0
    %3314 = vmatprep.subr.mxu0 0.0
    %3315 = vmatpush1.msra.mxu0 0.0
    %3316 = vmatprep.subr.mxu0 0.0
    %3317 = vmatpush1.msra.mxu0 0.0
    %3318 = vmatprep.subr.mxu0 0.0
    %3319 = vmatpush1.msra.mxu0 0.0
    %3320 = vmatprep.subr.mxu0 0.0
    %3321 = vmatpush1.msra.mxu0 0.0
    %3322 = vmatprep.subr.mxu0 0.0
    %3323 = vmatpush1.msra.mxu0 0.0
    %3324 = vmatprep.subr.mxu0 0.0
    %3325 = vmatpush1.msra.mxu0 0.0
    %3326 = vmatprep.subr.mxu0 0.0
    %3327 = vmatpush1.msra.mxu0 0.0
    %3328 = vmatprep.mubr.f32.mxu0 0.0
    %3329 = vmatmul.mubr.f32.gmra.mrb[0].mxu0 %v3262
    %v3330 = vpop.f32.mrb[0].mxu0
    %v3331 = vadd.f32 0.0, %v3330
    %v3332 = vpop.f32.mrb[0].mxu0
    %3333 = vdwg.mxu0
    %3335 = vrot.lane.b32.xlu0 %v3256, 64
    %v3336 = vpop.permute.xlu0 %3335
    %v3339 = vsel %vm471, %v3254, 0
    %3341 = vmatprep.subr.mxu0 0.0
    %3342 = vmatpush1.msra.mxu0 %v3336
    %3343 = vmatprep.subr.mxu0 0.0
    %3344 = vmatpush1.msra.mxu0 0.0
    %3345 = vmatprep.subr.mxu0 0.0
    %3346 = vmatpush1.msra.mxu0 0.0
    %3347 = vmatprep.subr.mxu0 0.0
    %3348 = vmatpush1.msra.mxu0 0.0
    %3349 = vmatprep.subr.mxu0 0.0
    %3350 = vmatpush1.msra.mxu0 0.0
    %3351 = vmatprep.subr.mxu0 0.0
    %3352 = vmatpush1.msra.mxu0 0.0
    %3353 = vmatprep.subr.mxu0 0.0
    %3354 = vmatpush1.msra.mxu0 0.0
    %3355 = vmatprep.subr.mxu0 0.0
    %3356 = vmatpush1.msra.mxu0 0.0
    %3357 = vmatprep.subr.mxu0 0.0
    %3358 = vmatpush1.msra.mxu0 0.0
    %3359 = vmatprep.subr.mxu0 0.0
    %3360 = vmatpush1.msra.mxu0 0.0
    %3361 = vmatprep.subr.mxu0 0.0
    %3362 = vmatpush1.msra.mxu0 0.0
    %3363 = vmatprep.subr.mxu0 0.0
    %3364 = vmatpush1.msra.mxu0 0.0
    %3365 = vmatprep.subr.mxu0 0.0
    %3366 = vmatpush1.msra.mxu0 0.0
    %3367 = vmatprep.subr.mxu0 0.0
    %3368 = vmatpush1.msra.mxu0 0.0
    %3369 = vmatprep.subr.mxu0 0.0
    %3370 = vmatpush1.msra.mxu0 0.0
    %3371 = vmatprep.subr.mxu0 0.0
    %3372 = vmatpush1.msra.mxu0 0.0
    %3373 = vmatprep.subr.mxu0 0.0
    %3374 = vmatpush1.msra.mxu0 0.0
    %3375 = vmatprep.subr.mxu0 0.0
    %3376 = vmatpush1.msra.mxu0 0.0
    %3377 = vmatprep.subr.mxu0 0.0
    %3378 = vmatpush1.msra.mxu0 0.0
    %3379 = vmatprep.subr.mxu0 0.0
    %3380 = vmatpush1.msra.mxu0 0.0
    %3381 = vmatprep.subr.mxu0 0.0
    %3382 = vmatpush1.msra.mxu0 0.0
    %3383 = vmatprep.subr.mxu0 0.0
    %3384 = vmatpush1.msra.mxu0 0.0
    %3385 = vmatprep.subr.mxu0 0.0
    %3386 = vmatpush1.msra.mxu0 0.0
    %3387 = vmatprep.subr.mxu0 0.0
    %3388 = vmatpush1.msra.mxu0 0.0
    %3389 = vmatprep.subr.mxu0 0.0
    %3390 = vmatpush1.msra.mxu0 0.0
    %3391 = vmatprep.subr.mxu0 0.0
    %3392 = vmatpush1.msra.mxu0 0.0
    %3393 = vmatprep.subr.mxu0 0.0
    %3394 = vmatpush1.msra.mxu0 0.0
    %3395 = vmatprep.subr.mxu0 0.0
    %3396 = vmatpush1.msra.mxu0 0.0
    %3397 = vmatprep.subr.mxu0 0.0
    %3398 = vmatpush1.msra.mxu0 0.0
    %3399 = vmatprep.subr.mxu0 0.0
    %3400 = vmatpush1.msra.mxu0 0.0
    %3401 = vmatprep.subr.mxu0 0.0
    %3402 = vmatpush1.msra.mxu0 0.0
    %3403 = vmatprep.subr.mxu0 0.0
    %3404 = vmatpush1.msra.mxu0 0.0
    %3405 = vmatprep.mubr.f32.mxu0 0.0
    %3406 = vmatmul.mubr.f32.gmra.mrb[0].mxu0 %v3339
    %v3407 = vpop.f32.mrb[0].mxu0
    %v3408 = vadd.f32 0.0, %v3407
    %v3409 = vpop.f32.mrb[0].mxu0
    %3410 = vdwg.mxu0
    %v3411 = vadd.f32 %v3083, %v3331
    %v3412 = vadd.f32 %v3084, %v3408
    %v3413 = vlaneseq
    %v3414 = vshrl.u32 %v3413, 7
    %v3415 = vsub.s32 1, %v3414
    %v3416 = vrot.slane %v2007, %v3415
    %v3418 = vsel %vm76, %v3411, 0
    %v3421 = vsel %vm76, %v3412, 0
    %3423 = vmatprep.subr.mxu0 0.0
    %3424 = vmatpush1.msra.mxu0 %v1991
    %3425 = vmatprep.subr.mxu0 0.0
    %3426 = vmatpush1.msra.mxu0 %v1992
    %3427 = vmatprep.subr.mxu0 0.0
    %3428 = vmatpush1.msra.mxu0 %v1993
    %3429 = vmatprep.subr.mxu0 0.0
    %3430 = vmatpush1.msra.mxu0 %v1994
    %3431 = vmatprep.subr.mxu0 0.0
    %3432 = vmatpush1.msra.mxu0 0.0
    %3433 = vmatprep.subr.mxu0 0.0
    %3434 = vmatpush1.msra.mxu0 0.0
    %3435 = vmatprep.subr.mxu0 0.0
    %3436 = vmatpush1.msra.mxu0 0.0
    %3437 = vmatprep.subr.mxu0 0.0
    %3438 = vmatpush1.msra.mxu0 0.0
    %3439 = vmatprep.subr.mxu0 0.0
    %3440 = vmatpush1.msra.mxu0 0.0
    %3441 = vmatprep.subr.mxu0 0.0
    %3442 = vmatpush1.msra.mxu0 0.0
    %3443 = vmatprep.subr.mxu0 0.0
    %3444 = vmatpush1.msra.mxu0 0.0
    %3445 = vmatprep.subr.mxu0 0.0
    %3446 = vmatpush1.msra.mxu0 0.0
    %3447 = vmatprep.subr.mxu0 0.0
    %3448 = vmatpush1.msra.mxu0 0.0
    %3449 = vmatprep.subr.mxu0 0.0
    %3450 = vmatpush1.msra.mxu0 0.0
    %3451 = vmatprep.subr.mxu0 0.0
    %3452 = vmatpush1.msra.mxu0 0.0
    %3453 = vmatprep.subr.mxu0 0.0
    %3454 = vmatpush1.msra.mxu0 0.0
    %3455 = vmatprep.subr.mxu0 0.0
    %3456 = vmatpush1.msra.mxu0 0.0
    %3457 = vmatprep.subr.mxu0 0.0
    %3458 = vmatpush1.msra.mxu0 0.0
    %3459 = vmatprep.subr.mxu0 0.0
    %3460 = vmatpush1.msra.mxu0 0.0
    %3461 = vmatprep.subr.mxu0 0.0
    %3462 = vmatpush1.msra.mxu0 0.0
    %3463 = vmatprep.subr.mxu0 0.0
    %3464 = vmatpush1.msra.mxu0 0.0
    %3465 = vmatprep.subr.mxu0 0.0
    %3466 = vmatpush1.msra.mxu0 0.0
    %3467 = vmatprep.subr.mxu0 0.0
    %3468 = vmatpush1.msra.mxu0 0.0
    %3469 = vmatprep.subr.mxu0 0.0
    %3470 = vmatpush1.msra.mxu0 0.0
    %3471 = vmatprep.subr.mxu0 0.0
    %3472 = vmatpush1.msra.mxu0 0.0
    %3473 = vmatprep.subr.mxu0 0.0
    %3474 = vmatpush1.msra.mxu0 0.0
    %3475 = vmatprep.subr.mxu0 0.0
    %3476 = vmatpush1.msra.mxu0 0.0
    %3477 = vmatprep.subr.mxu0 0.0
    %3478 = vmatpush1.msra.mxu0 0.0
    %3479 = vmatprep.subr.mxu0 0.0
    %3480 = vmatpush1.msra.mxu0 0.0
    %3481 = vmatprep.subr.mxu0 0.0
    %3482 = vmatpush1.msra.mxu0 0.0
    %3483 = vmatprep.subr.mxu0 0.0
    %3484 = vmatpush1.msra.mxu0 0.0
    %3485 = vmatprep.subr.mxu0 0.0
    %3486 = vmatpush1.msra.mxu0 0.0
    %3487 = vmatprep.mubr.f32.mxu0 0.0
    %3488 = vmatmul.mubr.f32.gmra.mrb[0].mxu0 %v3418
    %v3489 = vpop.f32.mrb[0].mxu0
    %v3490 = vadd.f32 %v3416, %v3489
    %v3491 = vpop.f32.mrb[0].mxu0
    %3492 = vmatprep.mubr.f32.mxu0 0.0
    %3493 = vmatmul.mubr.f32.gmra.mrb[0].mxu0 %v3421
    %v3494 = vpop.f32.mrb[0].mxu0
    %v3495 = vadd.f32 %v3416, %v3494
    %v3496 = vpop.f32.mrb[0].mxu0
    %3497 = vdwg.mxu0
    %v3498 = vadd.f32 %v1985, %v3490
    %v3499 = vadd.f32 %v1986, %v3495
    %v3500 = vsel %vm76, %v3498, 0.0
    %3501 = vadd.xlane.f32.xlu0 %v3500
    %v3502 = vpop.xlane.xlu0 %3501
    %v3503 = vsel %vm76, %v3499, 0.0
    %3504 = vadd.xlane.f32.xlu0 %v3503
    %v3505 = vpop.xlane.xlu0 %3504
    %v3506 = vmul.f32 %v3502, %v1741
    %v3507 = vmul.f32 %v3505, %v1741
    %v3508 = vsub.f32 %v3498, %v3506
    %v3509 = vsub.f32 %v3499, %v3507
    %v3510 = vmul.f32 %v3508, %v3508
    %v3511 = vmul.f32 %v3509, %v3509
    %v3512 = vsel %vm76, %v3510, 0.0
    %3513 = vadd.xlane.f32.xlu0 %v3512
    %v3514 = vpop.xlane.xlu0 %3513
    %v3515 = vsel %vm76, %v3511, 0.0
    %3516 = vadd.xlane.f32.xlu0 %v3515
    %v3517 = vpop.xlane.xlu0 %3516
    %v3518 = vmul.f32 %v3514, %v1741
    %v3519 = vmul.f32 %v3517, %v1741
    %v3520 = vadd.f32 %v3518, 1e-05
    %v3521 = vadd.f32 %v3519, 1e-05
    %v3522 = vrsqrt.pop %v3520
    %v3523 = vrsqrt.pop %v3521
    %v3524 = vmul.f32 %v3508, %v3522
    %v3525 = vmul.f32 %v3509, %v3523
    %v3526 = vlaneseq
    %v3527 = vshrl.u32 %v3526, 7
    %v3528 = vsub.s32 4, %v3527
    %v3529 = vrot.slane %v2007, %v3528
    %v3530 = vmul.f32 %v3524, %v3529
    %v3531 = vmul.f32 %v3525, %v3529
    %v3532 = vlaneseq
    %v3533 = vshrl.u32 %v3532, 7
    %v3534 = vsub.s32 5, %v3533
    %v3535 = vrot.slane %v2007, %v3534
    %v3536 = vadd.f32 %v3530, %v3535
    %v3537 = vadd.f32 %v3531, %v3535
    %v3538 = vlaneseq
    %v3539 = vshrl.u32 %v3538, 7
    %v3540 = vsub.s32 2, %v3539
    %v3541 = vrot.slane %v2007, %v3540
    %v3543 = vsel %vm76, %v3536, 0
    %v3546 = vsel %vm76, %v3537, 0
    %3548 = vmatprep.subr.mxu0 0.0
    %3549 = vmatpush1.msra.mxu0 %v1995
    %3550 = vmatprep.subr.mxu0 0.0
    %3551 = vmatpush1.msra.mxu0 %v1996
    %3552 = vmatprep.subr.mxu0 0.0
    %3553 = vmatpush1.msra.mxu0 %v1997
    %3554 = vmatprep.subr.mxu0 0.0
    %3555 = vmatpush1.msra.mxu0 %v1998
    %3556 = vmatprep.subr.mxu0 0.0
    %3557 = vmatpush1.msra.mxu0 0.0
    %3558 = vmatprep.subr.mxu0 0.0
    %3559 = vmatpush1.msra.mxu0 0.0
    %3560 = vmatprep.subr.mxu0 0.0
    %3561 = vmatpush1.msra.mxu0 0.0
    %3562 = vmatprep.subr.mxu0 0.0
    %3563 = vmatpush1.msra.mxu0 0.0
    %3564 = vmatprep.subr.mxu0 0.0
    %3565 = vmatpush1.msra.mxu0 0.0
    %3566 = vmatprep.subr.mxu0 0.0
    %3567 = vmatpush1.msra.mxu0 0.0
    %3568 = vmatprep.subr.mxu0 0.0
    %3569 = vmatpush1.msra.mxu0 0.0
    %3570 = vmatprep.subr.mxu0 0.0
    %3571 = vmatpush1.msra.mxu0 0.0
    %3572 = vmatprep.subr.mxu0 0.0
    %3573 = vmatpush1.msra.mxu0 0.0
    %3574 = vmatprep.subr.mxu0 0.0
    %3575 = vmatpush1.msra.mxu0 0.0
    %3576 = vmatprep.subr.mxu0 0.0
    %3577 = vmatpush1.msra.mxu0 0.0
    %3578 = vmatprep.subr.mxu0 0.0
    %3579 = vmatpush1.msra.mxu0 0.0
    %3580 = vmatprep.subr.mxu0 0.0
    %3581 = vmatpush1.msra.mxu0 0.0
    %3582 = vmatprep.subr.mxu0 0.0
    %3583 = vmatpush1.msra.mxu0 0.0
    %3584 = vmatprep.subr.mxu0 0.0
    %3585 = vmatpush1.msra.mxu0 0.0
    %3586 = vmatprep.subr.mxu0 0.0
    %3587 = vmatpush1.msra.mxu0 0.0
    %3588 = vmatprep.subr.mxu0 0.0
    %3589 = vmatpush1.msra.mxu0 0.0
    %3590 = vmatprep.subr.mxu0 0.0
    %3591 = vmatpush1.msra.mxu0 0.0
    %3592 = vmatprep.subr.mxu0 0.0
    %3593 = vmatpush1.msra.mxu0 0.0
    %3594 = vmatprep.subr.mxu0 0.0
    %3595 = vmatpush1.msra.mxu0 0.0
    %3596 = vmatprep.subr.mxu0 0.0
    %3597 = vmatpush1.msra.mxu0 0.0
    %3598 = vmatprep.subr.mxu0 0.0
    %3599 = vmatpush1.msra.mxu0 0.0
    %3600 = vmatprep.subr.mxu0 0.0
    %3601 = vmatpush1.msra.mxu0 0.0
    %3602 = vmatprep.subr.mxu0 0.0
    %3603 = vmatpush1.msra.mxu0 0.0
    %3604 = vmatprep.subr.mxu0 0.0
    %3605 = vmatpush1.msra.mxu0 0.0
    %3606 = vmatprep.subr.mxu0 0.0
    %3607 = vmatpush1.msra.mxu0 0.0
    %3608 = vmatprep.subr.mxu0 0.0
    %3609 = vmatpush1.msra.mxu0 0.0
    %3610 = vmatprep.subr.mxu0 0.0
    %3611 = vmatpush1.msra.mxu0 0.0
    %3612 = vmatprep.mubr.f32.mxu0 0.0
    %3613 = vmatmul.mubr.f32.gmra.mrb[0].mxu0 %v3543
    %v3614 = vpop.f32.mrb[0].mxu0
    %v3615 = vadd.f32 %v3541, %v3614
    %v3616 = vpop.f32.mrb[0].mxu0
    %3617 = vmatprep.mubr.f32.mxu0 0.0
    %3618 = vmatmul.mubr.f32.gmra.mrb[0].mxu0 %v3546
    %v3619 = vpop.f32.mrb[0].mxu0
    %v3620 = vadd.f32 %v3541, %v3619
    %v3621 = vpop.f32.mrb[0].mxu0
    %3622 = vdwg.mxu0
    %v3623 = vmax.f32 %v3615, 0.0
    %v3624 = vmax.f32 %v3620, 0.0
    %v3625 = vlaneseq
    %v3626 = vshrl.u32 %v3625, 7
    %v3627 = vsub.s32 3, %v3626
    %v3628 = vrot.slane %v2007, %v3627
    %v3630 = vsel %vm1865, %v3623, 0
    %v3633 = vsel %vm1865, %v3624, 0
    %3635 = vmatprep.subr.mxu0 0.0
    %3636 = vmatpush1.msra.mxu0 %v1999
    %3637 = vmatprep.subr.mxu0 0.0
    %3638 = vmatpush1.msra.mxu0 %v2000
    %3639 = vmatprep.subr.mxu0 0.0
    %3640 = vmatpush1.msra.mxu0 %v2001
    %3641 = vmatprep.subr.mxu0 0.0
    %3642 = vmatpush1.msra.mxu0 %v2002
    %3643 = vmatprep.subr.mxu0 0.0
    %3644 = vmatpush1.msra.mxu0 %v2003
    %3645 = vmatprep.subr.mxu0 0.0
    %3646 = vmatpush1.msra.mxu0 %v2004
    %3647 = vmatprep.subr.mxu0 0.0
    %3648 = vmatpush1.msra.mxu0 %v2005
    %3649 = vmatprep.subr.mxu0 0.0
    %3650 = vmatpush1.msra.mxu0 %v2006
    %3651 = vmatprep.subr.mxu0 0.0
    %3652 = vmatpush1.msra.mxu0 0.0
    %3653 = vmatprep.subr.mxu0 0.0
    %3654 = vmatpush1.msra.mxu0 0.0
    %3655 = vmatprep.subr.mxu0 0.0
    %3656 = vmatpush1.msra.mxu0 0.0
    %3657 = vmatprep.subr.mxu0 0.0
    %3658 = vmatpush1.msra.mxu0 0.0
    %3659 = vmatprep.subr.mxu0 0.0
    %3660 = vmatpush1.msra.mxu0 0.0
    %3661 = vmatprep.subr.mxu0 0.0
    %3662 = vmatpush1.msra.mxu0 0.0
    %3663 = vmatprep.subr.mxu0 0.0
    %3664 = vmatpush1.msra.mxu0 0.0
    %3665 = vmatprep.subr.mxu0 0.0
    %3666 = vmatpush1.msra.mxu0 0.0
    %3667 = vmatprep.subr.mxu0 0.0
    %3668 = vmatpush1.msra.mxu0 0.0
    %3669 = vmatprep.subr.mxu0 0.0
    %3670 = vmatpush1.msra.mxu0 0.0
    %3671 = vmatprep.subr.mxu0 0.0
    %3672 = vmatpush1.msra.mxu0 0.0
    %3673 = vmatprep.subr.mxu0 0.0
    %3674 = vmatpush1.msra.mxu0 0.0
    %3675 = vmatprep.subr.mxu0 0.0
    %3676 = vmatpush1.msra.mxu0 0.0
    %3677 = vmatprep.subr.mxu0 0.0
    %3678 = vmatpush1.msra.mxu0 0.0
    %3679 = vmatprep.subr.mxu0 0.0
    %3680 = vmatpush1.msra.mxu0 0.0
    %3681 = vmatprep.subr.mxu0 0.0
    %3682 = vmatpush1.msra.mxu0 0.0
    %3683 = vmatprep.subr.mxu0 0.0
    %3684 = vmatpush1.msra.mxu0 0.0
    %3685 = vmatprep.subr.mxu0 0.0
    %3686 = vmatpush1.msra.mxu0 0.0
    %3687 = vmatprep.subr.mxu0 0.0
    %3688 = vmatpush1.msra.mxu0 0.0
    %3689 = vmatprep.subr.mxu0 0.0
    %3690 = vmatpush1.msra.mxu0 0.0
    %3691 = vmatprep.subr.mxu0 0.0
    %3692 = vmatpush1.msra.mxu0 0.0
    %3693 = vmatprep.subr.mxu0 0.0
    %3694 = vmatpush1.msra.mxu0 0.0
    %3695 = vmatprep.subr.mxu0 0.0
    %3696 = vmatpush1.msra.mxu0 0.0
    %3697 = vmatprep.subr.mxu0 0.0
    %3698 = vmatpush1.msra.mxu0 0.0
    %3699 = vmatprep.mubr.f32.mxu0 0.0
    %3700 = vmatmul.mubr.f32.gmra.mrb[0].mxu0 %v3630
    %v3701 = vpop.f32.mrb[0].mxu0
    %v3702 = vadd.f32 %v3628, %v3701
    %v3703 = vpop.f32.mrb[0].mxu0
    %3704 = vmatprep.mubr.f32.mxu0 0.0
    %3705 = vmatmul.mubr.f32.gmra.mrb[0].mxu0 %v3633
    %v3706 = vpop.f32.mrb[0].mxu0
    %v3707 = vadd.f32 %v3628, %v3706
    %v3708 = vpop.f32.mrb[0].mxu0
    %3709 = vdwg.mxu0
    %v3710 = vadd.f32 %v3536, %v3702
    %v3711 = vadd.f32 %v3537, %v3707
    %v3712 = vsel %vm76, %v3710, 0.0
    %3713 = vadd.xlane.f32.xlu0 %v3712
    %v3714 = vpop.xlane.xlu0 %3713
    %v3715 = vsel %vm76, %v3711, 0.0
    %3716 = vadd.xlane.f32.xlu0 %v3715
    %v3717 = vpop.xlane.xlu0 %3716
    %v3718 = vmul.f32 %v3714, %v1741
    %v3719 = vmul.f32 %v3717, %v1741
    %v3720 = vsub.f32 %v3710, %v3718
    %v3721 = vsub.f32 %v3711, %v3719
    %v3722 = vmul.f32 %v3720, %v3720
    %v3723 = vmul.f32 %v3721, %v3721
    %v3724 = vsel %vm76, %v3722, 0.0
    %3725 = vadd.xlane.f32.xlu0 %v3724
    %v3726 = vpop.xlane.xlu0 %3725
    %v3727 = vsel %vm76, %v3723, 0.0
    %3728 = vadd.xlane.f32.xlu0 %v3727
    %v3729 = vpop.xlane.xlu0 %3728
    %v3730 = vmul.f32 %v3726, %v1741
    %v3731 = vmul.f32 %v3729, %v1741
    %v3732 = vadd.f32 %v3730, 1e-05
    %v3733 = vadd.f32 %v3731, 1e-05
    %v3734 = vrsqrt.pop %v3732
    %v3735 = vrsqrt.pop %v3733
    %v3736 = vmul.f32 %v3720, %v3734
    %v3737 = vmul.f32 %v3721, %v3735
    %v3738 = vlaneseq
    %v3739 = vshrl.u32 %v3738, 7
    %v3740 = vsub.s32 6, %v3739
    %v3741 = vrot.slane %v2007, %v3740
    %v3742 = vmul.f32 %v3736, %v3741
    %v3743 = vmul.f32 %v3737, %v3741
    %v3744 = vlaneseq
    %v3745 = vshrl.u32 %v3744, 7
    %v3746 = vsub.s32 7, %v3745
    %v3747 = vrot.slane %v2007, %v3746
    %v3748 = vadd.f32 %v3742, %v3747
    %v3749 = vadd.f32 %v3743, %v3747
    %v3750 = vld [vmem:[%s5] sm:$0xff]
    %v3751 = vmul.f32 %v3748, %v3750
    %v3752 = vmul.f32 %v3749, %v3750
    %v3753 = vsel %vm76, %v3751, 0.0
    %3754 = vadd.xlane.f32.xlu0 %v3753
    %v3755 = vpop.xlane.xlu0 %3754
    %v3756 = vsel %vm76, %v3752, 0.0
    %3757 = vadd.xlane.f32.xlu0 %v3756
    %v3758 = vpop.xlane.xlu0 %3757
    %v3761 = vlaneseq
    %v3762 = vshrl.u32 %v3761, 7
    %v3763 = vsub.s32 %v57, %v3762
    %v3764 = vrot.slane %v3755, %v3763
    %v3765 = vlaneseq
    %v3766 = vshrl.u32 %v3765, 7
    %v3767 = vsub.s32 %v57, %v3766
    %v3768 = vrot.slane %v3758, %v3767
    %vm3769 = vcmask 1041409
    %v3770 = vsel %vm3769, %v3768, %v3764
    %vm3772 = vcmask 58368
    %v3773 = vsel %vm3772, %v3770, 0.0
    %3774 = vadd.xlane.f32.xlu0 %v3773
    %v3775 = vpop.xlane.xlu0 %3774
    %v3776 = vld [vmem:[#allocation2] sm:$0x1]
    %v3778 = vlaneseq
    %v3779 = vshrl.u32 %v3778, 7
    %v3780 = vsub.s32 0, %v3779
    %v3781 = vrot.slane %v3776, %v3780
    %v3783 = vadd.f32 %v3775, %v3781
    %vm3784 = vcmask 1024
    %3785 = vst.msk [vmem:[%s7] sm:$0x3] %vm3784, %v3783
    // Predicated region
    $region38: #{transformer_nli_forward.1} parent=1 // pred_check
      _
    $region39: #{transformer_nli_forward.1} parent=1 // pred_check_branch
      %3787 = sbr.rel (0) target = $region41
    $region40: #{transformer_nli_forward.1} parent=1 // pred_region
      _
    $region41: #{transformer_nli_forward.1} parent=1 // pred_fallthru
      _
    // Predicated region
    $region42: #{transformer_nli_forward.1} parent=1 // pred_check
      _
    $region43: #{transformer_nli_forward.1} parent=1 // pred_check_branch
      %3789 = sbr.rel (0) target = $region45
    $region44: #{transformer_nli_forward.1} parent=1 // pred_region
      _
    $region45: #{transformer_nli_forward.1} parent=1 // pred_fallthru
      _
    %3790 = vsyncpa [#allocation4], 1
    %3791 = vsyncpa [#allocation6], 1

</llo_original>
